<compile_context>
chip_gen: v5e
topology: v5e:2x2
jax: 0.10.0
libtpu: 0.0.40
codegen_flags: <defaults>
</compile_context>

<pallas_src>
import jax
import jax.numpy as jnp
from jax.experimental import pallas as pl
from jax.experimental.pallas import tpu as pltpu

# ------------------------- synthetic configuration -------------------------
POSENET_OUTDIM = 16          # opt.posenet_setup.posenet_outdim
TEX_LATENT_DIM = 8           # opt.posenet_setup.tex_latent_dim
UV_RESO        = 16          # opt.posenet_setup.uv_reso
NERF_DIM       = 3           # opt.motion.nerf_dim (rgb channels)
NUM_FREQS      = 4           # NeRF positional-embedding frequencies
UVH_DIM        = 3 + 3 * 2 * NUM_FREQS     # embedder.uvh_dim  = 27
VIEW_DIM       = 3 + 3 * 2 * NUM_FREQS     # embedder.view_dim = 27
UVH_FEAT_DIM   = TEX_LATENT_DIM + POSENET_OUTDIM   # 24 (uv_2dplane, no combine)
HID0, HID1     = 256, 128                           # hard-coded in add_nerf()
OUT_DIM        = 1 + NERF_DIM                       # [alpha | rgb] = 4

K_IN = 128                    # lane-dense packed input width (feat|enc|vd|pad)
assert UVH_FEAT_DIM + UVH_DIM + VIEW_DIM <= K_IN

# Column layout of the packed input.
_FEAT_OFF = 0
_ENC_OFF  = UVH_FEAT_DIM
_VD_OFF   = UVH_FEAT_DIM + UVH_DIM

# Rows-per-grid-step.  Sweep 512-2048 on real workloads; keep grid >= 2 on v7x
# (2 TensorCores/chip) so both cores get work.
TILE_N = 512


# ------------------------------ Pallas kernel -------------------------------
def _nerf_mlp_kernel(x_ref, w0_ref, w1_ref, wv_ref, wv1_ref, wh_ref, b_ref,
                     out_ref):
    f32, bf16 = jnp.float32, jnp.bfloat16
    x = x_ref[...]                                            # (T, 128) bf16

    # geo_fc_0 on cat(uv_feat, uvh_encoding)  (fused, zero rows for vd/pad)
    net = jnp.dot(x, w0_ref[...], preferred_element_type=f32) + b_ref[0:1, :]
    net = jnp.maximum(net, 0.0).astype(bf16)                  # ReLU (f32) -> bf16
    # geo_fc_1
    net = jnp.dot(net, w1_ref[...], preferred_element_type=f32) + b_ref[1:2, :]
    net = jnp.maximum(net, 0.0).astype(bf16)
    # view_fc_0 on cat(net, viewdir, uvh_feat)  (split-weight form over (net, x))
    v = (jnp.dot(net, wv_ref[0:HID0, :], preferred_element_type=f32)
         + jnp.dot(x, wv_ref[HID0:HID0 + K_IN, :], preferred_element_type=f32)
         + b_ref[2:3, :])
    v = jnp.maximum(v, 0.0).astype(bf16)
    # view_fc_1
    v = jnp.dot(v, wv1_ref[...], preferred_element_type=f32) + b_ref[3:4, 0:HID1]
    v = jnp.maximum(v, 0.0).astype(bf16)
    # head: alpha_fc in column 0, rgb_fc in columns 1:4 (padded weights, no concat)
    out_ref[...] = (jnp.dot(net, wh_ref[0:HID0, :], preferred_element_type=f32)
                    + jnp.dot(v, wh_ref[HID0:HID0 + HID1, :],
                              preferred_element_type=f32)
                    + b_ref[4:5, 0:OUT_DIM])


# ------------------------- parameter packing (wrapper) ----------------------
def pack_params(p):
    """Pack the 15 raw f32 params into 6 kernel arrays (weights in bf16)."""
    bf16 = jnp.bfloat16
    # layer-0 weight: rows [feat | enc | zeros(vd) | zeros(pad)]
    w0 = jnp.zeros((K_IN, HID0), jnp.float32)
    w0 = w0.at[_FEAT_OFF:_FEAT_OFF + UVH_FEAT_DIM].set(p["w0f"])
    w0 = w0.at[_ENC_OFF:_ENC_OFF + UVH_DIM].set(p["w0e"])
    # view-0 weight: [wv0n (net rows) ; wv0f/zeros/wv0v aligned to packed input]
    wv = jnp.zeros((HID0 + K_IN, HID0), jnp.float32)
    wv = wv.at[0:HID0].set(p["wv0n"])
    wv = wv.at[HID0 + _FEAT_OFF:HID0 + _FEAT_OFF + UVH_FEAT_DIM].set(p["wv0f"])
    wv = wv.at[HID0 + _VD_OFF:HID0 + _VD_OFF + VIEW_DIM].set(p["wv0v"])
    # padded 4-wide head: col 0 = alpha_fc, cols 1:4 = rgb_fc
    wh = jnp.zeros((HID0 + HID1, OUT_DIM), jnp.float32)
    wh = wh.at[0:HID0, 0:1].set(p["wa"])
    wh = wh.at[HID0:HID0 + HID1, 1:1 + NERF_DIM].set(p["wr"])
    # biases stay f32 (VPU adds in f32; v5e has no bf16 elementwise)
    bias = jnp.zeros((8, HID0), jnp.float32)
    bias = bias.at[0, :].set(p["b0"][0])
    bias = bias.at[1, :].set(p["b1"][0])
    bias = bias.at[2, :].set(p["bv0"][0])
    bias = bias.at[3, :HID1].set(p["bv1"][0])
    bias = bias.at[4, 0:1].set(p["ba"][0])
    bias = bias.at[4, 1:1 + NERF_DIM].set(p["br"][0])
    return (w0.astype(bf16), p["w1"].astype(bf16), wv.astype(bf16),
            p["wv1"].astype(bf16), wh.astype(bf16), bias)


def nerf_mlp_pallas(feat, enc, vd, params):
    """feat/enc/vd: (Ntot, C) f32; returns (Ntot, 1+NERF_DIM) f32."""
    ntot = feat.shape[0]
    # Pack inputs into one lane-dense bf16 slab (halves input DMA bytes).
    x = jnp.zeros((ntot, K_IN), jnp.float32)
    x = x.at[:, _FEAT_OFF:_FEAT_OFF + UVH_FEAT_DIM].set(feat)
    x = x.at[:, _ENC_OFF:_ENC_OFF + UVH_DIM].set(enc)
    x = x.at[:, _VD_OFF:_VD_OFF + VIEW_DIM].set(vd)
    x = x.astype(jnp.bfloat16)

    ntot_pad = ((ntot + TILE_N - 1) // TILE_N) * TILE_N
    if ntot_pad != ntot:
        x = jnp.pad(x, ((0, ntot_pad - ntot), (0, 0)))
    grid = (ntot_pad // TILE_N,)

    w0, w1, wv, wv1, wh, bias = pack_params(params)

    def const_spec(a):
        return pl.BlockSpec(a.shape, lambda i: (0,) * a.ndim)

    flops_per_row = 2 * (K_IN * HID0 + HID0 * HID0 + HID0 * HID0 + K_IN * HID0
                         + HID0 * HID1 + HID0 * OUT_DIM + HID1 * OUT_DIM)
    weight_bytes = 2 * (w0.size + w1.size + wv.size + wv1.size + wh.size) + 4 * bias.size
    cost = pl.CostEstimate(
        flops=flops_per_row * ntot_pad,
        transcendentals=0,
        bytes_accessed=ntot_pad * (K_IN * 2 + OUT_DIM * 4) + weight_bytes)

    out = pl.pallas_call(
        _nerf_mlp_kernel,
        out_shape=jax.ShapeDtypeStruct((ntot_pad, OUT_DIM), jnp.float32),
        grid=grid,
        in_specs=[pl.BlockSpec((TILE_N, K_IN), lambda i: (i, 0)),
                  const_spec(w0), const_spec(w1), const_spec(wv),
                  const_spec(wv1), const_spec(wh), const_spec(bias)],
        out_specs=pl.BlockSpec((TILE_N, OUT_DIM), lambda i: (i, 0)),
        compiler_params=pltpu.CompilerParams(
            dimension_semantics=("parallel",),
            vmem_limit_bytes=32 * 1024 * 1024),
        cost_estimate=cost,
    )(x, w0, w1, wv, wv1, wh, bias)
    return out[:ntot]


# ------------------------- pure-JAX reference MLP ---------------------------
def nerf_mlp_reference(feat, enc, vd, p, match_bf16=True):
    """Same MLP in plain JAX.  match_bf16=True mirrors the kernel's bf16
    operand casts (f32 accumulate) so the comparison is apples-to-apples."""
    f32 = jnp.float32
    c = (lambda a: a.astype(jnp.bfloat16)) if match_bf16 else (lambda a: a)
    net = (jnp.dot(c(feat), c(p["w0f"]), preferred_element_type=f32)
           + jnp.dot(c(enc), c(p["w0e"]), preferred_element_type=f32) + p["b0"])
    net = jnp.maximum(net, 0.0)
    net = jnp.dot(c(net), c(p["w1"]), preferred_element_type=f32) + p["b1"]
    net = jnp.maximum(net, 0.0)
    alpha = jnp.dot(c(net), c(p["wa"]), preferred_element_type=f32) + p["ba"]
    v = (jnp.dot(c(net), c(p["wv0n"]), preferred_element_type=f32)
         + jnp.dot(c(vd), c(p["wv0v"]), preferred_element_type=f32)
         + jnp.dot(c(feat), c(p["wv0f"]), preferred_element_type=f32) + p["bv0"])
    v = jnp.maximum(v, 0.0)
    v = jnp.dot(c(v), c(p["wv1"]), preferred_element_type=f32) + p["bv1"]
    v = jnp.maximum(v, 0.0)
    rgb = jnp.dot(c(v), c(p["wr"]), preferred_element_type=f32) + p["br"]
    return jnp.concatenate([alpha, rgb], axis=-1)


# ------------------------------ JAX glue ------------------------------------
def posenc(x, num_freqs=NUM_FREQS):
    """Standard NeRF frequency embedding (include_input=True)."""
    freqs = 2.0 ** jnp.arange(num_freqs, dtype=x.dtype)        # 1,2,4,8
    xb = x[..., None, :] * freqs[:, None]                      # (..., L, D)
    emb = jnp.concatenate([jnp.sin(xb), jnp.cos(xb)], axis=-1) # (..., L, 2D)
    emb = emb.reshape(x.shape[:-1] + (num_freqs * 2 * x.shape[-1],))
    return jnp.concatenate([x, emb], axis=-1)


def index_posmap_by_vts(posmap, uv):
    """Bilinear sample posmap (B,C,H,W) at uv (B,N,2) in [0,1] -> (B,C,N).
    # TODO(synk): exact Index_UV_Generator.index_posmap_by_vts grid_sample
    # alignment convention unavailable; align_corners=True bilinear used here.
    """
    _, _, H, W = posmap.shape
    x = uv[..., 0] * (W - 1)
    y = uv[..., 1] * (H - 1)
    x0 = jnp.floor(x)
    y0 = jnp.floor(y)
    wx = (x - x0)[:, None, :]
    wy = (y - y0)[:, None, :]
    x0i = jnp.clip(x0.astype(jnp.int32), 0, W - 1)
    y0i = jnp.clip(y0.astype(jnp.int32), 0, H - 1)
    x1i = jnp.clip(x0i + 1, 0, W - 1)
    y1i = jnp.clip(y0i + 1, 0, H - 1)

    def gather(yi, xi):
        return jax.vmap(lambda pm, yy, xx: pm[:, yy, xx])(posmap, yi, xi)  # (B,C,N)

    f00 = gather(y0i, x0i)
    f01 = gather(y0i, x1i)
    f10 = gather(y1i, x0i)
    f11 = gather(y1i, x1i)
    return (f00 * (1 - wx) * (1 - wy) + f01 * wx * (1 - wy)
            + f10 * (1 - wx) * wy + f11 * wx * wy)


def trans_to_uv(smpl_vertices, pts, vts_uv):
    """# TODO(synk): SMPL_Util.get_nearest_pts_in_mesh_torch (barycentric UV on
    nearest mesh face) needs SMPL assets; approximated by nearest-vertex UV and
    Euclidean distance as h."""
    d2 = jnp.sum((pts[:, :, None, :] - smpl_vertices[:, None, :, :]) ** 2, axis=-1)
    idx = jnp.argmin(d2, axis=-1)                         # (B,N)
    near_uv = vts_uv[idx]                                 # (B,N,2)
    h = jnp.sqrt(jnp.min(d2, axis=-1))[..., None]         # (B,N,1)
    return near_uv, h


def gen_uv_latent(batch, input_latent, vts_uv):
    """gen_UVlatent with uv_2dplane=True, combine_pose_style=False."""
    near_uv, h_pred = trans_to_uv(batch["smpl_vertices"],
                                  batch["sampled_pts_smpl"], vts_uv)
    uvh_plane = input_latent[:, :POSENET_OUTDIM]
    style_uv = input_latent[:, POSENET_OUTDIM:]
    pts_huv = jnp.concatenate([h_pred, near_uv], axis=2)              # (B,N,3)
    inp = jnp.concatenate([uvh_plane, style_uv], axis=1)              # (B,24,H,W)
    fused_feat = index_posmap_by_vts(inp, near_uv)                    # (B,24,N)
    huvlat = posenc(pts_huv)                                          # (B,N,27)
    return fused_feat, huvlat, near_uv


def forward(batch, uv_latent, params, vts_uv, use_pallas=True):
    """HumanUVNerfMotion.forward (learn_uv=False -> returns raw (B,N,1+rgb))."""
    viewdir = batch["view_dir"]                                       # (B,N,27)
    uv_feat, uvh_enc, _uv_coord = gen_uv_latent(batch, uv_latent, vts_uv)
    B, C, N = uv_feat.shape
    feat = jnp.transpose(uv_feat, (0, 2, 1)).reshape(B * N, C)
    enc = uvh_enc.reshape(B * N, UVH_DIM)
    vd = viewdir.reshape(B * N, VIEW_DIM)
    if use_pallas:
        raw = nerf_mlp_pallas(feat, enc, vd, params)
    else:
        raw = nerf_mlp_reference(feat, enc, vd, params, match_bf16=True)
    return raw.reshape(B, N, 1 + NERF_DIM)


# ------------------------------ parameters ----------------------------------
def init_params(key):
    ks = jax.random.split(key, 12)

    def lin(k, fan_in, fan_out):
        return (jax.random.normal(k, (fan_in, fan_out), jnp.float32)
                / jnp.sqrt(jnp.float32(fan_in)))

    def bias(k, n):
        return 0.01 * jax.random.normal(k, (1, n), jnp.float32)

    in0 = UVH_FEAT_DIM + UVH_DIM            # geo_fc_0 in (plus_uvh_enc=True)
    inv0 = HID0 + VIEW_DIM + UVH_FEAT_DIM   # view_fc_0 in
    w0 = lin(ks[0], in0, HID0)
    wv0 = lin(ks[6], inv0, HID0)
    return dict(
        w0f=w0[:UVH_FEAT_DIM], w0e=w0[UVH_FEAT_DIM:], b0=bias(ks[1], HID0),
        w1=lin(ks[2], HID0, HID0), b1=bias(ks[3], HID0),
        wa=lin(ks[4], HID0, 1), ba=bias(ks[5], 1),
        wv0n=wv0[:HID0], wv0v=wv0[HID0:HID0 + VIEW_DIM],
        wv0f=wv0[HID0 + VIEW_DIM:], bv0=bias(ks[7], HID0),
        wv1=lin(ks[8], HID0, HID1), bv1=bias(ks[9], HID1),
        wr=lin(ks[10], HID1, NERF_DIM), br=bias(ks[11], NERF_DIM),
    )


# --------------------------------- main --------------------------------------
if __name__ == "__main__":
    key = jax.random.PRNGKey(0)
    kk = jax.random.split(key, 6)
    B, N, V = 2, 512, 32          # B*N = 1024 rows -> grid of 2 tiles of 512

    uv_latent = jax.random.normal(
        kk[0], (B, POSENET_OUTDIM + TEX_LATENT_DIM, UV_RESO, UV_RESO), jnp.float32)
    batch = {
        "sampled_pts_smpl": 0.3 * jax.random.normal(kk[1], (B, N, 3), jnp.float32),
        "smpl_vertices":    0.3 * jax.random.normal(kk[2], (B, V, 3), jnp.float32),
        "view_dir":         jax.random.normal(kk[3], (B, N, VIEW_DIM), jnp.float32),
    }
    vts_uv = jax.random.uniform(kk[4], (V, 2), jnp.float32)
    params = init_params(kk[5])

    out = forward(batch, uv_latent, params, vts_uv, use_pallas=True)
    out = jax.block_until_ready(out)

    ref = forward(batch, uv_latent, params, vts_uv, use_pallas=False)
    ref = jax.block_until_ready(ref)

    assert out.shape == (B, N, 1 + NERF_DIM), out.shape
    assert jnp.allclose(out, ref, atol=1e-2, rtol=1e-2), \
        float(jnp.max(jnp.abs(out - ref)))
    print("KERNEL_OK")
</pallas_src>

<mosaic_0001>
module attributes {stable_mosaic.version = 11 : i64} {
  func.func @_nerf_mlp_kernel(%arg0: i32, %arg1: memref<512x128xbf16, #tpu.memory_space<vmem>>, %arg2: memref<128x256xbf16, #tpu.memory_space<vmem>>, %arg3: memref<256x256xbf16, #tpu.memory_space<vmem>>, %arg4: memref<384x256xbf16, #tpu.memory_space<vmem>>, %arg5: memref<256x128xbf16, #tpu.memory_space<vmem>>, %arg6: memref<384x4xbf16, #tpu.memory_space<vmem>>, %arg7: memref<8x256xf32, #tpu.memory_space<vmem>>, %arg8: memref<512x4xf32, #tpu.memory_space<vmem>>) attributes {dimension_semantics = [#tpu.dimension_semantics<parallel>], iteration_bounds = array<i64: 2>, scalar_prefetch = 0 : i64, scratch_operands = 0 : i64, tpu.core_type = #tpu.core_type<tc>, window_params = [{transform_indices = @transform_0, window_bounds = array<i64: 512, 128>}, {pipeline_mode = #tpu.pipeline_mode<synchronous>, transform_indices = @transform_1, window_bounds = array<i64: 128, 256>}, {pipeline_mode = #tpu.pipeline_mode<synchronous>, transform_indices = @transform_2, window_bounds = array<i64: 256, 256>}, {pipeline_mode = #tpu.pipeline_mode<synchronous>, transform_indices = @transform_3, window_bounds = array<i64: 384, 256>}, {pipeline_mode = #tpu.pipeline_mode<synchronous>, transform_indices = @transform_4, window_bounds = array<i64: 256, 128>}, {pipeline_mode = #tpu.pipeline_mode<synchronous>, transform_indices = @transform_5, window_bounds = array<i64: 384, 4>}, {pipeline_mode = #tpu.pipeline_mode<synchronous>, transform_indices = @transform_6, window_bounds = array<i64: 8, 256>}, {transform_indices = @transform_7, window_bounds = array<i64: 512, 4>}]} {
    %c0 = arith.constant 0 : index
    %c0_0 = arith.constant 0 : index
    %0 = vector.load %arg1[%c0, %c0_0] : memref<512x128xbf16, #tpu.memory_space<vmem>>, vector<512x128xbf16>
    %c0_1 = arith.constant 0 : index
    %c0_2 = arith.constant 0 : index
    %1 = vector.load %arg2[%c0_1, %c0_2] : memref<128x256xbf16, #tpu.memory_space<vmem>>, vector<128x256xbf16>
    %cst = arith.constant dense<0.000000e+00> : vector<512x256xf32>
    %2 = tpu.matmul %0, %1, %cst {dimension_numbers = #tpu.dot_dimension_numbers<[1], [0], [0], [1], [0, 0, 1, 1], [], []>} : vector<512x128xbf16>, vector<128x256xbf16>, vector<512x256xf32> -> vector<512x256xf32>
    %c0_3 = arith.constant 0 : index
    %c0_4 = arith.constant 0 : index
    %3 = vector.load %arg7[%c0_3, %c0_4] : memref<8x256xf32, #tpu.memory_space<vmem>>, vector<1x256xf32>
    %4 = vector.broadcast %3 : vector<1x256xf32> to vector<512x256xf32>
    %5 = arith.addf %2, %4 : vector<512x256xf32>
    %cst_5 = arith.constant 0.000000e+00 : f32
    %6 = vector.broadcast %cst_5 : f32 to vector<512x256xf32>
    %7 = arith.maximumf %5, %6 : vector<512x256xf32>
    %8 = arith.truncf %7 : vector<512x256xf32> to vector<512x256xbf16>
    %c0_6 = arith.constant 0 : index
    %c0_7 = arith.constant 0 : index
    %9 = vector.load %arg3[%c0_6, %c0_7] : memref<256x256xbf16, #tpu.memory_space<vmem>>, vector<256x256xbf16>
    %cst_8 = arith.constant dense<0.000000e+00> : vector<512x256xf32>
    %10 = tpu.matmul %8, %9, %cst_8 {dimension_numbers = #tpu.dot_dimension_numbers<[1], [0], [0], [1], [0, 0, 1, 1], [], []>} : vector<512x256xbf16>, vector<256x256xbf16>, vector<512x256xf32> -> vector<512x256xf32>
    %c1 = arith.constant 1 : index
    %c0_9 = arith.constant 0 : index
    %11 = vector.load %arg7[%c1, %c0_9] : memref<8x256xf32, #tpu.memory_space<vmem>>, vector<1x256xf32>
    %12 = vector.broadcast %11 : vector<1x256xf32> to vector<512x256xf32>
    %13 = arith.addf %10, %12 : vector<512x256xf32>
    %cst_10 = arith.constant 0.000000e+00 : f32
    %14 = vector.broadcast %cst_10 : f32 to vector<512x256xf32>
    %15 = arith.maximumf %13, %14 : vector<512x256xf32>
    %16 = arith.truncf %15 : vector<512x256xf32> to vector<512x256xbf16>
    %c0_11 = arith.constant 0 : index
    %c0_12 = arith.constant 0 : index
    %17 = vector.load %arg4[%c0_11, %c0_12] : memref<384x256xbf16, #tpu.memory_space<vmem>>, vector<256x256xbf16>
    %cst_13 = arith.constant dense<0.000000e+00> : vector<512x256xf32>
    %18 = tpu.matmul %16, %17, %cst_13 {dimension_numbers = #tpu.dot_dimension_numbers<[1], [0], [0], [1], [0, 0, 1, 1], [], []>} : vector<512x256xbf16>, vector<256x256xbf16>, vector<512x256xf32> -> vector<512x256xf32>
    %c256 = arith.constant 256 : index
    %c0_14 = arith.constant 0 : index
    %19 = vector.load %arg4[%c256, %c0_14] : memref<384x256xbf16, #tpu.memory_space<vmem>>, vector<128x256xbf16>
    %cst_15 = arith.constant dense<0.000000e+00> : vector<512x256xf32>
    %20 = tpu.matmul %0, %19, %cst_15 {dimension_numbers = #tpu.dot_dimension_numbers<[1], [0], [0], [1], [0, 0, 1, 1], [], []>} : vector<512x128xbf16>, vector<128x256xbf16>, vector<512x256xf32> -> vector<512x256xf32>
    %21 = arith.addf %18, %20 : vector<512x256xf32>
    %c2 = arith.constant 2 : index
    %c0_16 = arith.constant 0 : index
    %22 = vector.load %arg7[%c2, %c0_16] : memref<8x256xf32, #tpu.memory_space<vmem>>, vector<1x256xf32>
    %23 = vector.broadcast %22 : vector<1x256xf32> to vector<512x256xf32>
    %24 = arith.addf %21, %23 : vector<512x256xf32>
    %cst_17 = arith.constant 0.000000e+00 : f32
    %25 = vector.broadcast %cst_17 : f32 to vector<512x256xf32>
    %26 = arith.maximumf %24, %25 : vector<512x256xf32>
    %27 = arith.truncf %26 : vector<512x256xf32> to vector<512x256xbf16>
    %c0_18 = arith.constant 0 : index
    %c0_19 = arith.constant 0 : index
    %28 = vector.load %arg5[%c0_18, %c0_19] : memref<256x128xbf16, #tpu.memory_space<vmem>>, vector<256x128xbf16>
    %cst_20 = arith.constant dense<0.000000e+00> : vector<512x128xf32>
    %29 = tpu.matmul %27, %28, %cst_20 {dimension_numbers = #tpu.dot_dimension_numbers<[1], [0], [0], [1], [0, 0, 1, 1], [], []>} : vector<512x256xbf16>, vector<256x128xbf16>, vector<512x128xf32> -> vector<512x128xf32>
    %c3 = arith.constant 3 : index
    %c0_21 = arith.constant 0 : index
    %30 = vector.load %arg7[%c3, %c0_21] : memref<8x256xf32, #tpu.memory_space<vmem>>, vector<1x128xf32>
    %31 = vector.broadcast %30 : vector<1x128xf32> to vector<512x128xf32>
    %32 = arith.addf %29, %31 : vector<512x128xf32>
    %cst_22 = arith.constant 0.000000e+00 : f32
    %33 = vector.broadcast %cst_22 : f32 to vector<512x128xf32>
    %34 = arith.maximumf %32, %33 : vector<512x128xf32>
    %35 = arith.truncf %34 : vector<512x128xf32> to vector<512x128xbf16>
    %c0_23 = arith.constant 0 : index
    %c0_24 = arith.constant 0 : index
    %36 = vector.load %arg6[%c0_23, %c0_24] : memref<384x4xbf16, #tpu.memory_space<vmem>>, vector<256x4xbf16>
    %cst_25 = arith.constant dense<0.000000e+00> : vector<512x4xf32>
    %37 = tpu.matmul %16, %36, %cst_25 {dimension_numbers = #tpu.dot_dimension_numbers<[1], [0], [0], [1], [0, 0, 1, 1], [], []>} : vector<512x256xbf16>, vector<256x4xbf16>, vector<512x4xf32> -> vector<512x4xf32>
    %c256_26 = arith.constant 256 : index
    %c0_27 = arith.constant 0 : index
    %38 = vector.load %arg6[%c256_26, %c0_27] : memref<384x4xbf16, #tpu.memory_space<vmem>>, vector<128x4xbf16>
    %cst_28 = arith.constant dense<0.000000e+00> : vector<512x4xf32>
    %39 = tpu.matmul %35, %38, %cst_28 {dimension_numbers = #tpu.dot_dimension_numbers<[1], [0], [0], [1], [0, 0, 1, 1], [], []>} : vector<512x128xbf16>, vector<128x4xbf16>, vector<512x4xf32> -> vector<512x4xf32>
    %40 = arith.addf %37, %39 : vector<512x4xf32>
    %c4 = arith.constant 4 : index
    %c0_29 = arith.constant 0 : index
    %41 = vector.load %arg7[%c4, %c0_29] : memref<8x256xf32, #tpu.memory_space<vmem>>, vector<1x4xf32>
    %42 = vector.broadcast %41 : vector<1x4xf32> to vector<512x4xf32>
    %43 = arith.addf %40, %42 : vector<512x4xf32>
    %c0_30 = arith.constant 0 : index
    %c0_31 = arith.constant 0 : index
    %44 = vector.load %arg8[%c0_30, %c0_31] : memref<512x4xf32, #tpu.memory_space<vmem>>, vector<512x4xf32>
    tpu.vector_store %arg8[%c0_30, %c0_31], %43 {strides = array<i32>} : memref<512x4xf32, #tpu.memory_space<vmem>>, vector<512x4xf32>,
    return
  }
  func.func @transform_0(%arg0: i32) -> (i32, i32) {
    %c0_i32 = arith.constant 0 : i32
    %c0_i32_0 = arith.constant 0 : i32
    return %arg0, %c0_i32 : i32, i32
  }
  func.func @transform_1(%arg0: i32) -> (i32, i32) {
    %c0_i32 = arith.constant 0 : i32
    %c0_i32_0 = arith.constant 0 : i32
    %c0_i32_1 = arith.constant 0 : i32
    return %c0_i32, %c0_i32_0 : i32, i32
  }
  func.func @transform_2(%arg0: i32) -> (i32, i32) {
    %c0_i32 = arith.constant 0 : i32
    %c0_i32_0 = arith.constant 0 : i32
    %c0_i32_1 = arith.constant 0 : i32
    return %c0_i32, %c0_i32_0 : i32, i32
  }
  func.func @transform_3(%arg0: i32) -> (i32, i32) {
    %c0_i32 = arith.constant 0 : i32
    %c0_i32_0 = arith.constant 0 : i32
    %c0_i32_1 = arith.constant 0 : i32
    return %c0_i32, %c0_i32_0 : i32, i32
  }
  func.func @transform_4(%arg0: i32) -> (i32, i32) {
    %c0_i32 = arith.constant 0 : i32
    %c0_i32_0 = arith.constant 0 : i32
    %c0_i32_1 = arith.constant 0 : i32
    return %c0_i32, %c0_i32_0 : i32, i32
  }
  func.func @transform_5(%arg0: i32) -> (i32, i32) {
    %c0_i32 = arith.constant 0 : i32
    %c0_i32_0 = arith.constant 0 : i32
    %c0_i32_1 = arith.constant 0 : i32
    return %c0_i32, %c0_i32_0 : i32, i32
  }
  func.func @transform_6(%arg0: i32) -> (i32, i32) {
    %c0_i32 = arith.constant 0 : i32
    %c0_i32_0 = arith.constant 0 : i32
    %c0_i32_1 = arith.constant 0 : i32
    return %c0_i32, %c0_i32_0 : i32, i32
  }
  func.func @transform_7(%arg0: i32) -> (i32, i32) {
    %c0_i32 = arith.constant 0 : i32
    %c0_i32_0 = arith.constant 0 : i32
    return %arg0, %c0_i32 : i32, i32
  }
}

</mosaic_0001>

<llo_original>
// kernel: tpu_custom_call.1
$region0: #{tpu_custom_call.1}
  #allocation0 [shape = 'u32[]', space=smem, size = 0x4, offset = 0x4, fixed_abs, tag = 'smem constant byte address 0x4 - core index']
  #allocation1 [shape = 'u32[72,128]{1,0:T(1,128)}', space=vmem, size = 0x9000, scoped, tag = 'internal scratch']
  %s0 = inlined_call_operand.hbm [shape: bf16[1024,128], index: 0, kind: input, shape index: {}]
  %s1 = inlined_call_operand.vmem [shape: bf16[128,256], index: 1, kind: input, shape index: {}]
  %s2 = inlined_call_operand.hbm [shape: bf16[256,256], index: 2, kind: input, shape index: {}]
  %s3 = inlined_call_operand.hbm [shape: bf16[384,256], index: 3, kind: input, shape index: {}]
  %s4 = inlined_call_operand.hbm [shape: bf16[256,128], index: 4, kind: input, shape index: {}]
  %s5 = inlined_call_operand.vmem [shape: bf16[384,4], index: 5, kind: input, shape index: {}]
  %s6 = inlined_call_operand.vmem [shape: f32[8,256], index: 6, kind: input, shape index: {}]
  %s7 = inlined_call_operand.vmem [shape: f32[1024,4], index: 7, kind: output, shape index: {}]
  %s8 = sld [smem:[#allocation0]]
  $region77: #{tpu_custom_call.1} parent=0
    _
  %s10 = ssub.s32 1, %s8
  %s11 = scalar_select 0, %s10, %s8
  $region1: #{tpu_custom_call.1} parent=0
    #allocation2 [shape = 'u8[262144]{0}', space=vmem, size = 0x40000, scoped, tag = 'input window, operand 0']
    #allocation3 [shape = 's32[2]{0}', space=sflag, size = 0x8, scoped, tag = 'scoped memory for tpu_custom_call.1']
    #allocation4 [shape = 'u8[131072]{0}', space=vmem, size = 0x20000, scoped, tag = 'input window, operand 2, single buffered']
    #allocation5 [shape = 's32[1]{0}', space=sflag, size = 0x4, scoped, tag = 'scoped memory for tpu_custom_call.1']
    #allocation6 [shape = 'u8[196608]{0}', space=vmem, size = 0x30000, scoped, tag = 'input window, operand 3, single buffered']
    #allocation7 [shape = 'u8[65536]{0}', space=vmem, size = 0x10000, scoped, tag = 'input window, operand 4, single buffered']
    #allocation8 [shape = 's32[1]{0}', space=sflag, size = 0x4, scoped, tag = 'scoped memory for tpu_custom_call.1']
    %12 = vsyncpa [#allocation3], 0
    %s13 = scalar_lea.sflag [#allocation3], 1
    %14 = vsyncpa %s13, 0
    %15 = vsyncpa [#allocation5], 0
    %16 = vsyncpa [#allocation8], 0
    loop: start=0, step=1, limit=4
    $region2: #{tpu_custom_call.1} parent=1 // loop_pre_header
      _
    $region3: #{tpu_custom_call.1} parent=1 // loop_header
      %s18 = sphi 0, %s22
      %p19 = scmp.ge.s32.totalorder %s18, 4
      %s28 = sphi 0, %s30
      %s31 = sphi 0, %s28
      %s32 = sphi 0, %s31
      %s48 = sphi 0, %s32
      %s52 = sphi 0, %s52
      %s54 = sphi 0, %s52
      %s55 = sphi 0, %s54
      %s69 = sphi 0, %s55
      %s73 = sphi 0, %s73
      %s75 = sphi 0, %s73
      %s76 = sphi 0, %s75
      %s90 = sphi 0, %s76
      %s94 = sphi 0, %s94
      %s96 = sphi 0, %s94
      %s97 = sphi 0, %s96
      %s111 = sphi 0, %s97
      %s115 = sphi 0, %s115
      %s117 = sphi 0, %s115
      %s118 = sphi 0, %s117
      %s132 = sphi 0, %s118
      %s136 = sphi 0, %s136
      %s138 = sphi 0, %s136
      %s139 = sphi 0, %s138
      %s153 = sphi 0, %s139
      %s157 = sphi 0, %s157
      %s159 = sphi 0, %s157
      %s160 = sphi 0, %s159
      %s174 = sphi 0, %s160
      %s180 = sphi 0, %s182
      %s183 = sphi 0, %s180
      %s184 = sphi 0, %s183
      %s200 = sphi 0, %s184
    $region4: #{tpu_custom_call.1} parent=1 // loop_header_branch
      %21 = sbr.rel (%p19) target = $region8
    $region5: #{tpu_custom_call.1} parent=1 // loop_body
      %s23 = ssub.s32 %s18, 1
      %s24 = ssub.s32 %s18, 2
      %s25 = sadd.s32 %s18, 1
      %s26 = ssub.s32 %s18, %s25
      %p27 = scmp.eq.s32.totalorder %s26, 0
      %s29 = sadd.s32 %s28, 1
      %s30 = scalar_select %p27, %s28, %s29
      %p33 = pneg %p27
      %p34 = scmp.eq.s32.totalorder %s18, 1
      %p35 = por %p33, %p34
      %p36 = scmp.ne.s32.totalorder %s28, %s31
      %p37 = scmp.eq.s32.totalorder %s18, 0
      %p38 = por %p36, %p37
      %p39 = scmp.ne.s32.totalorder %s28, %s31
      %p40 = scmp.eq.s32.totalorder %s23, 1
      %p41 = por %p39, %p40
      %p42 = scmp.ne.s32.totalorder %s31, %s32
      %p43 = scmp.eq.s32.totalorder %s23, 0
      %p44 = por %p42, %p43
      %p45 = scmp.ne.s32.totalorder %s31, %s32
      %p46 = scmp.eq.s32.totalorder %s24, 1
      %p47 = por %p45, %p46
      %p49 = scmp.ne.s32.totalorder %s32, %s48
      %p50 = scmp.eq.s32.totalorder %s24, 0
      %p51 = por %p49, %p50
      %s53 = sadd.s32 %s52, 1
      %p56 = scmp.eq.s32.totalorder %s18, 1
      %p57 = scmp.ne.s32.totalorder %s52, %s54
      %p58 = scmp.eq.s32.totalorder %s18, 0
      %p59 = por %p57, %p58
      %p60 = scmp.ne.s32.totalorder %s52, %s54
      %p61 = scmp.eq.s32.totalorder %s23, 1
      %p62 = por %p60, %p61
      %p63 = scmp.ne.s32.totalorder %s54, %s55
      %p64 = scmp.eq.s32.totalorder %s23, 0
      %p65 = por %p63, %p64
      %p66 = scmp.ne.s32.totalorder %s54, %s55
      %p67 = scmp.eq.s32.totalorder %s24, 1
      %p68 = por %p66, %p67
      %p70 = scmp.ne.s32.totalorder %s55, %s69
      %p71 = scmp.eq.s32.totalorder %s24, 0
      %p72 = por %p70, %p71
      %s74 = sadd.s32 %s73, 1
      %p77 = scmp.eq.s32.totalorder %s18, 1
      %p78 = scmp.ne.s32.totalorder %s73, %s75
      %p79 = scmp.eq.s32.totalorder %s18, 0
      %p80 = por %p78, %p79
      %p81 = scmp.ne.s32.totalorder %s73, %s75
      %p82 = scmp.eq.s32.totalorder %s23, 1
      %p83 = por %p81, %p82
      %p84 = scmp.ne.s32.totalorder %s75, %s76
      %p85 = scmp.eq.s32.totalorder %s23, 0
      %p86 = por %p84, %p85
      %p87 = scmp.ne.s32.totalorder %s75, %s76
      %p88 = scmp.eq.s32.totalorder %s24, 1
      %p89 = por %p87, %p88
      %p91 = scmp.ne.s32.totalorder %s76, %s90
      %p92 = scmp.eq.s32.totalorder %s24, 0
      %p93 = por %p91, %p92
      %s95 = sadd.s32 %s94, 1
      %p98 = scmp.eq.s32.totalorder %s18, 1
      %p99 = scmp.ne.s32.totalorder %s94, %s96
      %p100 = scmp.eq.s32.totalorder %s18, 0
      %p101 = por %p99, %p100
      %p102 = scmp.ne.s32.totalorder %s94, %s96
      %p103 = scmp.eq.s32.totalorder %s23, 1
      %p104 = por %p102, %p103
      %p105 = scmp.ne.s32.totalorder %s96, %s97
      %p106 = scmp.eq.s32.totalorder %s23, 0
      %p107 = por %p105, %p106
      %p108 = scmp.ne.s32.totalorder %s96, %s97
      %p109 = scmp.eq.s32.totalorder %s24, 1
      %p110 = por %p108, %p109
      %p112 = scmp.ne.s32.totalorder %s97, %s111
      %p113 = scmp.eq.s32.totalorder %s24, 0
      %p114 = por %p112, %p113
      %s116 = sadd.s32 %s115, 1
      %p119 = scmp.eq.s32.totalorder %s18, 1
      %p120 = scmp.ne.s32.totalorder %s115, %s117
      %p121 = scmp.eq.s32.totalorder %s18, 0
      %p122 = por %p120, %p121
      %p123 = scmp.ne.s32.totalorder %s115, %s117
      %p124 = scmp.eq.s32.totalorder %s23, 1
      %p125 = por %p123, %p124
      %p126 = scmp.ne.s32.totalorder %s117, %s118
      %p127 = scmp.eq.s32.totalorder %s23, 0
      %p128 = por %p126, %p127
      %p129 = scmp.ne.s32.totalorder %s117, %s118
      %p130 = scmp.eq.s32.totalorder %s24, 1
      %p131 = por %p129, %p130
      %p133 = scmp.ne.s32.totalorder %s118, %s132
      %p134 = scmp.eq.s32.totalorder %s24, 0
      %p135 = por %p133, %p134
      %s137 = sadd.s32 %s136, 1
      %p140 = scmp.eq.s32.totalorder %s18, 1
      %p141 = scmp.ne.s32.totalorder %s136, %s138
      %p142 = scmp.eq.s32.totalorder %s18, 0
      %p143 = por %p141, %p142
      %p144 = scmp.ne.s32.totalorder %s136, %s138
      %p145 = scmp.eq.s32.totalorder %s23, 1
      %p146 = por %p144, %p145
      %p147 = scmp.ne.s32.totalorder %s138, %s139
      %p148 = scmp.eq.s32.totalorder %s23, 0
      %p149 = por %p147, %p148
      %p150 = scmp.ne.s32.totalorder %s138, %s139
      %p151 = scmp.eq.s32.totalorder %s24, 1
      %p152 = por %p150, %p151
      %p154 = scmp.ne.s32.totalorder %s139, %s153
      %p155 = scmp.eq.s32.totalorder %s24, 0
      %p156 = por %p154, %p155
      %s158 = sadd.s32 %s157, 1
      %p161 = scmp.eq.s32.totalorder %s18, 1
      %p162 = scmp.ne.s32.totalorder %s157, %s159
      %p163 = scmp.eq.s32.totalorder %s18, 0
      %p164 = por %p162, %p163
      %p165 = scmp.ne.s32.totalorder %s157, %s159
      %p166 = scmp.eq.s32.totalorder %s23, 1
      %p167 = por %p165, %p166
      %p168 = scmp.ne.s32.totalorder %s159, %s160
      %p169 = scmp.eq.s32.totalorder %s23, 0
      %p170 = por %p168, %p169
      %p171 = scmp.ne.s32.totalorder %s159, %s160
      %p172 = scmp.eq.s32.totalorder %s24, 1
      %p173 = por %p171, %p172
      %p175 = scmp.ne.s32.totalorder %s160, %s174
      %p176 = scmp.eq.s32.totalorder %s24, 0
      %p177 = por %p175, %p176
      %s178 = ssub.s32 %s18, %s25
      %p179 = scmp.eq.s32.totalorder %s178, 0
      %s181 = sadd.s32 %s180, 1
      %s182 = scalar_select %p179, %s180, %s181
      %p185 = pneg %p179
      %p186 = scmp.eq.s32.totalorder %s18, 1
      %p187 = por %p185, %p186
      %p188 = scmp.ne.s32.totalorder %s180, %s183
      %p189 = scmp.eq.s32.totalorder %s18, 0
      %p190 = por %p188, %p189
      %p191 = scmp.ne.s32.totalorder %s180, %s183
      %p192 = scmp.eq.s32.totalorder %s23, 1
      %p193 = por %p191, %p192
      %p194 = scmp.ne.s32.totalorder %s183, %s184
      %p195 = scmp.eq.s32.totalorder %s23, 0
      %p196 = por %p194, %p195
      %p197 = scmp.ne.s32.totalorder %s183, %s184
      %p198 = scmp.eq.s32.totalorder %s24, 1
      %p199 = por %p197, %p198
      %p201 = scmp.ne.s32.totalorder %s184, %s200
      %p202 = scmp.eq.s32.totalorder %s24, 0
      %p203 = por %p201, %p202
      %p204 = scmp.le.s32.totalorder 1, %s18
      %p205 = scmp.lt.s32.totalorder %s18, 3
      %p206 = pnand %p204, %p205
      %p207 = pneg %p206
      // Predicated region
      $region9: #{tpu_custom_call.1} parent=5 // pred_check
        _
      $region10: #{tpu_custom_call.1} parent=5 // pred_check_branch
        %209 = sbr.rel (%p206) target = $region12
      $region11: #{tpu_custom_call.1} parent=5 // pred_region
        %s210 = ssub.s32 %s18, 1
        // Predicated region
        $region13: #{tpu_custom_call.1} parent=11 // pred_check
          %p211 = pneg %p65
        $region14: #{tpu_custom_call.1} parent=11 // pred_check_branch
          %213 = sbr.rel (%p211) target = $region16
        $region15: #{tpu_custom_call.1} parent=11 // pred_region
          _
        $region16: #{tpu_custom_call.1} parent=11 // pred_fallthru
          _
        // Predicated region
        $region17: #{tpu_custom_call.1} parent=11 // pred_check
          %p214 = pneg %p86
        $region18: #{tpu_custom_call.1} parent=11 // pred_check_branch
          %216 = sbr.rel (%p214) target = $region20
        $region19: #{tpu_custom_call.1} parent=11 // pred_region
          %218 = vsyncadd [#allocation5], 0
          %s219 = sshll.u32 %s2, 4
          %s220 = int_to_ptr.hbm [resolvable:$true] %s219
          %s221 = sshll.u32 [#allocation4], 4
          %s222 = int_to_ptr.vmem [resolvable:$true] %s221
          %227 = dma.hbm_to_vmem [thread:$0]  %s220, 4096, %s222, [#allocation5], 128, 128, 8
        $region20: #{tpu_custom_call.1} parent=11 // pred_fallthru
          _
        // Predicated region
        $region21: #{tpu_custom_call.1} parent=11 // pred_check
          %p228 = pneg %p107
        $region22: #{tpu_custom_call.1} parent=11 // pred_check_branch
          %230 = sbr.rel (%p228) target = $region24
        $region23: #{tpu_custom_call.1} parent=11 // pred_region
          %232 = vsyncadd [#allocation5], 0
          %s233 = sshll.u32 %s3, 4
          %s234 = int_to_ptr.hbm [resolvable:$true] %s233
          %s235 = sshll.u32 [#allocation6], 4
          %s236 = int_to_ptr.vmem [resolvable:$true] %s235
          %241 = dma.hbm_to_vmem [thread:$0]  %s234, 6144, %s236, [#allocation5], 128, 128, 8
        $region24: #{tpu_custom_call.1} parent=11 // pred_fallthru
          _
        // Predicated region
        $region25: #{tpu_custom_call.1} parent=11 // pred_check
          %p242 = pneg %p128
        $region26: #{tpu_custom_call.1} parent=11 // pred_check_branch
          %244 = sbr.rel (%p242) target = $region28
        $region27: #{tpu_custom_call.1} parent=11 // pred_region
          %246 = vsyncadd [#allocation8], 0
          %s247 = sshll.u32 %s4, 4
          %s248 = int_to_ptr.hbm [resolvable:$true] %s247
          %s249 = sshll.u32 [#allocation7], 4
          %s250 = int_to_ptr.vmem [resolvable:$true] %s249
          %255 = dma.hbm_to_vmem [thread:$0]  %s248, 2048, %s250, [#allocation8], 64, 64, 4
        $region28: #{tpu_custom_call.1} parent=11 // pred_fallthru
          _
        // Predicated region
        $region29: #{tpu_custom_call.1} parent=11 // pred_check
          %p256 = pneg %p149
        $region30: #{tpu_custom_call.1} parent=11 // pred_check_branch
          %258 = sbr.rel (%p256) target = $region32
        $region31: #{tpu_custom_call.1} parent=11 // pred_region
          _
        $region32: #{tpu_custom_call.1} parent=11 // pred_fallthru
          _
        // Predicated region
        $region33: #{tpu_custom_call.1} parent=11 // pred_check
          %p259 = pneg %p170
        $region34: #{tpu_custom_call.1} parent=11 // pred_check_branch
          %261 = sbr.rel (%p259) target = $region36
        $region35: #{tpu_custom_call.1} parent=11 // pred_region
          _
        $region36: #{tpu_custom_call.1} parent=11 // pred_fallthru
          _
      $region12: #{tpu_custom_call.1} parent=5 // pred_fallthru
        _
      %p262 = scmp.lt.s32.totalorder %s18, 2
      // Predicated region
      $region37: #{tpu_custom_call.1} parent=5 // pred_check
        %p263 = pneg %p262
      $region38: #{tpu_custom_call.1} parent=5 // pred_check_branch
        %265 = sbr.rel (%p263) target = $region40
      $region39: #{tpu_custom_call.1} parent=5 // pred_region
        // Predicated region
        $region41: #{tpu_custom_call.1} parent=39 // pred_check
          %p266 = pneg %p38
        $region42: #{tpu_custom_call.1} parent=39 // pred_check_branch
          %268 = sbr.rel (%p266) target = $region44
        $region43: #{tpu_custom_call.1} parent=39 // pred_region
          %s269 = sand.u32 %s28, 1
          %s270 = scalar_lea.sflag [#allocation3], %s269
          %s271 = sand.u32 %s28, 1
          %s272 = smul.addr %s271, 256
          %s273 = scalar_lea.vmem [#allocation2], %s272
          %s274 = smul.u32 64, %s18
          %276 = vsyncadd %s270, 0
          %s277 = smul.addr %s274, 4
          %s278 = scalar_lea.hbm %s0, %s277
          %s279 = sshll.u32 %s278, 4
          %s280 = int_to_ptr.hbm [resolvable:$true] %s279
          %s281 = sshll.u32 %s273, 4
          %s282 = int_to_ptr.vmem [resolvable:$true] %s281
          %287 = dma.hbm_to_vmem [thread:$0]  %s280, 4096, %s282, %s270, 64, 64, 4
        $region44: #{tpu_custom_call.1} parent=39 // pred_fallthru
          _
      $region40: #{tpu_custom_call.1} parent=5 // pred_fallthru
        _
      %p288 = scmp.le.s32.totalorder 1, %s18
      %p289 = scmp.lt.s32.totalorder %s18, 3
      %p290 = pnand %p288, %p289
      %p291 = pneg %p290
      // Predicated region
      $region45: #{tpu_custom_call.1} parent=5 // pred_check
        _
      $region46: #{tpu_custom_call.1} parent=5 // pred_check_branch
        %293 = sbr.rel (%p290) target = $region48
      $region47: #{tpu_custom_call.1} parent=5 // pred_region
        %s294 = ssub.s32 %s18, 1
        %s295 = sand.u32 %s31, 1
        %s296 = scalar_lea.sflag [#allocation3], %s295
        %s297 = sand.u32 %s31, 1
        %s298 = smul.addr %s297, 256
        %s299 = scalar_lea.vmem [#allocation2], %s298
        // Predicated region
        $region49: #{tpu_custom_call.1} parent=47 // pred_check
          %p300 = pneg %p44
        $region50: #{tpu_custom_call.1} parent=47 // pred_check_branch
          %302 = sbr.rel (%p300) target = $region52
        $region51: #{tpu_custom_call.1} parent=47 // pred_region
          %304 = dma.done %s296, 4096
        $region52: #{tpu_custom_call.1} parent=47 // pred_fallthru
          _
        // Predicated region
        $region53: #{tpu_custom_call.1} parent=47 // pred_check
          %p305 = pneg %p86
        $region54: #{tpu_custom_call.1} parent=47 // pred_check_branch
          %307 = sbr.rel (%p305) target = $region56
        $region55: #{tpu_custom_call.1} parent=47 // pred_region
          %309 = dma.done [#allocation5], 4096
        $region56: #{tpu_custom_call.1} parent=47 // pred_fallthru
          _
        // Predicated region
        $region57: #{tpu_custom_call.1} parent=47 // pred_check
          %p310 = pneg %p107
        $region58: #{tpu_custom_call.1} parent=47 // pred_check_branch
          %312 = sbr.rel (%p310) target = $region60
        $region59: #{tpu_custom_call.1} parent=47 // pred_region
          %314 = dma.done [#allocation5], 6144
        $region60: #{tpu_custom_call.1} parent=47 // pred_fallthru
          _
        // Predicated region
        $region61: #{tpu_custom_call.1} parent=47 // pred_check
          %p315 = pneg %p128
        $region62: #{tpu_custom_call.1} parent=47 // pred_check_branch
          %317 = sbr.rel (%p315) target = $region64
        $region63: #{tpu_custom_call.1} parent=47 // pred_region
          %319 = dma.done [#allocation8], 2048
        $region64: #{tpu_custom_call.1} parent=47 // pred_fallthru
          _
        %s320 = sand.u32 %s31, 1
        %s321 = scalar_lea.sflag [#allocation3], %s320
        %s322 = sand.u32 %s31, 1
        %s323 = smul.addr %s322, 256
        %s324 = scalar_lea.vmem [#allocation2], %s323
        %p325 = pneg %p44
        %p326 = pneg %p41
        %p327 = pneg %p65
        %p328 = pneg %p62
        %p329 = pneg %p86
        %p330 = pneg %p83
        %p331 = pneg %p107
        %p332 = pneg %p104
        %p333 = pneg %p128
        %p334 = pneg %p125
        %p335 = pneg %p149
        %p336 = pneg %p146
        %p337 = pneg %p170
        %p338 = pneg %p167
        %p339 = pneg %p196
        %p340 = pneg %p193
        %s341 = smul.u32 64, %s23
        %p342 = scmp.lt.s32.totalorder %s341, 127
        %s343 = scalar_select %p342, %s341, 127
        %s344 = smul.addr %s343, 8
        %s345 = scalar_lea.vmem %s7, %s344
        %s346 = smul.u32 64, %s23
        %s347 = smul.u32 64, %s23
        %p348 = scmp.lt.s32.totalorder %s347, 127
        %s349 = scalar_select %p348, %s347, 127
        %s350 = smul.addr %s349, 8
        %s351 = scalar_lea.vmem %s7, %s350
        %s352 = smul.u32 64, %s23
        %v353 = vld [vmem:[%s299] sm:$0xf]
        %v354 = vld [vmem:[%s299 + $0x4] sm:$0xf]
        %v355 = vld [vmem:[%s299 + $0x8] sm:$0xf]
        %v356 = vld [vmem:[%s299 + $0xc] sm:$0xf]
        %v357 = vld [vmem:[%s299 + $0x10] sm:$0xf]
        %v358 = vld [vmem:[%s299 + $0x14] sm:$0xf]
        %v359 = vld [vmem:[%s299 + $0x18] sm:$0xf]
        %v360 = vld [vmem:[%s299 + $0x1c] sm:$0xf]
        %v361 = vld [vmem:[%s299 + $0x20] sm:$0xf]
        %v362 = vld [vmem:[%s299 + $0x24] sm:$0xf]
        %v363 = vld [vmem:[%s299 + $0x28] sm:$0xf]
        %v364 = vld [vmem:[%s299 + $0x2c] sm:$0xf]
        %v365 = vld [vmem:[%s299 + $0x30] sm:$0xf]
        %v366 = vld [vmem:[%s299 + $0x34] sm:$0xf]
        %v367 = vld [vmem:[%s299 + $0x38] sm:$0xf]
        %v368 = vld [vmem:[%s299 + $0x3c] sm:$0xf]
        %v369 = vld [vmem:[%s299 + $0x40] sm:$0xf]
        %v370 = vld [vmem:[%s299 + $0x44] sm:$0xf]
        %v371 = vld [vmem:[%s299 + $0x48] sm:$0xf]
        %v372 = vld [vmem:[%s299 + $0x4c] sm:$0xf]
        %v373 = vld [vmem:[%s299 + $0x50] sm:$0xf]
        %v374 = vld [vmem:[%s299 + $0x54] sm:$0xf]
        %v375 = vld [vmem:[%s299 + $0x58] sm:$0xf]
        %v376 = vld [vmem:[%s299 + $0x5c] sm:$0xf]
        %v377 = vld [vmem:[%s299 + $0x60] sm:$0xf]
        %v378 = vld [vmem:[%s299 + $0x64] sm:$0xf]
        %v379 = vld [vmem:[%s299 + $0x68] sm:$0xf]
        %v380 = vld [vmem:[%s299 + $0x6c] sm:$0xf]
        %v381 = vld [vmem:[%s299 + $0x70] sm:$0xf]
        %v382 = vld [vmem:[%s299 + $0x74] sm:$0xf]
        %v383 = vld [vmem:[%s299 + $0x78] sm:$0xf]
        %v384 = vld [vmem:[%s299 + $0x7c] sm:$0xf]
        %v385 = vld [vmem:[%s299 + $0x80] sm:$0xf]
        %v386 = vld [vmem:[%s299 + $0x84] sm:$0xf]
        %v387 = vld [vmem:[%s299 + $0x88] sm:$0xf]
        %v388 = vld [vmem:[%s299 + $0x8c] sm:$0xf]
        %v389 = vld [vmem:[%s299 + $0x90] sm:$0xf]
        %v390 = vld [vmem:[%s299 + $0x94] sm:$0xf]
        %v391 = vld [vmem:[%s299 + $0x98] sm:$0xf]
        %v392 = vld [vmem:[%s299 + $0x9c] sm:$0xf]
        %v393 = vld [vmem:[%s299 + $0xa0] sm:$0xf]
        %v394 = vld [vmem:[%s299 + $0xa4] sm:$0xf]
        %v395 = vld [vmem:[%s299 + $0xa8] sm:$0xf]
        %v396 = vld [vmem:[%s299 + $0xac] sm:$0xf]
        %v397 = vld [vmem:[%s299 + $0xb0] sm:$0xf]
        %v398 = vld [vmem:[%s299 + $0xb4] sm:$0xf]
        %v399 = vld [vmem:[%s299 + $0xb8] sm:$0xf]
        %v400 = vld [vmem:[%s299 + $0xbc] sm:$0xf]
        %v401 = vld [vmem:[%s299 + $0xc0] sm:$0xf]
        %v402 = vld [vmem:[%s299 + $0xc4] sm:$0xf]
        %v403 = vld [vmem:[%s299 + $0xc8] sm:$0xf]
        %v404 = vld [vmem:[%s299 + $0xcc] sm:$0xf]
        %v405 = vld [vmem:[%s299 + $0xd0] sm:$0xf]
        %v406 = vld [vmem:[%s299 + $0xd4] sm:$0xf]
        %v407 = vld [vmem:[%s299 + $0xd8] sm:$0xf]
        %v408 = vld [vmem:[%s299 + $0xdc] sm:$0xf]
        %v409 = vld [vmem:[%s299 + $0xe0] sm:$0xf]
        %v410 = vld [vmem:[%s299 + $0xe4] sm:$0xf]
        %v411 = vld [vmem:[%s299 + $0xe8] sm:$0xf]
        %v412 = vld [vmem:[%s299 + $0xec] sm:$0xf]
        %v413 = vld [vmem:[%s299 + $0xf0] sm:$0xf]
        %v414 = vld [vmem:[%s299 + $0xf4] sm:$0xf]
        %v415 = vld [vmem:[%s299 + $0xf8] sm:$0xf]
        %v416 = vld [vmem:[%s299 + $0xfc] sm:$0xf]
        %v417 = vld [vmem:[%s1] sm:$0xff]
        %v418 = vld [vmem:[%s1 + $0x8] sm:$0xff]
        %v419 = vld [vmem:[%s1 + $0x10] sm:$0xff]
        %v420 = vld [vmem:[%s1 + $0x18] sm:$0xff]
        %v421 = vld [vmem:[%s1 + $0x20] sm:$0xff]
        %v422 = vld [vmem:[%s1 + $0x28] sm:$0xff]
        %v423 = vld [vmem:[%s1 + $0x30] sm:$0xff]
        %v424 = vld [vmem:[%s1 + $0x38] sm:$0xff]
        %v425 = vld [vmem:[%s1 + $0x40] sm:$0xff]
        %v426 = vld [vmem:[%s1 + $0x48] sm:$0xff]
        %v427 = vld [vmem:[%s1 + $0x50] sm:$0xff]
        %v428 = vld [vmem:[%s1 + $0x58] sm:$0xff]
        %v429 = vld [vmem:[%s1 + $0x60] sm:$0xff]
        %v430 = vld [vmem:[%s1 + $0x68] sm:$0xff]
        %v431 = vld [vmem:[%s1 + $0x70] sm:$0xff]
        %v432 = vld [vmem:[%s1 + $0x78] sm:$0xff]
        %v433 = vld [vmem:[%s6] ss:$8 sm:$0x3]
        %v435 = vperm.slane %v433, 0
        %v436 = vperm.slane %v433, 1
        %v503 = vunpack.c.l.b16 %v353
        %v504 = vunpack.c.l.b16 %v354
        %v505 = vunpack.c.l.b16 %v355
        %v506 = vunpack.c.l.b16 %v356
        %v507 = vunpack.c.l.b16 %v357
        %v508 = vunpack.c.l.b16 %v358
        %v509 = vunpack.c.l.b16 %v359
        %v510 = vunpack.c.l.b16 %v360
        %v511 = vunpack.c.l.b16 %v361
        %v512 = vunpack.c.l.b16 %v362
        %v513 = vunpack.c.l.b16 %v363
        %v514 = vunpack.c.l.b16 %v364
        %v515 = vunpack.c.l.b16 %v365
        %v516 = vunpack.c.l.b16 %v366
        %v517 = vunpack.c.l.b16 %v367
        %v518 = vunpack.c.l.b16 %v368
        %v519 = vunpack.c.l.b16 %v369
        %v520 = vunpack.c.l.b16 %v370
        %v521 = vunpack.c.l.b16 %v371
        %v522 = vunpack.c.l.b16 %v372
        %v523 = vunpack.c.l.b16 %v373
        %v524 = vunpack.c.l.b16 %v374
        %v525 = vunpack.c.l.b16 %v375
        %v526 = vunpack.c.l.b16 %v376
        %v527 = vunpack.c.l.b16 %v377
        %v528 = vunpack.c.l.b16 %v378
        %v529 = vunpack.c.l.b16 %v379
        %v530 = vunpack.c.l.b16 %v380
        %v531 = vunpack.c.l.b16 %v381
        %v532 = vunpack.c.l.b16 %v382
        %v533 = vunpack.c.l.b16 %v383
        %v534 = vunpack.c.l.b16 %v384
        %v535 = vunpack.c.l.b16 %v385
        %v536 = vunpack.c.l.b16 %v386
        %v537 = vunpack.c.l.b16 %v387
        %v538 = vunpack.c.l.b16 %v388
        %v539 = vunpack.c.l.b16 %v389
        %v540 = vunpack.c.l.b16 %v390
        %v541 = vunpack.c.l.b16 %v391
        %v542 = vunpack.c.l.b16 %v392
        %v543 = vunpack.c.l.b16 %v393
        %v544 = vunpack.c.l.b16 %v394
        %v545 = vunpack.c.l.b16 %v395
        %v546 = vunpack.c.l.b16 %v396
        %v547 = vunpack.c.l.b16 %v397
        %v548 = vunpack.c.l.b16 %v398
        %v549 = vunpack.c.l.b16 %v399
        %v550 = vunpack.c.l.b16 %v400
        %v551 = vunpack.c.l.b16 %v401
        %v552 = vunpack.c.l.b16 %v402
        %v553 = vunpack.c.l.b16 %v403
        %v554 = vunpack.c.l.b16 %v404
        %v555 = vunpack.c.l.b16 %v405
        %v556 = vunpack.c.l.b16 %v406
        %v557 = vunpack.c.l.b16 %v407
        %v558 = vunpack.c.l.b16 %v408
        %v559 = vunpack.c.l.b16 %v409
        %v560 = vunpack.c.l.b16 %v410
        %v561 = vunpack.c.l.b16 %v411
        %v562 = vunpack.c.l.b16 %v412
        %v563 = vunpack.c.l.b16 %v413
        %v564 = vunpack.c.l.b16 %v414
        %v565 = vunpack.c.l.b16 %v415
        %v566 = vunpack.c.l.b16 %v416
        %v567 = vpack.c.b16 %v504, %v503
        %v568 = vpack.c.b16 %v506, %v505
        %v569 = vpack.c.b16 %v508, %v507
        %v570 = vpack.c.b16 %v510, %v509
        %v571 = vpack.c.b16 %v512, %v511
        %v572 = vpack.c.b16 %v514, %v513
        %v573 = vpack.c.b16 %v516, %v515
        %v574 = vpack.c.b16 %v518, %v517
        %v575 = vpack.c.b16 %v520, %v519
        %v576 = vpack.c.b16 %v522, %v521
        %v577 = vpack.c.b16 %v524, %v523
        %v578 = vpack.c.b16 %v526, %v525
        %v579 = vpack.c.b16 %v528, %v527
        %v580 = vpack.c.b16 %v530, %v529
        %v581 = vpack.c.b16 %v532, %v531
        %v582 = vpack.c.b16 %v534, %v533
        %v583 = vpack.c.b16 %v536, %v535
        %v584 = vpack.c.b16 %v538, %v537
        %v585 = vpack.c.b16 %v540, %v539
        %v586 = vpack.c.b16 %v542, %v541
        %v587 = vpack.c.b16 %v544, %v543
        %v588 = vpack.c.b16 %v546, %v545
        %v589 = vpack.c.b16 %v548, %v547
        %v590 = vpack.c.b16 %v550, %v549
        %v591 = vpack.c.b16 %v552, %v551
        %v592 = vpack.c.b16 %v554, %v553
        %v593 = vpack.c.b16 %v556, %v555
        %v594 = vpack.c.b16 %v558, %v557
        %v595 = vpack.c.b16 %v560, %v559
        %v596 = vpack.c.b16 %v562, %v561
        %v597 = vpack.c.b16 %v564, %v563
        %v598 = vpack.c.b16 %v566, %v565
        %v647 = vunpack.c.l.b16 %v417
        %v648 = vunpack.c.h.b16 %v417
        %v649 = vunpack.c.l.b16 %v418
        %v650 = vunpack.c.h.b16 %v418
        %v651 = vunpack.c.l.b16 %v419
        %v652 = vunpack.c.h.b16 %v419
        %v653 = vunpack.c.l.b16 %v420
        %v654 = vunpack.c.h.b16 %v420
        %v655 = vunpack.c.l.b16 %v421
        %v656 = vunpack.c.h.b16 %v421
        %v657 = vunpack.c.l.b16 %v422
        %v658 = vunpack.c.h.b16 %v422
        %v659 = vunpack.c.l.b16 %v423
        %v660 = vunpack.c.h.b16 %v423
        %v661 = vunpack.c.l.b16 %v424
        %v662 = vunpack.c.h.b16 %v424
        %v663 = vunpack.c.l.b16 %v425
        %v664 = vunpack.c.h.b16 %v425
        %v665 = vunpack.c.l.b16 %v426
        %v666 = vunpack.c.h.b16 %v426
        %v667 = vunpack.c.l.b16 %v427
        %v668 = vunpack.c.h.b16 %v427
        %v669 = vunpack.c.l.b16 %v428
        %v670 = vunpack.c.h.b16 %v428
        %v671 = vunpack.c.l.b16 %v429
        %v672 = vunpack.c.h.b16 %v429
        %v673 = vunpack.c.l.b16 %v430
        %v674 = vunpack.c.h.b16 %v430
        %v675 = vunpack.c.l.b16 %v431
        %v676 = vunpack.c.h.b16 %v431
        %v677 = vunpack.c.l.b16 %v432
        %v678 = vunpack.c.h.b16 %v432
        %v679 = vpack.c.b16 %v649, %v647
        %v680 = vpack.c.b16 %v650, %v648
        %v681 = vpack.c.b16 %v653, %v651
        %v682 = vpack.c.b16 %v654, %v652
        %v683 = vpack.c.b16 %v657, %v655
        %v684 = vpack.c.b16 %v658, %v656
        %v685 = vpack.c.b16 %v661, %v659
        %v686 = vpack.c.b16 %v662, %v660
        %v687 = vpack.c.b16 %v665, %v663
        %v688 = vpack.c.b16 %v666, %v664
        %v689 = vpack.c.b16 %v669, %v667
        %v690 = vpack.c.b16 %v670, %v668
        %v691 = vpack.c.b16 %v673, %v671
        %v692 = vpack.c.b16 %v674, %v672
        %v693 = vpack.c.b16 %v677, %v675
        %v694 = vpack.c.b16 %v678, %v676
        %711 = vmatpush.bf16.msra.mxu0 %v693
        %712 = vmatpush.bf16.msra.mxu0 %v691
        %713 = vmatpush.bf16.msra.mxu0 %v689
        %714 = vmatpush.bf16.msra.mxu0 %v687
        %715 = vmatpush.bf16.msra.mxu0 %v685
        %716 = vmatpush.bf16.msra.mxu0 %v683
        %717 = vmatpush.bf16.msra.mxu0 %v681
        %718 = vmatpush.bf16.msra.mxu0 %v679
        %719 = vmatmul.bf16.gmra.mxu0 %v567
        %v720 = vpop.f32.mrf.mxu0
        %v721 = vadd.f32 %v435, %v720
        %v722 = vpop.f32.mrf.mxu0
        %v723 = vadd.f32 %v435, %v722
        %724 = vmatmul.bf16.gmra.mxu0 %v568
        %v725 = vpop.f32.mrf.mxu0
        %v726 = vadd.f32 %v435, %v725
        %v727 = vpop.f32.mrf.mxu0
        %v728 = vadd.f32 %v435, %v727
        %729 = vmatmul.bf16.gmra.mxu0 %v569
        %v730 = vpop.f32.mrf.mxu0
        %v731 = vadd.f32 %v435, %v730
        %v732 = vpop.f32.mrf.mxu0
        %v733 = vadd.f32 %v435, %v732
        %734 = vmatmul.bf16.gmra.mxu0 %v570
        %v735 = vpop.f32.mrf.mxu0
        %v736 = vadd.f32 %v435, %v735
        %v737 = vpop.f32.mrf.mxu0
        %v738 = vadd.f32 %v435, %v737
        %739 = vmatmul.bf16.gmra.mxu0 %v571
        %v740 = vpop.f32.mrf.mxu0
        %v741 = vadd.f32 %v435, %v740
        %v742 = vpop.f32.mrf.mxu0
        %v743 = vadd.f32 %v435, %v742
        %744 = vmatmul.bf16.gmra.mxu0 %v572
        %v745 = vpop.f32.mrf.mxu0
        %v746 = vadd.f32 %v435, %v745
        %v747 = vpop.f32.mrf.mxu0
        %v748 = vadd.f32 %v435, %v747
        %749 = vmatmul.bf16.gmra.mxu0 %v573
        %v750 = vpop.f32.mrf.mxu0
        %v751 = vadd.f32 %v435, %v750
        %v752 = vpop.f32.mrf.mxu0
        %v753 = vadd.f32 %v435, %v752
        %754 = vmatmul.bf16.gmra.mxu0 %v574
        %v755 = vpop.f32.mrf.mxu0
        %v756 = vadd.f32 %v435, %v755
        %v757 = vpop.f32.mrf.mxu0
        %v758 = vadd.f32 %v435, %v757
        %759 = vmatmul.bf16.gmra.mxu0 %v575
        %v760 = vpop.f32.mrf.mxu0
        %v761 = vadd.f32 %v435, %v760
        %v762 = vpop.f32.mrf.mxu0
        %v763 = vadd.f32 %v435, %v762
        %764 = vmatmul.bf16.gmra.mxu0 %v576
        %v765 = vpop.f32.mrf.mxu0
        %v766 = vadd.f32 %v435, %v765
        %v767 = vpop.f32.mrf.mxu0
        %v768 = vadd.f32 %v435, %v767
        %769 = vmatmul.bf16.gmra.mxu0 %v577
        %v770 = vpop.f32.mrf.mxu0
        %v771 = vadd.f32 %v435, %v770
        %v772 = vpop.f32.mrf.mxu0
        %v773 = vadd.f32 %v435, %v772
        %774 = vmatmul.bf16.gmra.mxu0 %v578
        %v775 = vpop.f32.mrf.mxu0
        %v776 = vadd.f32 %v435, %v775
        %v777 = vpop.f32.mrf.mxu0
        %v778 = vadd.f32 %v435, %v777
        %779 = vmatmul.bf16.gmra.mxu0 %v579
        %v780 = vpop.f32.mrf.mxu0
        %v781 = vadd.f32 %v435, %v780
        %v782 = vpop.f32.mrf.mxu0
        %v783 = vadd.f32 %v435, %v782
        %784 = vmatmul.bf16.gmra.mxu0 %v580
        %v785 = vpop.f32.mrf.mxu0
        %v786 = vadd.f32 %v435, %v785
        %v787 = vpop.f32.mrf.mxu0
        %v788 = vadd.f32 %v435, %v787
        %789 = vmatmul.bf16.gmra.mxu0 %v581
        %v790 = vpop.f32.mrf.mxu0
        %v791 = vadd.f32 %v435, %v790
        %v792 = vpop.f32.mrf.mxu0
        %v793 = vadd.f32 %v435, %v792
        %794 = vmatmul.bf16.gmra.mxu0 %v582
        %v795 = vpop.f32.mrf.mxu0
        %v796 = vadd.f32 %v435, %v795
        %v797 = vpop.f32.mrf.mxu0
        %v798 = vadd.f32 %v435, %v797
        %799 = vmatmul.bf16.gmra.mxu0 %v583
        %v800 = vpop.f32.mrf.mxu0
        %v801 = vadd.f32 %v435, %v800
        %v802 = vpop.f32.mrf.mxu0
        %v803 = vadd.f32 %v435, %v802
        %804 = vmatmul.bf16.gmra.mxu0 %v584
        %v805 = vpop.f32.mrf.mxu0
        %v806 = vadd.f32 %v435, %v805
        %v807 = vpop.f32.mrf.mxu0
        %v808 = vadd.f32 %v435, %v807
        %809 = vmatmul.bf16.gmra.mxu0 %v585
        %v810 = vpop.f32.mrf.mxu0
        %v811 = vadd.f32 %v435, %v810
        %v812 = vpop.f32.mrf.mxu0
        %v813 = vadd.f32 %v435, %v812
        %814 = vmatmul.bf16.gmra.mxu0 %v586
        %v815 = vpop.f32.mrf.mxu0
        %v816 = vadd.f32 %v435, %v815
        %v817 = vpop.f32.mrf.mxu0
        %v818 = vadd.f32 %v435, %v817
        %819 = vmatmul.bf16.gmra.mxu0 %v587
        %v820 = vpop.f32.mrf.mxu0
        %v821 = vadd.f32 %v435, %v820
        %v822 = vpop.f32.mrf.mxu0
        %v823 = vadd.f32 %v435, %v822
        %824 = vmatmul.bf16.gmra.mxu0 %v588
        %v825 = vpop.f32.mrf.mxu0
        %v826 = vadd.f32 %v435, %v825
        %v827 = vpop.f32.mrf.mxu0
        %v828 = vadd.f32 %v435, %v827
        %829 = vmatmul.bf16.gmra.mxu0 %v589
        %v830 = vpop.f32.mrf.mxu0
        %v831 = vadd.f32 %v435, %v830
        %v832 = vpop.f32.mrf.mxu0
        %v833 = vadd.f32 %v435, %v832
        %834 = vmatmul.bf16.gmra.mxu0 %v590
        %v835 = vpop.f32.mrf.mxu0
        %v836 = vadd.f32 %v435, %v835
        %v837 = vpop.f32.mrf.mxu0
        %v838 = vadd.f32 %v435, %v837
        %839 = vmatmul.bf16.gmra.mxu0 %v591
        %v840 = vpop.f32.mrf.mxu0
        %v841 = vadd.f32 %v435, %v840
        %v842 = vpop.f32.mrf.mxu0
        %v843 = vadd.f32 %v435, %v842
        %844 = vmatmul.bf16.gmra.mxu0 %v592
        %v845 = vpop.f32.mrf.mxu0
        %v846 = vadd.f32 %v435, %v845
        %v847 = vpop.f32.mrf.mxu0
        %v848 = vadd.f32 %v435, %v847
        %849 = vmatmul.bf16.gmra.mxu0 %v593
        %v850 = vpop.f32.mrf.mxu0
        %v851 = vadd.f32 %v435, %v850
        %v852 = vpop.f32.mrf.mxu0
        %v853 = vadd.f32 %v435, %v852
        %854 = vmatmul.bf16.gmra.mxu0 %v594
        %v855 = vpop.f32.mrf.mxu0
        %v856 = vadd.f32 %v435, %v855
        %v857 = vpop.f32.mrf.mxu0
        %v858 = vadd.f32 %v435, %v857
        %859 = vmatmul.bf16.gmra.mxu0 %v595
        %v860 = vpop.f32.mrf.mxu0
        %v861 = vadd.f32 %v435, %v860
        %v862 = vpop.f32.mrf.mxu0
        %v863 = vadd.f32 %v435, %v862
        %864 = vmatmul.bf16.gmra.mxu0 %v596
        %v865 = vpop.f32.mrf.mxu0
        %v866 = vadd.f32 %v435, %v865
        %v867 = vpop.f32.mrf.mxu0
        %v868 = vadd.f32 %v435, %v867
        %869 = vmatmul.bf16.gmra.mxu0 %v597
        %v870 = vpop.f32.mrf.mxu0
        %v871 = vadd.f32 %v435, %v870
        %v872 = vpop.f32.mrf.mxu0
        %v873 = vadd.f32 %v435, %v872
        %874 = vmatmul.bf16.gmra.mxu0 %v598
        %v875 = vpop.f32.mrf.mxu0
        %v876 = vadd.f32 %v435, %v875
        %v877 = vpop.f32.mrf.mxu0
        %v878 = vadd.f32 %v435, %v877
        %879 = vdwg.mxu0
        %880 = vmatpush.bf16.msra.mxu0 %v694
        %881 = vmatpush.bf16.msra.mxu0 %v692
        %882 = vmatpush.bf16.msra.mxu0 %v690
        %883 = vmatpush.bf16.msra.mxu0 %v688
        %884 = vmatpush.bf16.msra.mxu0 %v686
        %885 = vmatpush.bf16.msra.mxu0 %v684
        %886 = vmatpush.bf16.msra.mxu0 %v682
        %887 = vmatpush.bf16.msra.mxu0 %v680
        %888 = vmatmul.bf16.gmra.mxu0 %v567
        %v889 = vpop.f32.mrf.mxu0
        %v890 = vadd.f32 %v436, %v889
        %v891 = vpop.f32.mrf.mxu0
        %v892 = vadd.f32 %v436, %v891
        %893 = vmatmul.bf16.gmra.mxu0 %v568
        %v894 = vpop.f32.mrf.mxu0
        %v895 = vadd.f32 %v436, %v894
        %v896 = vpop.f32.mrf.mxu0
        %v897 = vadd.f32 %v436, %v896
        %898 = vmatmul.bf16.gmra.mxu0 %v569
        %v899 = vpop.f32.mrf.mxu0
        %v900 = vadd.f32 %v436, %v899
        %v901 = vpop.f32.mrf.mxu0
        %v902 = vadd.f32 %v436, %v901
        %903 = vmatmul.bf16.gmra.mxu0 %v570
        %v904 = vpop.f32.mrf.mxu0
        %v905 = vadd.f32 %v436, %v904
        %v906 = vpop.f32.mrf.mxu0
        %v907 = vadd.f32 %v436, %v906
        %908 = vmatmul.bf16.gmra.mxu0 %v571
        %v909 = vpop.f32.mrf.mxu0
        %v910 = vadd.f32 %v436, %v909
        %v911 = vpop.f32.mrf.mxu0
        %v912 = vadd.f32 %v436, %v911
        %913 = vmatmul.bf16.gmra.mxu0 %v572
        %v914 = vpop.f32.mrf.mxu0
        %v915 = vadd.f32 %v436, %v914
        %v916 = vpop.f32.mrf.mxu0
        %v917 = vadd.f32 %v436, %v916
        %918 = vmatmul.bf16.gmra.mxu0 %v573
        %v919 = vpop.f32.mrf.mxu0
        %v920 = vadd.f32 %v436, %v919
        %v921 = vpop.f32.mrf.mxu0
        %v922 = vadd.f32 %v436, %v921
        %923 = vmatmul.bf16.gmra.mxu0 %v574
        %v924 = vpop.f32.mrf.mxu0
        %v925 = vadd.f32 %v436, %v924
        %v926 = vpop.f32.mrf.mxu0
        %v927 = vadd.f32 %v436, %v926
        %928 = vmatmul.bf16.gmra.mxu0 %v575
        %v929 = vpop.f32.mrf.mxu0
        %v930 = vadd.f32 %v436, %v929
        %v931 = vpop.f32.mrf.mxu0
        %v932 = vadd.f32 %v436, %v931
        %933 = vmatmul.bf16.gmra.mxu0 %v576
        %v934 = vpop.f32.mrf.mxu0
        %v935 = vadd.f32 %v436, %v934
        %v936 = vpop.f32.mrf.mxu0
        %v937 = vadd.f32 %v436, %v936
        %938 = vmatmul.bf16.gmra.mxu0 %v577
        %v939 = vpop.f32.mrf.mxu0
        %v940 = vadd.f32 %v436, %v939
        %v941 = vpop.f32.mrf.mxu0
        %v942 = vadd.f32 %v436, %v941
        %943 = vmatmul.bf16.gmra.mxu0 %v578
        %v944 = vpop.f32.mrf.mxu0
        %v945 = vadd.f32 %v436, %v944
        %v946 = vpop.f32.mrf.mxu0
        %v947 = vadd.f32 %v436, %v946
        %948 = vmatmul.bf16.gmra.mxu0 %v579
        %v949 = vpop.f32.mrf.mxu0
        %v950 = vadd.f32 %v436, %v949
        %v951 = vpop.f32.mrf.mxu0
        %v952 = vadd.f32 %v436, %v951
        %953 = vmatmul.bf16.gmra.mxu0 %v580
        %v954 = vpop.f32.mrf.mxu0
        %v955 = vadd.f32 %v436, %v954
        %v956 = vpop.f32.mrf.mxu0
        %v957 = vadd.f32 %v436, %v956
        %958 = vmatmul.bf16.gmra.mxu0 %v581
        %v959 = vpop.f32.mrf.mxu0
        %v960 = vadd.f32 %v436, %v959
        %v961 = vpop.f32.mrf.mxu0
        %v962 = vadd.f32 %v436, %v961
        %963 = vmatmul.bf16.gmra.mxu0 %v582
        %v964 = vpop.f32.mrf.mxu0
        %v965 = vadd.f32 %v436, %v964
        %v966 = vpop.f32.mrf.mxu0
        %v967 = vadd.f32 %v436, %v966
        %968 = vmatmul.bf16.gmra.mxu0 %v583
        %v969 = vpop.f32.mrf.mxu0
        %v970 = vadd.f32 %v436, %v969
        %v971 = vpop.f32.mrf.mxu0
        %v972 = vadd.f32 %v436, %v971
        %973 = vmatmul.bf16.gmra.mxu0 %v584
        %v974 = vpop.f32.mrf.mxu0
        %v975 = vadd.f32 %v436, %v974
        %v976 = vpop.f32.mrf.mxu0
        %v977 = vadd.f32 %v436, %v976
        %978 = vmatmul.bf16.gmra.mxu0 %v585
        %v979 = vpop.f32.mrf.mxu0
        %v980 = vadd.f32 %v436, %v979
        %v981 = vpop.f32.mrf.mxu0
        %v982 = vadd.f32 %v436, %v981
        %983 = vmatmul.bf16.gmra.mxu0 %v586
        %v984 = vpop.f32.mrf.mxu0
        %v985 = vadd.f32 %v436, %v984
        %v986 = vpop.f32.mrf.mxu0
        %v987 = vadd.f32 %v436, %v986
        %988 = vmatmul.bf16.gmra.mxu0 %v587
        %v989 = vpop.f32.mrf.mxu0
        %v990 = vadd.f32 %v436, %v989
        %v991 = vpop.f32.mrf.mxu0
        %v992 = vadd.f32 %v436, %v991
        %993 = vmatmul.bf16.gmra.mxu0 %v588
        %v994 = vpop.f32.mrf.mxu0
        %v995 = vadd.f32 %v436, %v994
        %v996 = vpop.f32.mrf.mxu0
        %v997 = vadd.f32 %v436, %v996
        %998 = vmatmul.bf16.gmra.mxu0 %v589
        %v999 = vpop.f32.mrf.mxu0
        %v1000 = vadd.f32 %v436, %v999
        %v1001 = vpop.f32.mrf.mxu0
        %v1002 = vadd.f32 %v436, %v1001
        %1003 = vmatmul.bf16.gmra.mxu0 %v590
        %v1004 = vpop.f32.mrf.mxu0
        %v1005 = vadd.f32 %v436, %v1004
        %v1006 = vpop.f32.mrf.mxu0
        %v1007 = vadd.f32 %v436, %v1006
        %1008 = vmatmul.bf16.gmra.mxu0 %v591
        %v1009 = vpop.f32.mrf.mxu0
        %v1010 = vadd.f32 %v436, %v1009
        %v1011 = vpop.f32.mrf.mxu0
        %v1012 = vadd.f32 %v436, %v1011
        %1013 = vmatmul.bf16.gmra.mxu0 %v592
        %v1014 = vpop.f32.mrf.mxu0
        %v1015 = vadd.f32 %v436, %v1014
        %v1016 = vpop.f32.mrf.mxu0
        %v1017 = vadd.f32 %v436, %v1016
        %1018 = vmatmul.bf16.gmra.mxu0 %v593
        %v1019 = vpop.f32.mrf.mxu0
        %v1020 = vadd.f32 %v436, %v1019
        %v1021 = vpop.f32.mrf.mxu0
        %v1022 = vadd.f32 %v436, %v1021
        %1023 = vmatmul.bf16.gmra.mxu0 %v594
        %v1024 = vpop.f32.mrf.mxu0
        %v1025 = vadd.f32 %v436, %v1024
        %v1026 = vpop.f32.mrf.mxu0
        %v1027 = vadd.f32 %v436, %v1026
        %1028 = vmatmul.bf16.gmra.mxu0 %v595
        %v1029 = vpop.f32.mrf.mxu0
        %v1030 = vadd.f32 %v436, %v1029
        %v1031 = vpop.f32.mrf.mxu0
        %v1032 = vadd.f32 %v436, %v1031
        %1033 = vmatmul.bf16.gmra.mxu0 %v596
        %v1034 = vpop.f32.mrf.mxu0
        %v1035 = vadd.f32 %v436, %v1034
        %v1036 = vpop.f32.mrf.mxu0
        %v1037 = vadd.f32 %v436, %v1036
        %1038 = vmatmul.bf16.gmra.mxu0 %v597
        %v1039 = vpop.f32.mrf.mxu0
        %v1040 = vadd.f32 %v436, %v1039
        %v1041 = vpop.f32.mrf.mxu0
        %v1042 = vadd.f32 %v436, %v1041
        %1043 = vmatmul.bf16.gmra.mxu0 %v598
        %v1044 = vpop.f32.mrf.mxu0
        %v1045 = vadd.f32 %v436, %v1044
        %v1046 = vpop.f32.mrf.mxu0
        %v1047 = vadd.f32 %v436, %v1046
        %1048 = vdwg.mxu0
        %v1049 = vmax.f32 %v721, 0.0
        %v1050 = vmax.f32 %v890, 0.0
        %v1051 = vmax.f32 %v723, 0.0
        %v1052 = vmax.f32 %v892, 0.0
        %v1053 = vmax.f32 %v726, 0.0
        %v1054 = vmax.f32 %v895, 0.0
        %v1055 = vmax.f32 %v728, 0.0
        %v1056 = vmax.f32 %v897, 0.0
        %v1057 = vmax.f32 %v731, 0.0
        %v1058 = vmax.f32 %v900, 0.0
        %v1059 = vmax.f32 %v733, 0.0
        %v1060 = vmax.f32 %v902, 0.0
        %v1061 = vmax.f32 %v736, 0.0
        %v1062 = vmax.f32 %v905, 0.0
        %v1063 = vmax.f32 %v738, 0.0
        %v1064 = vmax.f32 %v907, 0.0
        %v1065 = vmax.f32 %v741, 0.0
        %v1066 = vmax.f32 %v910, 0.0
        %v1067 = vmax.f32 %v743, 0.0
        %v1068 = vmax.f32 %v912, 0.0
        %v1069 = vmax.f32 %v746, 0.0
        %v1070 = vmax.f32 %v915, 0.0
        %v1071 = vmax.f32 %v748, 0.0
        %v1072 = vmax.f32 %v917, 0.0
        %v1073 = vmax.f32 %v751, 0.0
        %v1074 = vmax.f32 %v920, 0.0
        %v1075 = vmax.f32 %v753, 0.0
        %v1076 = vmax.f32 %v922, 0.0
        %v1077 = vmax.f32 %v756, 0.0
        %v1078 = vmax.f32 %v925, 0.0
        %v1079 = vmax.f32 %v758, 0.0
        %v1080 = vmax.f32 %v927, 0.0
        %v1081 = vmax.f32 %v761, 0.0
        %v1082 = vmax.f32 %v930, 0.0
        %v1083 = vmax.f32 %v763, 0.0
        %v1084 = vmax.f32 %v932, 0.0
        %v1085 = vmax.f32 %v766, 0.0
        %v1086 = vmax.f32 %v935, 0.0
        %v1087 = vmax.f32 %v768, 0.0
        %v1088 = vmax.f32 %v937, 0.0
        %v1089 = vmax.f32 %v771, 0.0
        %v1090 = vmax.f32 %v940, 0.0
        %v1091 = vmax.f32 %v773, 0.0
        %v1092 = vmax.f32 %v942, 0.0
        %v1093 = vmax.f32 %v776, 0.0
        %v1094 = vmax.f32 %v945, 0.0
        %v1095 = vmax.f32 %v778, 0.0
        %v1096 = vmax.f32 %v947, 0.0
        %v1097 = vmax.f32 %v781, 0.0
        %v1098 = vmax.f32 %v950, 0.0
        %v1099 = vmax.f32 %v783, 0.0
        %v1100 = vmax.f32 %v952, 0.0
        %v1101 = vmax.f32 %v786, 0.0
        %v1102 = vmax.f32 %v955, 0.0
        %v1103 = vmax.f32 %v788, 0.0
        %v1104 = vmax.f32 %v957, 0.0
        %v1105 = vmax.f32 %v791, 0.0
        %v1106 = vmax.f32 %v960, 0.0
        %v1107 = vmax.f32 %v793, 0.0
        %v1108 = vmax.f32 %v962, 0.0
        %v1109 = vmax.f32 %v796, 0.0
        %v1110 = vmax.f32 %v965, 0.0
        %v1111 = vmax.f32 %v798, 0.0
        %v1112 = vmax.f32 %v967, 0.0
        %v1113 = vmax.f32 %v801, 0.0
        %v1114 = vmax.f32 %v970, 0.0
        %v1115 = vmax.f32 %v803, 0.0
        %v1116 = vmax.f32 %v972, 0.0
        %v1117 = vmax.f32 %v806, 0.0
        %v1118 = vmax.f32 %v975, 0.0
        %v1119 = vmax.f32 %v808, 0.0
        %v1120 = vmax.f32 %v977, 0.0
        %v1121 = vmax.f32 %v811, 0.0
        %v1122 = vmax.f32 %v980, 0.0
        %v1123 = vmax.f32 %v813, 0.0
        %v1124 = vmax.f32 %v982, 0.0
        %v1125 = vmax.f32 %v816, 0.0
        %v1126 = vmax.f32 %v985, 0.0
        %v1127 = vmax.f32 %v818, 0.0
        %v1128 = vmax.f32 %v987, 0.0
        %v1129 = vmax.f32 %v821, 0.0
        %v1130 = vmax.f32 %v990, 0.0
        %v1131 = vmax.f32 %v823, 0.0
        %v1132 = vmax.f32 %v992, 0.0
        %v1133 = vmax.f32 %v826, 0.0
        %v1134 = vmax.f32 %v995, 0.0
        %v1135 = vmax.f32 %v828, 0.0
        %v1136 = vmax.f32 %v997, 0.0
        %v1137 = vmax.f32 %v831, 0.0
        %v1138 = vmax.f32 %v1000, 0.0
        %v1139 = vmax.f32 %v833, 0.0
        %v1140 = vmax.f32 %v1002, 0.0
        %v1141 = vmax.f32 %v836, 0.0
        %v1142 = vmax.f32 %v1005, 0.0
        %v1143 = vmax.f32 %v838, 0.0
        %v1144 = vmax.f32 %v1007, 0.0
        %v1145 = vmax.f32 %v841, 0.0
        %v1146 = vmax.f32 %v1010, 0.0
        %v1147 = vmax.f32 %v843, 0.0
        %v1148 = vmax.f32 %v1012, 0.0
        %v1149 = vmax.f32 %v846, 0.0
        %v1150 = vmax.f32 %v1015, 0.0
        %v1151 = vmax.f32 %v848, 0.0
        %v1152 = vmax.f32 %v1017, 0.0
        %v1153 = vmax.f32 %v851, 0.0
        %v1154 = vmax.f32 %v1020, 0.0
        %v1155 = vmax.f32 %v853, 0.0
        %v1156 = vmax.f32 %v1022, 0.0
        %v1157 = vmax.f32 %v856, 0.0
        %v1158 = vmax.f32 %v1025, 0.0
        %v1159 = vmax.f32 %v858, 0.0
        %v1160 = vmax.f32 %v1027, 0.0
        %v1161 = vmax.f32 %v861, 0.0
        %v1162 = vmax.f32 %v1030, 0.0
        %v1163 = vmax.f32 %v863, 0.0
        %v1164 = vmax.f32 %v1032, 0.0
        %v1165 = vmax.f32 %v866, 0.0
        %v1166 = vmax.f32 %v1035, 0.0
        %v1167 = vmax.f32 %v868, 0.0
        %v1168 = vmax.f32 %v1037, 0.0
        %v1169 = vmax.f32 %v871, 0.0
        %v1170 = vmax.f32 %v1040, 0.0
        %v1171 = vmax.f32 %v873, 0.0
        %v1172 = vmax.f32 %v1042, 0.0
        %v1173 = vmax.f32 %v876, 0.0
        %v1174 = vmax.f32 %v1045, 0.0
        %v1175 = vmax.f32 %v878, 0.0
        %v1176 = vmax.f32 %v1047, 0.0
        %v1177 = vpack.c.bf16 %v1051, %v1049
        %v1178 = vpack.c.bf16 %v1052, %v1050
        %v1179 = vpack.c.bf16 %v1055, %v1053
        %v1180 = vpack.c.bf16 %v1056, %v1054
        %v1181 = vpack.c.bf16 %v1059, %v1057
        %v1182 = vpack.c.bf16 %v1060, %v1058
        %v1183 = vpack.c.bf16 %v1063, %v1061
        %v1184 = vpack.c.bf16 %v1064, %v1062
        %v1185 = vpack.c.bf16 %v1067, %v1065
        %v1186 = vpack.c.bf16 %v1068, %v1066
        %v1187 = vpack.c.bf16 %v1071, %v1069
        %v1188 = vpack.c.bf16 %v1072, %v1070
        %v1189 = vpack.c.bf16 %v1075, %v1073
        %v1190 = vpack.c.bf16 %v1076, %v1074
        %v1191 = vpack.c.bf16 %v1079, %v1077
        %v1192 = vpack.c.bf16 %v1080, %v1078
        %v1193 = vpack.c.bf16 %v1083, %v1081
        %v1194 = vpack.c.bf16 %v1084, %v1082
        %v1195 = vpack.c.bf16 %v1087, %v1085
        %v1196 = vpack.c.bf16 %v1088, %v1086
        %v1197 = vpack.c.bf16 %v1091, %v1089
        %v1198 = vpack.c.bf16 %v1092, %v1090
        %v1199 = vpack.c.bf16 %v1095, %v1093
        %v1200 = vpack.c.bf16 %v1096, %v1094
        %v1201 = vpack.c.bf16 %v1099, %v1097
        %v1202 = vpack.c.bf16 %v1100, %v1098
        %v1203 = vpack.c.bf16 %v1103, %v1101
        %v1204 = vpack.c.bf16 %v1104, %v1102
        %v1205 = vpack.c.bf16 %v1107, %v1105
        %v1206 = vpack.c.bf16 %v1108, %v1106
        %v1207 = vpack.c.bf16 %v1111, %v1109
        %v1208 = vpack.c.bf16 %v1112, %v1110
        %v1209 = vpack.c.bf16 %v1115, %v1113
        %v1210 = vpack.c.bf16 %v1116, %v1114
        %v1211 = vpack.c.bf16 %v1119, %v1117
        %v1212 = vpack.c.bf16 %v1120, %v1118
        %v1213 = vpack.c.bf16 %v1123, %v1121
        %v1214 = vpack.c.bf16 %v1124, %v1122
        %v1215 = vpack.c.bf16 %v1127, %v1125
        %v1216 = vpack.c.bf16 %v1128, %v1126
        %v1217 = vpack.c.bf16 %v1131, %v1129
        %v1218 = vpack.c.bf16 %v1132, %v1130
        %v1219 = vpack.c.bf16 %v1135, %v1133
        %v1220 = vpack.c.bf16 %v1136, %v1134
        %v1221 = vpack.c.bf16 %v1139, %v1137
        %v1222 = vpack.c.bf16 %v1140, %v1138
        %v1223 = vpack.c.bf16 %v1143, %v1141
        %v1224 = vpack.c.bf16 %v1144, %v1142
        %v1225 = vpack.c.bf16 %v1147, %v1145
        %v1226 = vpack.c.bf16 %v1148, %v1146
        %v1227 = vpack.c.bf16 %v1151, %v1149
        %v1228 = vpack.c.bf16 %v1152, %v1150
        %v1229 = vpack.c.bf16 %v1155, %v1153
        %v1230 = vpack.c.bf16 %v1156, %v1154
        %v1231 = vpack.c.bf16 %v1159, %v1157
        %v1232 = vpack.c.bf16 %v1160, %v1158
        %v1233 = vpack.c.bf16 %v1163, %v1161
        %v1234 = vpack.c.bf16 %v1164, %v1162
        %v1235 = vpack.c.bf16 %v1167, %v1165
        %v1236 = vpack.c.bf16 %v1168, %v1166
        %v1237 = vpack.c.bf16 %v1171, %v1169
        %v1238 = vpack.c.bf16 %v1172, %v1170
        %v1239 = vpack.c.bf16 %v1175, %v1173
        %v1240 = vpack.c.bf16 %v1176, %v1174
        %v1241 = vld [vmem:[#allocation4] sm:$0xff]
        %v1242 = vld [vmem:[#allocation4 + $0x8] sm:$0xff]
        %v1243 = vld [vmem:[#allocation4 + $0x10] sm:$0xff]
        %v1244 = vld [vmem:[#allocation4 + $0x18] sm:$0xff]
        %v1245 = vld [vmem:[#allocation4 + $0x20] sm:$0xff]
        %v1246 = vld [vmem:[#allocation4 + $0x28] sm:$0xff]
        %v1247 = vld [vmem:[#allocation4 + $0x30] sm:$0xff]
        %v1248 = vld [vmem:[#allocation4 + $0x38] sm:$0xff]
        %v1249 = vld [vmem:[#allocation4 + $0x40] sm:$0xff]
        %v1250 = vld [vmem:[#allocation4 + $0x48] sm:$0xff]
        %v1251 = vld [vmem:[#allocation4 + $0x50] sm:$0xff]
        %v1252 = vld [vmem:[#allocation4 + $0x58] sm:$0xff]
        %v1253 = vld [vmem:[#allocation4 + $0x60] sm:$0xff]
        %v1254 = vld [vmem:[#allocation4 + $0x68] sm:$0xff]
        %v1255 = vld [vmem:[#allocation4 + $0x70] sm:$0xff]
        %v1256 = vld [vmem:[#allocation4 + $0x78] sm:$0xff]
        %v1257 = vld [vmem:[#allocation4 + $0x80] sm:$0xff]
        %v1258 = vld [vmem:[#allocation4 + $0x88] sm:$0xff]
        %v1259 = vld [vmem:[#allocation4 + $0x90] sm:$0xff]
        %v1260 = vld [vmem:[#allocation4 + $0x98] sm:$0xff]
        %v1261 = vld [vmem:[#allocation4 + $0xa0] sm:$0xff]
        %v1262 = vld [vmem:[#allocation4 + $0xa8] sm:$0xff]
        %v1263 = vld [vmem:[#allocation4 + $0xb0] sm:$0xff]
        %v1264 = vld [vmem:[#allocation4 + $0xb8] sm:$0xff]
        %v1265 = vld [vmem:[#allocation4 + $0xc0] sm:$0xff]
        %v1266 = vld [vmem:[#allocation4 + $0xc8] sm:$0xff]
        %v1267 = vld [vmem:[#allocation4 + $0xd0] sm:$0xff]
        %v1268 = vld [vmem:[#allocation4 + $0xd8] sm:$0xff]
        %v1269 = vld [vmem:[#allocation4 + $0xe0] sm:$0xff]
        %v1270 = vld [vmem:[#allocation4 + $0xe8] sm:$0xff]
        %v1271 = vld [vmem:[#allocation4 + $0xf0] sm:$0xff]
        %v1272 = vld [vmem:[#allocation4 + $0xf8] sm:$0xff]
        %s1273 = scalar_lea.vmem %s6, 1
        %v1274 = vld [vmem:[%s1273] ss:$8 sm:$0x3]
        %v1276 = vperm.slane %v1274, 0
        %v1277 = vperm.slane %v1274, 1
        %v1312 = vunpack.c.l.b16 %v1241
        %v1313 = vunpack.c.h.b16 %v1241
        %v1314 = vunpack.c.l.b16 %v1242
        %v1315 = vunpack.c.h.b16 %v1242
        %v1316 = vunpack.c.l.b16 %v1243
        %v1317 = vunpack.c.h.b16 %v1243
        %v1318 = vunpack.c.l.b16 %v1244
        %v1319 = vunpack.c.h.b16 %v1244
        %v1320 = vunpack.c.l.b16 %v1245
        %v1321 = vunpack.c.h.b16 %v1245
        %v1322 = vunpack.c.l.b16 %v1246
        %v1323 = vunpack.c.h.b16 %v1246
        %v1324 = vunpack.c.l.b16 %v1247
        %v1325 = vunpack.c.h.b16 %v1247
        %v1326 = vunpack.c.l.b16 %v1248
        %v1327 = vunpack.c.h.b16 %v1248
        %v1328 = vunpack.c.l.b16 %v1249
        %v1329 = vunpack.c.h.b16 %v1249
        %v1330 = vunpack.c.l.b16 %v1250
        %v1331 = vunpack.c.h.b16 %v1250
        %v1332 = vunpack.c.l.b16 %v1251
        %v1333 = vunpack.c.h.b16 %v1251
        %v1334 = vunpack.c.l.b16 %v1252
        %v1335 = vunpack.c.h.b16 %v1252
        %v1336 = vunpack.c.l.b16 %v1253
        %v1337 = vunpack.c.h.b16 %v1253
        %v1338 = vunpack.c.l.b16 %v1254
        %v1339 = vunpack.c.h.b16 %v1254
        %v1340 = vunpack.c.l.b16 %v1255
        %v1341 = vunpack.c.h.b16 %v1255
        %v1342 = vunpack.c.l.b16 %v1256
        %v1343 = vunpack.c.h.b16 %v1256
        %v1344 = vunpack.c.l.b16 %v1257
        %v1345 = vunpack.c.h.b16 %v1257
        %v1346 = vunpack.c.l.b16 %v1258
        %v1347 = vunpack.c.h.b16 %v1258
        %v1348 = vunpack.c.l.b16 %v1259
        %v1349 = vunpack.c.h.b16 %v1259
        %v1350 = vunpack.c.l.b16 %v1260
        %v1351 = vunpack.c.h.b16 %v1260
        %v1352 = vunpack.c.l.b16 %v1261
        %v1353 = vunpack.c.h.b16 %v1261
        %v1354 = vunpack.c.l.b16 %v1262
        %v1355 = vunpack.c.h.b16 %v1262
        %v1356 = vunpack.c.l.b16 %v1263
        %v1357 = vunpack.c.h.b16 %v1263
        %v1358 = vunpack.c.l.b16 %v1264
        %v1359 = vunpack.c.h.b16 %v1264
        %v1360 = vunpack.c.l.b16 %v1265
        %v1361 = vunpack.c.h.b16 %v1265
        %v1362 = vunpack.c.l.b16 %v1266
        %v1363 = vunpack.c.h.b16 %v1266
        %v1364 = vunpack.c.l.b16 %v1267
        %v1365 = vunpack.c.h.b16 %v1267
        %v1366 = vunpack.c.l.b16 %v1268
        %v1367 = vunpack.c.h.b16 %v1268
        %v1368 = vunpack.c.l.b16 %v1269
        %v1369 = vunpack.c.h.b16 %v1269
        %v1370 = vunpack.c.l.b16 %v1270
        %v1371 = vunpack.c.h.b16 %v1270
        %v1372 = vunpack.c.l.b16 %v1271
        %v1373 = vunpack.c.h.b16 %v1271
        %v1374 = vunpack.c.l.b16 %v1272
        %v1375 = vunpack.c.h.b16 %v1272
        %v1376 = vpack.c.b16 %v1314, %v1312
        %v1377 = vpack.c.b16 %v1315, %v1313
        %v1378 = vpack.c.b16 %v1318, %v1316
        %v1379 = vpack.c.b16 %v1319, %v1317
        %v1380 = vpack.c.b16 %v1322, %v1320
        %v1381 = vpack.c.b16 %v1323, %v1321
        %v1382 = vpack.c.b16 %v1326, %v1324
        %v1383 = vpack.c.b16 %v1327, %v1325
        %v1384 = vpack.c.b16 %v1330, %v1328
        %v1385 = vpack.c.b16 %v1331, %v1329
        %v1386 = vpack.c.b16 %v1334, %v1332
        %v1387 = vpack.c.b16 %v1335, %v1333
        %v1388 = vpack.c.b16 %v1338, %v1336
        %v1389 = vpack.c.b16 %v1339, %v1337
        %v1390 = vpack.c.b16 %v1342, %v1340
        %v1391 = vpack.c.b16 %v1343, %v1341
        %v1392 = vpack.c.b16 %v1346, %v1344
        %v1393 = vpack.c.b16 %v1347, %v1345
        %v1394 = vpack.c.b16 %v1350, %v1348
        %v1395 = vpack.c.b16 %v1351, %v1349
        %v1396 = vpack.c.b16 %v1354, %v1352
        %v1397 = vpack.c.b16 %v1355, %v1353
        %v1398 = vpack.c.b16 %v1358, %v1356
        %v1399 = vpack.c.b16 %v1359, %v1357
        %v1400 = vpack.c.b16 %v1362, %v1360
        %v1401 = vpack.c.b16 %v1363, %v1361
        %v1402 = vpack.c.b16 %v1366, %v1364
        %v1403 = vpack.c.b16 %v1367, %v1365
        %v1404 = vpack.c.b16 %v1370, %v1368
        %v1405 = vpack.c.b16 %v1371, %v1369
        %v1406 = vpack.c.b16 %v1374, %v1372
        %v1407 = vpack.c.b16 %v1375, %v1373
        %1440 = vmatpush.bf16.msra.mxu0 %v1390
        %1441 = vmatpush.bf16.msra.mxu0 %v1388
        %1442 = vmatpush.bf16.msra.mxu0 %v1386
        %1443 = vmatpush.bf16.msra.mxu0 %v1384
        %1444 = vmatpush.bf16.msra.mxu0 %v1382
        %1445 = vmatpush.bf16.msra.mxu0 %v1380
        %1446 = vmatpush.bf16.msra.mxu0 %v1378
        %1447 = vmatpush.bf16.msra.mxu0 %v1376
        %1448 = vmatmul.bf16.gmra.mxu0 %v1177
        %v1449 = vpop.f32.mrf.mxu0
        %v1450 = vadd.f32 %v1276, %v1449
        %v1451 = vpop.f32.mrf.mxu0
        %v1452 = vadd.f32 %v1276, %v1451
        %1453 = vmatmul.bf16.gmra.mxu0 %v1179
        %v1454 = vpop.f32.mrf.mxu0
        %v1455 = vadd.f32 %v1276, %v1454
        %v1456 = vpop.f32.mrf.mxu0
        %v1457 = vadd.f32 %v1276, %v1456
        %1458 = vmatmul.bf16.gmra.mxu0 %v1181
        %v1459 = vpop.f32.mrf.mxu0
        %v1460 = vadd.f32 %v1276, %v1459
        %v1461 = vpop.f32.mrf.mxu0
        %v1462 = vadd.f32 %v1276, %v1461
        %1463 = vmatmul.bf16.gmra.mxu0 %v1183
        %v1464 = vpop.f32.mrf.mxu0
        %v1465 = vadd.f32 %v1276, %v1464
        %v1466 = vpop.f32.mrf.mxu0
        %v1467 = vadd.f32 %v1276, %v1466
        %1468 = vmatmul.bf16.gmra.mxu0 %v1185
        %v1469 = vpop.f32.mrf.mxu0
        %v1470 = vadd.f32 %v1276, %v1469
        %v1471 = vpop.f32.mrf.mxu0
        %v1472 = vadd.f32 %v1276, %v1471
        %1473 = vmatmul.bf16.gmra.mxu0 %v1187
        %v1474 = vpop.f32.mrf.mxu0
        %v1475 = vadd.f32 %v1276, %v1474
        %v1476 = vpop.f32.mrf.mxu0
        %v1477 = vadd.f32 %v1276, %v1476
        %1478 = vmatmul.bf16.gmra.mxu0 %v1189
        %v1479 = vpop.f32.mrf.mxu0
        %v1480 = vadd.f32 %v1276, %v1479
        %v1481 = vpop.f32.mrf.mxu0
        %v1482 = vadd.f32 %v1276, %v1481
        %1483 = vmatmul.bf16.gmra.mxu0 %v1191
        %v1484 = vpop.f32.mrf.mxu0
        %v1485 = vadd.f32 %v1276, %v1484
        %v1486 = vpop.f32.mrf.mxu0
        %v1487 = vadd.f32 %v1276, %v1486
        %1488 = vmatmul.bf16.gmra.mxu0 %v1193
        %v1489 = vpop.f32.mrf.mxu0
        %v1490 = vadd.f32 %v1276, %v1489
        %v1491 = vpop.f32.mrf.mxu0
        %v1492 = vadd.f32 %v1276, %v1491
        %1493 = vmatmul.bf16.gmra.mxu0 %v1195
        %v1494 = vpop.f32.mrf.mxu0
        %v1495 = vadd.f32 %v1276, %v1494
        %v1496 = vpop.f32.mrf.mxu0
        %v1497 = vadd.f32 %v1276, %v1496
        %1498 = vmatmul.bf16.gmra.mxu0 %v1197
        %v1499 = vpop.f32.mrf.mxu0
        %v1500 = vadd.f32 %v1276, %v1499
        %v1501 = vpop.f32.mrf.mxu0
        %v1502 = vadd.f32 %v1276, %v1501
        %1503 = vmatmul.bf16.gmra.mxu0 %v1199
        %v1504 = vpop.f32.mrf.mxu0
        %v1505 = vadd.f32 %v1276, %v1504
        %v1506 = vpop.f32.mrf.mxu0
        %v1507 = vadd.f32 %v1276, %v1506
        %1508 = vmatmul.bf16.gmra.mxu0 %v1201
        %v1509 = vpop.f32.mrf.mxu0
        %v1510 = vadd.f32 %v1276, %v1509
        %v1511 = vpop.f32.mrf.mxu0
        %v1512 = vadd.f32 %v1276, %v1511
        %1513 = vmatmul.bf16.gmra.mxu0 %v1203
        %v1514 = vpop.f32.mrf.mxu0
        %v1515 = vadd.f32 %v1276, %v1514
        %v1516 = vpop.f32.mrf.mxu0
        %v1517 = vadd.f32 %v1276, %v1516
        %1518 = vmatmul.bf16.gmra.mxu0 %v1205
        %v1519 = vpop.f32.mrf.mxu0
        %v1520 = vadd.f32 %v1276, %v1519
        %v1521 = vpop.f32.mrf.mxu0
        %v1522 = vadd.f32 %v1276, %v1521
        %1523 = vmatmul.bf16.gmra.mxu0 %v1207
        %v1524 = vpop.f32.mrf.mxu0
        %v1525 = vadd.f32 %v1276, %v1524
        %v1526 = vpop.f32.mrf.mxu0
        %v1527 = vadd.f32 %v1276, %v1526
        %1528 = vmatmul.bf16.gmra.mxu0 %v1209
        %v1529 = vpop.f32.mrf.mxu0
        %v1530 = vadd.f32 %v1276, %v1529
        %v1531 = vpop.f32.mrf.mxu0
        %v1532 = vadd.f32 %v1276, %v1531
        %1533 = vmatmul.bf16.gmra.mxu0 %v1211
        %v1534 = vpop.f32.mrf.mxu0
        %v1535 = vadd.f32 %v1276, %v1534
        %v1536 = vpop.f32.mrf.mxu0
        %v1537 = vadd.f32 %v1276, %v1536
        %1538 = vmatmul.bf16.gmra.mxu0 %v1213
        %v1539 = vpop.f32.mrf.mxu0
        %v1540 = vadd.f32 %v1276, %v1539
        %v1541 = vpop.f32.mrf.mxu0
        %v1542 = vadd.f32 %v1276, %v1541
        %1543 = vmatmul.bf16.gmra.mxu0 %v1215
        %v1544 = vpop.f32.mrf.mxu0
        %v1545 = vadd.f32 %v1276, %v1544
        %v1546 = vpop.f32.mrf.mxu0
        %v1547 = vadd.f32 %v1276, %v1546
        %1548 = vmatmul.bf16.gmra.mxu0 %v1217
        %v1549 = vpop.f32.mrf.mxu0
        %v1550 = vadd.f32 %v1276, %v1549
        %v1551 = vpop.f32.mrf.mxu0
        %v1552 = vadd.f32 %v1276, %v1551
        %1553 = vmatmul.bf16.gmra.mxu0 %v1219
        %v1554 = vpop.f32.mrf.mxu0
        %v1555 = vadd.f32 %v1276, %v1554
        %v1556 = vpop.f32.mrf.mxu0
        %v1557 = vadd.f32 %v1276, %v1556
        %1558 = vmatmul.bf16.gmra.mxu0 %v1221
        %v1559 = vpop.f32.mrf.mxu0
        %v1560 = vadd.f32 %v1276, %v1559
        %v1561 = vpop.f32.mrf.mxu0
        %v1562 = vadd.f32 %v1276, %v1561
        %1563 = vmatmul.bf16.gmra.mxu0 %v1223
        %v1564 = vpop.f32.mrf.mxu0
        %v1565 = vadd.f32 %v1276, %v1564
        %v1566 = vpop.f32.mrf.mxu0
        %v1567 = vadd.f32 %v1276, %v1566
        %1568 = vmatmul.bf16.gmra.mxu0 %v1225
        %v1569 = vpop.f32.mrf.mxu0
        %v1570 = vadd.f32 %v1276, %v1569
        %v1571 = vpop.f32.mrf.mxu0
        %v1572 = vadd.f32 %v1276, %v1571
        %1573 = vmatmul.bf16.gmra.mxu0 %v1227
        %v1574 = vpop.f32.mrf.mxu0
        %v1575 = vadd.f32 %v1276, %v1574
        %v1576 = vpop.f32.mrf.mxu0
        %v1577 = vadd.f32 %v1276, %v1576
        %1578 = vmatmul.bf16.gmra.mxu0 %v1229
        %v1579 = vpop.f32.mrf.mxu0
        %v1580 = vadd.f32 %v1276, %v1579
        %v1581 = vpop.f32.mrf.mxu0
        %v1582 = vadd.f32 %v1276, %v1581
        %1583 = vmatmul.bf16.gmra.mxu0 %v1231
        %v1584 = vpop.f32.mrf.mxu0
        %v1585 = vadd.f32 %v1276, %v1584
        %v1586 = vpop.f32.mrf.mxu0
        %v1587 = vadd.f32 %v1276, %v1586
        %1588 = vmatmul.bf16.gmra.mxu0 %v1233
        %v1589 = vpop.f32.mrf.mxu0
        %v1590 = vadd.f32 %v1276, %v1589
        %v1591 = vpop.f32.mrf.mxu0
        %v1592 = vadd.f32 %v1276, %v1591
        %1593 = vmatmul.bf16.gmra.mxu0 %v1235
        %v1594 = vpop.f32.mrf.mxu0
        %v1595 = vadd.f32 %v1276, %v1594
        %v1596 = vpop.f32.mrf.mxu0
        %v1597 = vadd.f32 %v1276, %v1596
        %1598 = vmatmul.bf16.gmra.mxu0 %v1237
        %v1599 = vpop.f32.mrf.mxu0
        %v1600 = vadd.f32 %v1276, %v1599
        %v1601 = vpop.f32.mrf.mxu0
        %v1602 = vadd.f32 %v1276, %v1601
        %1603 = vmatmul.bf16.gmra.mxu0 %v1239
        %v1604 = vpop.f32.mrf.mxu0
        %v1605 = vadd.f32 %v1276, %v1604
        %v1606 = vpop.f32.mrf.mxu0
        %v1607 = vadd.f32 %v1276, %v1606
        %1608 = vdwg.mxu0
        %1609 = vmatpush.bf16.msra.mxu0 %v1406
        %1610 = vmatpush.bf16.msra.mxu0 %v1404
        %1611 = vmatpush.bf16.msra.mxu0 %v1402
        %1612 = vmatpush.bf16.msra.mxu0 %v1400
        %1613 = vmatpush.bf16.msra.mxu0 %v1398
        %1614 = vmatpush.bf16.msra.mxu0 %v1396
        %1615 = vmatpush.bf16.msra.mxu0 %v1394
        %1616 = vmatpush.bf16.msra.mxu0 %v1392
        %1617 = vmatmul.bf16.gmra.mxu0 %v1178
        %v1618 = vpop.f32.mrf.mxu0
        %v1619 = vadd.f32 %v1450, %v1618
        %v1620 = vpop.f32.mrf.mxu0
        %v1621 = vadd.f32 %v1452, %v1620
        %1622 = vmatmul.bf16.gmra.mxu0 %v1180
        %v1623 = vpop.f32.mrf.mxu0
        %v1624 = vadd.f32 %v1455, %v1623
        %v1625 = vpop.f32.mrf.mxu0
        %v1626 = vadd.f32 %v1457, %v1625
        %1627 = vmatmul.bf16.gmra.mxu0 %v1182
        %v1628 = vpop.f32.mrf.mxu0
        %v1629 = vadd.f32 %v1460, %v1628
        %v1630 = vpop.f32.mrf.mxu0
        %v1631 = vadd.f32 %v1462, %v1630
        %1632 = vmatmul.bf16.gmra.mxu0 %v1184
        %v1633 = vpop.f32.mrf.mxu0
        %v1634 = vadd.f32 %v1465, %v1633
        %v1635 = vpop.f32.mrf.mxu0
        %v1636 = vadd.f32 %v1467, %v1635
        %1637 = vmatmul.bf16.gmra.mxu0 %v1186
        %v1638 = vpop.f32.mrf.mxu0
        %v1639 = vadd.f32 %v1470, %v1638
        %v1640 = vpop.f32.mrf.mxu0
        %v1641 = vadd.f32 %v1472, %v1640
        %1642 = vmatmul.bf16.gmra.mxu0 %v1188
        %v1643 = vpop.f32.mrf.mxu0
        %v1644 = vadd.f32 %v1475, %v1643
        %v1645 = vpop.f32.mrf.mxu0
        %v1646 = vadd.f32 %v1477, %v1645
        %1647 = vmatmul.bf16.gmra.mxu0 %v1190
        %v1648 = vpop.f32.mrf.mxu0
        %v1649 = vadd.f32 %v1480, %v1648
        %v1650 = vpop.f32.mrf.mxu0
        %v1651 = vadd.f32 %v1482, %v1650
        %1652 = vmatmul.bf16.gmra.mxu0 %v1192
        %v1653 = vpop.f32.mrf.mxu0
        %v1654 = vadd.f32 %v1485, %v1653
        %v1655 = vpop.f32.mrf.mxu0
        %v1656 = vadd.f32 %v1487, %v1655
        %1657 = vmatmul.bf16.gmra.mxu0 %v1194
        %v1658 = vpop.f32.mrf.mxu0
        %v1659 = vadd.f32 %v1490, %v1658
        %v1660 = vpop.f32.mrf.mxu0
        %v1661 = vadd.f32 %v1492, %v1660
        %1662 = vmatmul.bf16.gmra.mxu0 %v1196
        %v1663 = vpop.f32.mrf.mxu0
        %v1664 = vadd.f32 %v1495, %v1663
        %v1665 = vpop.f32.mrf.mxu0
        %v1666 = vadd.f32 %v1497, %v1665
        %1667 = vmatmul.bf16.gmra.mxu0 %v1198
        %v1668 = vpop.f32.mrf.mxu0
        %v1669 = vadd.f32 %v1500, %v1668
        %v1670 = vpop.f32.mrf.mxu0
        %v1671 = vadd.f32 %v1502, %v1670
        %1672 = vmatmul.bf16.gmra.mxu0 %v1200
        %v1673 = vpop.f32.mrf.mxu0
        %v1674 = vadd.f32 %v1505, %v1673
        %v1675 = vpop.f32.mrf.mxu0
        %v1676 = vadd.f32 %v1507, %v1675
        %1677 = vmatmul.bf16.gmra.mxu0 %v1202
        %v1678 = vpop.f32.mrf.mxu0
        %v1679 = vadd.f32 %v1510, %v1678
        %v1680 = vpop.f32.mrf.mxu0
        %v1681 = vadd.f32 %v1512, %v1680
        %1682 = vmatmul.bf16.gmra.mxu0 %v1204
        %v1683 = vpop.f32.mrf.mxu0
        %v1684 = vadd.f32 %v1515, %v1683
        %v1685 = vpop.f32.mrf.mxu0
        %v1686 = vadd.f32 %v1517, %v1685
        %1687 = vmatmul.bf16.gmra.mxu0 %v1206
        %v1688 = vpop.f32.mrf.mxu0
        %v1689 = vadd.f32 %v1520, %v1688
        %v1690 = vpop.f32.mrf.mxu0
        %v1691 = vadd.f32 %v1522, %v1690
        %1692 = vmatmul.bf16.gmra.mxu0 %v1208
        %v1693 = vpop.f32.mrf.mxu0
        %v1694 = vadd.f32 %v1525, %v1693
        %v1695 = vpop.f32.mrf.mxu0
        %v1696 = vadd.f32 %v1527, %v1695
        %1697 = vmatmul.bf16.gmra.mxu0 %v1210
        %v1698 = vpop.f32.mrf.mxu0
        %v1699 = vadd.f32 %v1530, %v1698
        %v1700 = vpop.f32.mrf.mxu0
        %v1701 = vadd.f32 %v1532, %v1700
        %1702 = vmatmul.bf16.gmra.mxu0 %v1212
        %v1703 = vpop.f32.mrf.mxu0
        %v1704 = vadd.f32 %v1535, %v1703
        %v1705 = vpop.f32.mrf.mxu0
        %v1706 = vadd.f32 %v1537, %v1705
        %1707 = vmatmul.bf16.gmra.mxu0 %v1214
        %v1708 = vpop.f32.mrf.mxu0
        %v1709 = vadd.f32 %v1540, %v1708
        %v1710 = vpop.f32.mrf.mxu0
        %v1711 = vadd.f32 %v1542, %v1710
        %1712 = vmatmul.bf16.gmra.mxu0 %v1216
        %v1713 = vpop.f32.mrf.mxu0
        %v1714 = vadd.f32 %v1545, %v1713
        %v1715 = vpop.f32.mrf.mxu0
        %v1716 = vadd.f32 %v1547, %v1715
        %1717 = vmatmul.bf16.gmra.mxu0 %v1218
        %v1718 = vpop.f32.mrf.mxu0
        %v1719 = vadd.f32 %v1550, %v1718
        %v1720 = vpop.f32.mrf.mxu0
        %v1721 = vadd.f32 %v1552, %v1720
        %1722 = vmatmul.bf16.gmra.mxu0 %v1220
        %v1723 = vpop.f32.mrf.mxu0
        %v1724 = vadd.f32 %v1555, %v1723
        %v1725 = vpop.f32.mrf.mxu0
        %v1726 = vadd.f32 %v1557, %v1725
        %1727 = vmatmul.bf16.gmra.mxu0 %v1222
        %v1728 = vpop.f32.mrf.mxu0
        %v1729 = vadd.f32 %v1560, %v1728
        %v1730 = vpop.f32.mrf.mxu0
        %v1731 = vadd.f32 %v1562, %v1730
        %1732 = vmatmul.bf16.gmra.mxu0 %v1224
        %v1733 = vpop.f32.mrf.mxu0
        %v1734 = vadd.f32 %v1565, %v1733
        %v1735 = vpop.f32.mrf.mxu0
        %v1736 = vadd.f32 %v1567, %v1735
        %1737 = vmatmul.bf16.gmra.mxu0 %v1226
        %v1738 = vpop.f32.mrf.mxu0
        %v1739 = vadd.f32 %v1570, %v1738
        %v1740 = vpop.f32.mrf.mxu0
        %v1741 = vadd.f32 %v1572, %v1740
        %1742 = vmatmul.bf16.gmra.mxu0 %v1228
        %v1743 = vpop.f32.mrf.mxu0
        %v1744 = vadd.f32 %v1575, %v1743
        %v1745 = vpop.f32.mrf.mxu0
        %v1746 = vadd.f32 %v1577, %v1745
        %1747 = vmatmul.bf16.gmra.mxu0 %v1230
        %v1748 = vpop.f32.mrf.mxu0
        %v1749 = vadd.f32 %v1580, %v1748
        %v1750 = vpop.f32.mrf.mxu0
        %v1751 = vadd.f32 %v1582, %v1750
        %1752 = vmatmul.bf16.gmra.mxu0 %v1232
        %v1753 = vpop.f32.mrf.mxu0
        %v1754 = vadd.f32 %v1585, %v1753
        %v1755 = vpop.f32.mrf.mxu0
        %v1756 = vadd.f32 %v1587, %v1755
        %1757 = vmatmul.bf16.gmra.mxu0 %v1234
        %v1758 = vpop.f32.mrf.mxu0
        %v1759 = vadd.f32 %v1590, %v1758
        %v1760 = vpop.f32.mrf.mxu0
        %v1761 = vadd.f32 %v1592, %v1760
        %1762 = vmatmul.bf16.gmra.mxu0 %v1236
        %v1763 = vpop.f32.mrf.mxu0
        %v1764 = vadd.f32 %v1595, %v1763
        %v1765 = vpop.f32.mrf.mxu0
        %v1766 = vadd.f32 %v1597, %v1765
        %1767 = vmatmul.bf16.gmra.mxu0 %v1238
        %v1768 = vpop.f32.mrf.mxu0
        %v1769 = vadd.f32 %v1600, %v1768
        %v1770 = vpop.f32.mrf.mxu0
        %v1771 = vadd.f32 %v1602, %v1770
        %1772 = vmatmul.bf16.gmra.mxu0 %v1240
        %v1773 = vpop.f32.mrf.mxu0
        %v1774 = vadd.f32 %v1605, %v1773
        %v1775 = vpop.f32.mrf.mxu0
        %v1776 = vadd.f32 %v1607, %v1775
        %1777 = vdwg.mxu0
        %1778 = vmatpush.bf16.msra.mxu0 %v1391
        %1779 = vmatpush.bf16.msra.mxu0 %v1389
        %1780 = vmatpush.bf16.msra.mxu0 %v1387
        %1781 = vmatpush.bf16.msra.mxu0 %v1385
        %1782 = vmatpush.bf16.msra.mxu0 %v1383
        %1783 = vmatpush.bf16.msra.mxu0 %v1381
        %1784 = vmatpush.bf16.msra.mxu0 %v1379
        %1785 = vmatpush.bf16.msra.mxu0 %v1377
        %1786 = vmatmul.bf16.gmra.mxu0 %v1177
        %v1787 = vpop.f32.mrf.mxu0
        %v1788 = vadd.f32 %v1277, %v1787
        %v1789 = vpop.f32.mrf.mxu0
        %v1790 = vadd.f32 %v1277, %v1789
        %1791 = vmatmul.bf16.gmra.mxu0 %v1179
        %v1792 = vpop.f32.mrf.mxu0
        %v1793 = vadd.f32 %v1277, %v1792
        %v1794 = vpop.f32.mrf.mxu0
        %v1795 = vadd.f32 %v1277, %v1794
        %1796 = vmatmul.bf16.gmra.mxu0 %v1181
        %v1797 = vpop.f32.mrf.mxu0
        %v1798 = vadd.f32 %v1277, %v1797
        %v1799 = vpop.f32.mrf.mxu0
        %v1800 = vadd.f32 %v1277, %v1799
        %1801 = vmatmul.bf16.gmra.mxu0 %v1183
        %v1802 = vpop.f32.mrf.mxu0
        %v1803 = vadd.f32 %v1277, %v1802
        %v1804 = vpop.f32.mrf.mxu0
        %v1805 = vadd.f32 %v1277, %v1804
        %1806 = vmatmul.bf16.gmra.mxu0 %v1185
        %v1807 = vpop.f32.mrf.mxu0
        %v1808 = vadd.f32 %v1277, %v1807
        %v1809 = vpop.f32.mrf.mxu0
        %v1810 = vadd.f32 %v1277, %v1809
        %1811 = vmatmul.bf16.gmra.mxu0 %v1187
        %v1812 = vpop.f32.mrf.mxu0
        %v1813 = vadd.f32 %v1277, %v1812
        %v1814 = vpop.f32.mrf.mxu0
        %v1815 = vadd.f32 %v1277, %v1814
        %1816 = vmatmul.bf16.gmra.mxu0 %v1189
        %v1817 = vpop.f32.mrf.mxu0
        %v1818 = vadd.f32 %v1277, %v1817
        %v1819 = vpop.f32.mrf.mxu0
        %v1820 = vadd.f32 %v1277, %v1819
        %1821 = vmatmul.bf16.gmra.mxu0 %v1191
        %v1822 = vpop.f32.mrf.mxu0
        %v1823 = vadd.f32 %v1277, %v1822
        %v1824 = vpop.f32.mrf.mxu0
        %v1825 = vadd.f32 %v1277, %v1824
        %1826 = vmatmul.bf16.gmra.mxu0 %v1193
        %v1827 = vpop.f32.mrf.mxu0
        %v1828 = vadd.f32 %v1277, %v1827
        %v1829 = vpop.f32.mrf.mxu0
        %v1830 = vadd.f32 %v1277, %v1829
        %1831 = vmatmul.bf16.gmra.mxu0 %v1195
        %v1832 = vpop.f32.mrf.mxu0
        %v1833 = vadd.f32 %v1277, %v1832
        %v1834 = vpop.f32.mrf.mxu0
        %v1835 = vadd.f32 %v1277, %v1834
        %1836 = vmatmul.bf16.gmra.mxu0 %v1197
        %v1837 = vpop.f32.mrf.mxu0
        %v1838 = vadd.f32 %v1277, %v1837
        %v1839 = vpop.f32.mrf.mxu0
        %v1840 = vadd.f32 %v1277, %v1839
        %1841 = vmatmul.bf16.gmra.mxu0 %v1199
        %v1842 = vpop.f32.mrf.mxu0
        %v1843 = vadd.f32 %v1277, %v1842
        %v1844 = vpop.f32.mrf.mxu0
        %v1845 = vadd.f32 %v1277, %v1844
        %1846 = vmatmul.bf16.gmra.mxu0 %v1201
        %v1847 = vpop.f32.mrf.mxu0
        %v1848 = vadd.f32 %v1277, %v1847
        %v1849 = vpop.f32.mrf.mxu0
        %v1850 = vadd.f32 %v1277, %v1849
        %1851 = vmatmul.bf16.gmra.mxu0 %v1203
        %v1852 = vpop.f32.mrf.mxu0
        %v1853 = vadd.f32 %v1277, %v1852
        %v1854 = vpop.f32.mrf.mxu0
        %v1855 = vadd.f32 %v1277, %v1854
        %1856 = vmatmul.bf16.gmra.mxu0 %v1205
        %v1857 = vpop.f32.mrf.mxu0
        %v1858 = vadd.f32 %v1277, %v1857
        %v1859 = vpop.f32.mrf.mxu0
        %v1860 = vadd.f32 %v1277, %v1859
        %1861 = vmatmul.bf16.gmra.mxu0 %v1207
        %v1862 = vpop.f32.mrf.mxu0
        %v1863 = vadd.f32 %v1277, %v1862
        %v1864 = vpop.f32.mrf.mxu0
        %v1865 = vadd.f32 %v1277, %v1864
        %1866 = vmatmul.bf16.gmra.mxu0 %v1209
        %v1867 = vpop.f32.mrf.mxu0
        %v1868 = vadd.f32 %v1277, %v1867
        %v1869 = vpop.f32.mrf.mxu0
        %v1870 = vadd.f32 %v1277, %v1869
        %1871 = vmatmul.bf16.gmra.mxu0 %v1211
        %v1872 = vpop.f32.mrf.mxu0
        %v1873 = vadd.f32 %v1277, %v1872
        %v1874 = vpop.f32.mrf.mxu0
        %v1875 = vadd.f32 %v1277, %v1874
        %1876 = vmatmul.bf16.gmra.mxu0 %v1213
        %v1877 = vpop.f32.mrf.mxu0
        %v1878 = vadd.f32 %v1277, %v1877
        %v1879 = vpop.f32.mrf.mxu0
        %v1880 = vadd.f32 %v1277, %v1879
        %1881 = vmatmul.bf16.gmra.mxu0 %v1215
        %v1882 = vpop.f32.mrf.mxu0
        %v1883 = vadd.f32 %v1277, %v1882
        %v1884 = vpop.f32.mrf.mxu0
        %v1885 = vadd.f32 %v1277, %v1884
        %1886 = vmatmul.bf16.gmra.mxu0 %v1217
        %v1887 = vpop.f32.mrf.mxu0
        %v1888 = vadd.f32 %v1277, %v1887
        %v1889 = vpop.f32.mrf.mxu0
        %v1890 = vadd.f32 %v1277, %v1889
        %1891 = vmatmul.bf16.gmra.mxu0 %v1219
        %v1892 = vpop.f32.mrf.mxu0
        %v1893 = vadd.f32 %v1277, %v1892
        %v1894 = vpop.f32.mrf.mxu0
        %v1895 = vadd.f32 %v1277, %v1894
        %1896 = vmatmul.bf16.gmra.mxu0 %v1221
        %v1897 = vpop.f32.mrf.mxu0
        %v1898 = vadd.f32 %v1277, %v1897
        %v1899 = vpop.f32.mrf.mxu0
        %v1900 = vadd.f32 %v1277, %v1899
        %1901 = vmatmul.bf16.gmra.mxu0 %v1223
        %v1902 = vpop.f32.mrf.mxu0
        %v1903 = vadd.f32 %v1277, %v1902
        %v1904 = vpop.f32.mrf.mxu0
        %v1905 = vadd.f32 %v1277, %v1904
        %1906 = vmatmul.bf16.gmra.mxu0 %v1225
        %v1907 = vpop.f32.mrf.mxu0
        %v1908 = vadd.f32 %v1277, %v1907
        %v1909 = vpop.f32.mrf.mxu0
        %v1910 = vadd.f32 %v1277, %v1909
        %1911 = vmatmul.bf16.gmra.mxu0 %v1227
        %v1912 = vpop.f32.mrf.mxu0
        %v1913 = vadd.f32 %v1277, %v1912
        %v1914 = vpop.f32.mrf.mxu0
        %v1915 = vadd.f32 %v1277, %v1914
        %1916 = vmatmul.bf16.gmra.mxu0 %v1229
        %v1917 = vpop.f32.mrf.mxu0
        %v1918 = vadd.f32 %v1277, %v1917
        %v1919 = vpop.f32.mrf.mxu0
        %v1920 = vadd.f32 %v1277, %v1919
        %1921 = vmatmul.bf16.gmra.mxu0 %v1231
        %v1922 = vpop.f32.mrf.mxu0
        %v1923 = vadd.f32 %v1277, %v1922
        %v1924 = vpop.f32.mrf.mxu0
        %v1925 = vadd.f32 %v1277, %v1924
        %1926 = vmatmul.bf16.gmra.mxu0 %v1233
        %v1927 = vpop.f32.mrf.mxu0
        %v1928 = vadd.f32 %v1277, %v1927
        %v1929 = vpop.f32.mrf.mxu0
        %v1930 = vadd.f32 %v1277, %v1929
        %1931 = vmatmul.bf16.gmra.mxu0 %v1235
        %v1932 = vpop.f32.mrf.mxu0
        %v1933 = vadd.f32 %v1277, %v1932
        %v1934 = vpop.f32.mrf.mxu0
        %v1935 = vadd.f32 %v1277, %v1934
        %1936 = vmatmul.bf16.gmra.mxu0 %v1237
        %v1937 = vpop.f32.mrf.mxu0
        %v1938 = vadd.f32 %v1277, %v1937
        %v1939 = vpop.f32.mrf.mxu0
        %v1940 = vadd.f32 %v1277, %v1939
        %1941 = vmatmul.bf16.gmra.mxu0 %v1239
        %v1942 = vpop.f32.mrf.mxu0
        %v1943 = vadd.f32 %v1277, %v1942
        %v1944 = vpop.f32.mrf.mxu0
        %v1945 = vadd.f32 %v1277, %v1944
        %1946 = vdwg.mxu0
        %1947 = vmatpush.bf16.msra.mxu0 %v1407
        %1948 = vmatpush.bf16.msra.mxu0 %v1405
        %1949 = vmatpush.bf16.msra.mxu0 %v1403
        %1950 = vmatpush.bf16.msra.mxu0 %v1401
        %1951 = vmatpush.bf16.msra.mxu0 %v1399
        %1952 = vmatpush.bf16.msra.mxu0 %v1397
        %1953 = vmatpush.bf16.msra.mxu0 %v1395
        %1954 = vmatpush.bf16.msra.mxu0 %v1393
        %1955 = vmatmul.bf16.gmra.mxu0 %v1178
        %v1956 = vpop.f32.mrf.mxu0
        %v1957 = vadd.f32 %v1788, %v1956
        %v1958 = vpop.f32.mrf.mxu0
        %v1959 = vadd.f32 %v1790, %v1958
        %1960 = vmatmul.bf16.gmra.mxu0 %v1180
        %v1961 = vpop.f32.mrf.mxu0
        %v1962 = vadd.f32 %v1793, %v1961
        %v1963 = vpop.f32.mrf.mxu0
        %v1964 = vadd.f32 %v1795, %v1963
        %1965 = vmatmul.bf16.gmra.mxu0 %v1182
        %v1966 = vpop.f32.mrf.mxu0
        %v1967 = vadd.f32 %v1798, %v1966
        %v1968 = vpop.f32.mrf.mxu0
        %v1969 = vadd.f32 %v1800, %v1968
        %1970 = vmatmul.bf16.gmra.mxu0 %v1184
        %v1971 = vpop.f32.mrf.mxu0
        %v1972 = vadd.f32 %v1803, %v1971
        %v1973 = vpop.f32.mrf.mxu0
        %v1974 = vadd.f32 %v1805, %v1973
        %1975 = vmatmul.bf16.gmra.mxu0 %v1186
        %v1976 = vpop.f32.mrf.mxu0
        %v1977 = vadd.f32 %v1808, %v1976
        %v1978 = vpop.f32.mrf.mxu0
        %v1979 = vadd.f32 %v1810, %v1978
        %1980 = vmatmul.bf16.gmra.mxu0 %v1188
        %v1981 = vpop.f32.mrf.mxu0
        %v1982 = vadd.f32 %v1813, %v1981
        %v1983 = vpop.f32.mrf.mxu0
        %v1984 = vadd.f32 %v1815, %v1983
        %1985 = vmatmul.bf16.gmra.mxu0 %v1190
        %v1986 = vpop.f32.mrf.mxu0
        %v1987 = vadd.f32 %v1818, %v1986
        %v1988 = vpop.f32.mrf.mxu0
        %v1989 = vadd.f32 %v1820, %v1988
        %1990 = vmatmul.bf16.gmra.mxu0 %v1192
        %v1991 = vpop.f32.mrf.mxu0
        %v1992 = vadd.f32 %v1823, %v1991
        %v1993 = vpop.f32.mrf.mxu0
        %v1994 = vadd.f32 %v1825, %v1993
        %1995 = vmatmul.bf16.gmra.mxu0 %v1194
        %v1996 = vpop.f32.mrf.mxu0
        %v1997 = vadd.f32 %v1828, %v1996
        %v1998 = vpop.f32.mrf.mxu0
        %v1999 = vadd.f32 %v1830, %v1998
        %2000 = vmatmul.bf16.gmra.mxu0 %v1196
        %v2001 = vpop.f32.mrf.mxu0
        %v2002 = vadd.f32 %v1833, %v2001
        %v2003 = vpop.f32.mrf.mxu0
        %v2004 = vadd.f32 %v1835, %v2003
        %2005 = vmatmul.bf16.gmra.mxu0 %v1198
        %v2006 = vpop.f32.mrf.mxu0
        %v2007 = vadd.f32 %v1838, %v2006
        %v2008 = vpop.f32.mrf.mxu0
        %v2009 = vadd.f32 %v1840, %v2008
        %2010 = vmatmul.bf16.gmra.mxu0 %v1200
        %v2011 = vpop.f32.mrf.mxu0
        %v2012 = vadd.f32 %v1843, %v2011
        %v2013 = vpop.f32.mrf.mxu0
        %v2014 = vadd.f32 %v1845, %v2013
        %2015 = vmatmul.bf16.gmra.mxu0 %v1202
        %v2016 = vpop.f32.mrf.mxu0
        %v2017 = vadd.f32 %v1848, %v2016
        %v2018 = vpop.f32.mrf.mxu0
        %v2019 = vadd.f32 %v1850, %v2018
        %2020 = vmatmul.bf16.gmra.mxu0 %v1204
        %v2021 = vpop.f32.mrf.mxu0
        %v2022 = vadd.f32 %v1853, %v2021
        %v2023 = vpop.f32.mrf.mxu0
        %v2024 = vadd.f32 %v1855, %v2023
        %2025 = vmatmul.bf16.gmra.mxu0 %v1206
        %v2026 = vpop.f32.mrf.mxu0
        %v2027 = vadd.f32 %v1858, %v2026
        %v2028 = vpop.f32.mrf.mxu0
        %v2029 = vadd.f32 %v1860, %v2028
        %2030 = vmatmul.bf16.gmra.mxu0 %v1208
        %v2031 = vpop.f32.mrf.mxu0
        %v2032 = vadd.f32 %v1863, %v2031
        %v2033 = vpop.f32.mrf.mxu0
        %v2034 = vadd.f32 %v1865, %v2033
        %2035 = vmatmul.bf16.gmra.mxu0 %v1210
        %v2036 = vpop.f32.mrf.mxu0
        %v2037 = vadd.f32 %v1868, %v2036
        %v2038 = vpop.f32.mrf.mxu0
        %v2039 = vadd.f32 %v1870, %v2038
        %2040 = vmatmul.bf16.gmra.mxu0 %v1212
        %v2041 = vpop.f32.mrf.mxu0
        %v2042 = vadd.f32 %v1873, %v2041
        %v2043 = vpop.f32.mrf.mxu0
        %v2044 = vadd.f32 %v1875, %v2043
        %2045 = vmatmul.bf16.gmra.mxu0 %v1214
        %v2046 = vpop.f32.mrf.mxu0
        %v2047 = vadd.f32 %v1878, %v2046
        %v2048 = vpop.f32.mrf.mxu0
        %v2049 = vadd.f32 %v1880, %v2048
        %2050 = vmatmul.bf16.gmra.mxu0 %v1216
        %v2051 = vpop.f32.mrf.mxu0
        %v2052 = vadd.f32 %v1883, %v2051
        %v2053 = vpop.f32.mrf.mxu0
        %v2054 = vadd.f32 %v1885, %v2053
        %2055 = vmatmul.bf16.gmra.mxu0 %v1218
        %v2056 = vpop.f32.mrf.mxu0
        %v2057 = vadd.f32 %v1888, %v2056
        %v2058 = vpop.f32.mrf.mxu0
        %v2059 = vadd.f32 %v1890, %v2058
        %2060 = vmatmul.bf16.gmra.mxu0 %v1220
        %v2061 = vpop.f32.mrf.mxu0
        %v2062 = vadd.f32 %v1893, %v2061
        %v2063 = vpop.f32.mrf.mxu0
        %v2064 = vadd.f32 %v1895, %v2063
        %2065 = vmatmul.bf16.gmra.mxu0 %v1222
        %v2066 = vpop.f32.mrf.mxu0
        %v2067 = vadd.f32 %v1898, %v2066
        %v2068 = vpop.f32.mrf.mxu0
        %v2069 = vadd.f32 %v1900, %v2068
        %2070 = vmatmul.bf16.gmra.mxu0 %v1224
        %v2071 = vpop.f32.mrf.mxu0
        %v2072 = vadd.f32 %v1903, %v2071
        %v2073 = vpop.f32.mrf.mxu0
        %v2074 = vadd.f32 %v1905, %v2073
        %2075 = vmatmul.bf16.gmra.mxu0 %v1226
        %v2076 = vpop.f32.mrf.mxu0
        %v2077 = vadd.f32 %v1908, %v2076
        %v2078 = vpop.f32.mrf.mxu0
        %v2079 = vadd.f32 %v1910, %v2078
        %2080 = vmatmul.bf16.gmra.mxu0 %v1228
        %v2081 = vpop.f32.mrf.mxu0
        %v2082 = vadd.f32 %v1913, %v2081
        %v2083 = vpop.f32.mrf.mxu0
        %v2084 = vadd.f32 %v1915, %v2083
        %2085 = vmatmul.bf16.gmra.mxu0 %v1230
        %v2086 = vpop.f32.mrf.mxu0
        %v2087 = vadd.f32 %v1918, %v2086
        %v2088 = vpop.f32.mrf.mxu0
        %v2089 = vadd.f32 %v1920, %v2088
        %2090 = vmatmul.bf16.gmra.mxu0 %v1232
        %v2091 = vpop.f32.mrf.mxu0
        %v2092 = vadd.f32 %v1923, %v2091
        %v2093 = vpop.f32.mrf.mxu0
        %v2094 = vadd.f32 %v1925, %v2093
        %2095 = vmatmul.bf16.gmra.mxu0 %v1234
        %v2096 = vpop.f32.mrf.mxu0
        %v2097 = vadd.f32 %v1928, %v2096
        %v2098 = vpop.f32.mrf.mxu0
        %v2099 = vadd.f32 %v1930, %v2098
        %2100 = vmatmul.bf16.gmra.mxu0 %v1236
        %v2101 = vpop.f32.mrf.mxu0
        %v2102 = vadd.f32 %v1933, %v2101
        %v2103 = vpop.f32.mrf.mxu0
        %v2104 = vadd.f32 %v1935, %v2103
        %2105 = vmatmul.bf16.gmra.mxu0 %v1238
        %v2106 = vpop.f32.mrf.mxu0
        %v2107 = vadd.f32 %v1938, %v2106
        %v2108 = vpop.f32.mrf.mxu0
        %v2109 = vadd.f32 %v1940, %v2108
        %2110 = vmatmul.bf16.gmra.mxu0 %v1240
        %v2111 = vpop.f32.mrf.mxu0
        %v2112 = vadd.f32 %v1943, %v2111
        %v2113 = vpop.f32.mrf.mxu0
        %v2114 = vadd.f32 %v1945, %v2113
        %2115 = vdwg.mxu0
        %v2116 = vmax.f32 %v1619, 0.0
        %v2117 = vmax.f32 %v1957, 0.0
        %v2118 = vmax.f32 %v1621, 0.0
        %v2119 = vmax.f32 %v1959, 0.0
        %v2120 = vmax.f32 %v1624, 0.0
        %v2121 = vmax.f32 %v1962, 0.0
        %v2122 = vmax.f32 %v1626, 0.0
        %v2123 = vmax.f32 %v1964, 0.0
        %v2124 = vmax.f32 %v1629, 0.0
        %v2125 = vmax.f32 %v1967, 0.0
        %v2126 = vmax.f32 %v1631, 0.0
        %v2127 = vmax.f32 %v1969, 0.0
        %v2128 = vmax.f32 %v1634, 0.0
        %v2129 = vmax.f32 %v1972, 0.0
        %v2130 = vmax.f32 %v1636, 0.0
        %v2131 = vmax.f32 %v1974, 0.0
        %v2132 = vmax.f32 %v1639, 0.0
        %v2133 = vmax.f32 %v1977, 0.0
        %v2134 = vmax.f32 %v1641, 0.0
        %v2135 = vmax.f32 %v1979, 0.0
        %v2136 = vmax.f32 %v1644, 0.0
        %v2137 = vmax.f32 %v1982, 0.0
        %v2138 = vmax.f32 %v1646, 0.0
        %v2139 = vmax.f32 %v1984, 0.0
        %v2140 = vmax.f32 %v1649, 0.0
        %v2141 = vmax.f32 %v1987, 0.0
        %v2142 = vmax.f32 %v1651, 0.0
        %v2143 = vmax.f32 %v1989, 0.0
        %v2144 = vmax.f32 %v1654, 0.0
        %v2145 = vmax.f32 %v1992, 0.0
        %v2146 = vmax.f32 %v1656, 0.0
        %v2147 = vmax.f32 %v1994, 0.0
        %v2148 = vmax.f32 %v1659, 0.0
        %v2149 = vmax.f32 %v1997, 0.0
        %v2150 = vmax.f32 %v1661, 0.0
        %v2151 = vmax.f32 %v1999, 0.0
        %v2152 = vmax.f32 %v1664, 0.0
        %v2153 = vmax.f32 %v2002, 0.0
        %v2154 = vmax.f32 %v1666, 0.0
        %v2155 = vmax.f32 %v2004, 0.0
        %v2156 = vmax.f32 %v1669, 0.0
        %v2157 = vmax.f32 %v2007, 0.0
        %v2158 = vmax.f32 %v1671, 0.0
        %v2159 = vmax.f32 %v2009, 0.0
        %v2160 = vmax.f32 %v1674, 0.0
        %v2161 = vmax.f32 %v2012, 0.0
        %v2162 = vmax.f32 %v1676, 0.0
        %v2163 = vmax.f32 %v2014, 0.0
        %v2164 = vmax.f32 %v1679, 0.0
        %v2165 = vmax.f32 %v2017, 0.0
        %v2166 = vmax.f32 %v1681, 0.0
        %v2167 = vmax.f32 %v2019, 0.0
        %v2168 = vmax.f32 %v1684, 0.0
        %v2169 = vmax.f32 %v2022, 0.0
        %v2170 = vmax.f32 %v1686, 0.0
        %v2171 = vmax.f32 %v2024, 0.0
        %v2172 = vmax.f32 %v1689, 0.0
        %v2173 = vmax.f32 %v2027, 0.0
        %v2174 = vmax.f32 %v1691, 0.0
        %v2175 = vmax.f32 %v2029, 0.0
        %v2176 = vmax.f32 %v1694, 0.0
        %v2177 = vmax.f32 %v2032, 0.0
        %v2178 = vmax.f32 %v1696, 0.0
        %v2179 = vmax.f32 %v2034, 0.0
        %v2180 = vmax.f32 %v1699, 0.0
        %v2181 = vmax.f32 %v2037, 0.0
        %v2182 = vmax.f32 %v1701, 0.0
        %v2183 = vmax.f32 %v2039, 0.0
        %v2184 = vmax.f32 %v1704, 0.0
        %v2185 = vmax.f32 %v2042, 0.0
        %v2186 = vmax.f32 %v1706, 0.0
        %v2187 = vmax.f32 %v2044, 0.0
        %v2188 = vmax.f32 %v1709, 0.0
        %v2189 = vmax.f32 %v2047, 0.0
        %v2190 = vmax.f32 %v1711, 0.0
        %v2191 = vmax.f32 %v2049, 0.0
        %v2192 = vmax.f32 %v1714, 0.0
        %v2193 = vmax.f32 %v2052, 0.0
        %v2194 = vmax.f32 %v1716, 0.0
        %v2195 = vmax.f32 %v2054, 0.0
        %v2196 = vmax.f32 %v1719, 0.0
        %v2197 = vmax.f32 %v2057, 0.0
        %v2198 = vmax.f32 %v1721, 0.0
        %v2199 = vmax.f32 %v2059, 0.0
        %v2200 = vmax.f32 %v1724, 0.0
        %v2201 = vmax.f32 %v2062, 0.0
        %v2202 = vmax.f32 %v1726, 0.0
        %v2203 = vmax.f32 %v2064, 0.0
        %v2204 = vmax.f32 %v1729, 0.0
        %v2205 = vmax.f32 %v2067, 0.0
        %v2206 = vmax.f32 %v1731, 0.0
        %v2207 = vmax.f32 %v2069, 0.0
        %v2208 = vmax.f32 %v1734, 0.0
        %v2209 = vmax.f32 %v2072, 0.0
        %v2210 = vmax.f32 %v1736, 0.0
        %v2211 = vmax.f32 %v2074, 0.0
        %v2212 = vmax.f32 %v1739, 0.0
        %v2213 = vmax.f32 %v2077, 0.0
        %v2214 = vmax.f32 %v1741, 0.0
        %v2215 = vmax.f32 %v2079, 0.0
        %v2216 = vmax.f32 %v1744, 0.0
        %v2217 = vmax.f32 %v2082, 0.0
        %v2218 = vmax.f32 %v1746, 0.0
        %v2219 = vmax.f32 %v2084, 0.0
        %v2220 = vmax.f32 %v1749, 0.0
        %v2221 = vmax.f32 %v2087, 0.0
        %v2222 = vmax.f32 %v1751, 0.0
        %v2223 = vmax.f32 %v2089, 0.0
        %v2224 = vmax.f32 %v1754, 0.0
        %v2225 = vmax.f32 %v2092, 0.0
        %v2226 = vmax.f32 %v1756, 0.0
        %v2227 = vmax.f32 %v2094, 0.0
        %v2228 = vmax.f32 %v1759, 0.0
        %v2229 = vmax.f32 %v2097, 0.0
        %v2230 = vmax.f32 %v1761, 0.0
        %v2231 = vmax.f32 %v2099, 0.0
        %v2232 = vmax.f32 %v1764, 0.0
        %v2233 = vmax.f32 %v2102, 0.0
        %v2234 = vmax.f32 %v1766, 0.0
        %v2235 = vmax.f32 %v2104, 0.0
        %v2236 = vmax.f32 %v1769, 0.0
        %v2237 = vmax.f32 %v2107, 0.0
        %v2238 = vmax.f32 %v1771, 0.0
        %v2239 = vmax.f32 %v2109, 0.0
        %v2240 = vmax.f32 %v1774, 0.0
        %v2241 = vmax.f32 %v2112, 0.0
        %v2242 = vmax.f32 %v1776, 0.0
        %v2243 = vmax.f32 %v2114, 0.0
        %v2244 = vpack.c.bf16 %v2118, %v2116
        %v2245 = vpack.c.bf16 %v2119, %v2117
        %v2246 = vpack.c.bf16 %v2122, %v2120
        %v2247 = vpack.c.bf16 %v2123, %v2121
        %v2248 = vpack.c.bf16 %v2126, %v2124
        %v2249 = vpack.c.bf16 %v2127, %v2125
        %v2250 = vpack.c.bf16 %v2130, %v2128
        %v2251 = vpack.c.bf16 %v2131, %v2129
        %v2252 = vpack.c.bf16 %v2134, %v2132
        %v2253 = vpack.c.bf16 %v2135, %v2133
        %v2254 = vpack.c.bf16 %v2138, %v2136
        %v2255 = vpack.c.bf16 %v2139, %v2137
        %v2256 = vpack.c.bf16 %v2142, %v2140
        %v2257 = vpack.c.bf16 %v2143, %v2141
        %v2258 = vpack.c.bf16 %v2146, %v2144
        %v2259 = vpack.c.bf16 %v2147, %v2145
        %v2260 = vpack.c.bf16 %v2150, %v2148
        %v2261 = vpack.c.bf16 %v2151, %v2149
        %v2262 = vpack.c.bf16 %v2154, %v2152
        %v2263 = vpack.c.bf16 %v2155, %v2153
        %v2264 = vpack.c.bf16 %v2158, %v2156
        %v2265 = vpack.c.bf16 %v2159, %v2157
        %v2266 = vpack.c.bf16 %v2162, %v2160
        %v2267 = vpack.c.bf16 %v2163, %v2161
        %v2268 = vpack.c.bf16 %v2166, %v2164
        %v2269 = vpack.c.bf16 %v2167, %v2165
        %v2270 = vpack.c.bf16 %v2170, %v2168
        %v2271 = vpack.c.bf16 %v2171, %v2169
        %v2272 = vpack.c.bf16 %v2174, %v2172
        %v2273 = vpack.c.bf16 %v2175, %v2173
        %v2274 = vpack.c.bf16 %v2178, %v2176
        %v2275 = vpack.c.bf16 %v2179, %v2177
        %v2276 = vpack.c.bf16 %v2182, %v2180
        %v2277 = vpack.c.bf16 %v2183, %v2181
        %v2278 = vpack.c.bf16 %v2186, %v2184
        %v2279 = vpack.c.bf16 %v2187, %v2185
        %v2280 = vpack.c.bf16 %v2190, %v2188
        %v2281 = vpack.c.bf16 %v2191, %v2189
        %v2282 = vpack.c.bf16 %v2194, %v2192
        %v2283 = vpack.c.bf16 %v2195, %v2193
        %v2284 = vpack.c.bf16 %v2198, %v2196
        %v2285 = vpack.c.bf16 %v2199, %v2197
        %v2286 = vpack.c.bf16 %v2202, %v2200
        %v2287 = vpack.c.bf16 %v2203, %v2201
        %v2288 = vpack.c.bf16 %v2206, %v2204
        %v2289 = vpack.c.bf16 %v2207, %v2205
        %v2290 = vpack.c.bf16 %v2210, %v2208
        %v2291 = vpack.c.bf16 %v2211, %v2209
        %v2292 = vpack.c.bf16 %v2214, %v2212
        %v2293 = vpack.c.bf16 %v2215, %v2213
        %v2294 = vpack.c.bf16 %v2218, %v2216
        %v2295 = vpack.c.bf16 %v2219, %v2217
        %v2296 = vpack.c.bf16 %v2222, %v2220
        %v2297 = vpack.c.bf16 %v2223, %v2221
        %v2298 = vpack.c.bf16 %v2226, %v2224
        %v2299 = vpack.c.bf16 %v2227, %v2225
        %v2300 = vpack.c.bf16 %v2230, %v2228
        %v2301 = vpack.c.bf16 %v2231, %v2229
        %v2302 = vpack.c.bf16 %v2234, %v2232
        %v2303 = vpack.c.bf16 %v2235, %v2233
        %v2304 = vpack.c.bf16 %v2238, %v2236
        %v2305 = vpack.c.bf16 %v2239, %v2237
        %v2306 = vpack.c.bf16 %v2242, %v2240
        %v2307 = vpack.c.bf16 %v2243, %v2241
        %v2308 = vld [vmem:[#allocation6] sm:$0xff]
        %v2309 = vld [vmem:[#allocation6 + $0x8] sm:$0xff]
        %v2310 = vld [vmem:[#allocation6 + $0x10] sm:$0xff]
        %v2311 = vld [vmem:[#allocation6 + $0x18] sm:$0xff]
        %v2312 = vld [vmem:[#allocation6 + $0x20] sm:$0xff]
        %v2313 = vld [vmem:[#allocation6 + $0x28] sm:$0xff]
        %v2314 = vld [vmem:[#allocation6 + $0x30] sm:$0xff]
        %v2315 = vld [vmem:[#allocation6 + $0x38] sm:$0xff]
        %v2316 = vld [vmem:[#allocation6 + $0x40] sm:$0xff]
        %v2317 = vld [vmem:[#allocation6 + $0x48] sm:$0xff]
        %v2318 = vld [vmem:[#allocation6 + $0x50] sm:$0xff]
        %v2319 = vld [vmem:[#allocation6 + $0x58] sm:$0xff]
        %v2320 = vld [vmem:[#allocation6 + $0x60] sm:$0xff]
        %v2321 = vld [vmem:[#allocation6 + $0x68] sm:$0xff]
        %v2322 = vld [vmem:[#allocation6 + $0x70] sm:$0xff]
        %v2323 = vld [vmem:[#allocation6 + $0x78] sm:$0xff]
        %v2324 = vld [vmem:[#allocation6 + $0x80] sm:$0xff]
        %v2325 = vld [vmem:[#allocation6 + $0x88] sm:$0xff]
        %v2326 = vld [vmem:[#allocation6 + $0x90] sm:$0xff]
        %v2327 = vld [vmem:[#allocation6 + $0x98] sm:$0xff]
        %v2328 = vld [vmem:[#allocation6 + $0xa0] sm:$0xff]
        %v2329 = vld [vmem:[#allocation6 + $0xa8] sm:$0xff]
        %v2330 = vld [vmem:[#allocation6 + $0xb0] sm:$0xff]
        %v2331 = vld [vmem:[#allocation6 + $0xb8] sm:$0xff]
        %v2332 = vld [vmem:[#allocation6 + $0xc0] sm:$0xff]
        %v2333 = vld [vmem:[#allocation6 + $0xc8] sm:$0xff]
        %v2334 = vld [vmem:[#allocation6 + $0xd0] sm:$0xff]
        %v2335 = vld [vmem:[#allocation6 + $0xd8] sm:$0xff]
        %v2336 = vld [vmem:[#allocation6 + $0xe0] sm:$0xff]
        %v2337 = vld [vmem:[#allocation6 + $0xe8] sm:$0xff]
        %v2338 = vld [vmem:[#allocation6 + $0xf0] sm:$0xff]
        %v2339 = vld [vmem:[#allocation6 + $0xf8] sm:$0xff]
        %v2340 = vld [vmem:[#allocation6 + $0x100] sm:$0xff]
        %v2341 = vld [vmem:[#allocation6 + $0x108] sm:$0xff]
        %v2342 = vld [vmem:[#allocation6 + $0x110] sm:$0xff]
        %v2343 = vld [vmem:[#allocation6 + $0x118] sm:$0xff]
        %v2344 = vld [vmem:[#allocation6 + $0x120] sm:$0xff]
        %v2345 = vld [vmem:[#allocation6 + $0x128] sm:$0xff]
        %v2346 = vld [vmem:[#allocation6 + $0x130] sm:$0xff]
        %v2347 = vld [vmem:[#allocation6 + $0x138] sm:$0xff]
        %v2348 = vld [vmem:[#allocation6 + $0x140] sm:$0xff]
        %v2349 = vld [vmem:[#allocation6 + $0x148] sm:$0xff]
        %v2350 = vld [vmem:[#allocation6 + $0x150] sm:$0xff]
        %v2351 = vld [vmem:[#allocation6 + $0x158] sm:$0xff]
        %v2352 = vld [vmem:[#allocation6 + $0x160] sm:$0xff]
        %v2353 = vld [vmem:[#allocation6 + $0x168] sm:$0xff]
        %v2354 = vld [vmem:[#allocation6 + $0x170] sm:$0xff]
        %v2355 = vld [vmem:[#allocation6 + $0x178] sm:$0xff]
        %v2372 = vunpack.c.l.b16 %v2340
        %v2373 = vunpack.c.h.b16 %v2340
        %v2374 = vunpack.c.l.b16 %v2341
        %v2375 = vunpack.c.h.b16 %v2341
        %v2376 = vunpack.c.l.b16 %v2342
        %v2377 = vunpack.c.h.b16 %v2342
        %v2378 = vunpack.c.l.b16 %v2343
        %v2379 = vunpack.c.h.b16 %v2343
        %v2380 = vunpack.c.l.b16 %v2344
        %v2381 = vunpack.c.h.b16 %v2344
        %v2382 = vunpack.c.l.b16 %v2345
        %v2383 = vunpack.c.h.b16 %v2345
        %v2384 = vunpack.c.l.b16 %v2346
        %v2385 = vunpack.c.h.b16 %v2346
        %v2386 = vunpack.c.l.b16 %v2347
        %v2387 = vunpack.c.h.b16 %v2347
        %v2388 = vunpack.c.l.b16 %v2348
        %v2389 = vunpack.c.h.b16 %v2348
        %v2390 = vunpack.c.l.b16 %v2349
        %v2391 = vunpack.c.h.b16 %v2349
        %v2392 = vunpack.c.l.b16 %v2350
        %v2393 = vunpack.c.h.b16 %v2350
        %v2394 = vunpack.c.l.b16 %v2351
        %v2395 = vunpack.c.h.b16 %v2351
        %v2396 = vunpack.c.l.b16 %v2352
        %v2397 = vunpack.c.h.b16 %v2352
        %v2398 = vunpack.c.l.b16 %v2353
        %v2399 = vunpack.c.h.b16 %v2353
        %v2400 = vunpack.c.l.b16 %v2354
        %v2401 = vunpack.c.h.b16 %v2354
        %v2402 = vunpack.c.l.b16 %v2355
        %v2403 = vunpack.c.h.b16 %v2355
        %v2404 = vpack.c.b16 %v2374, %v2372
        %v2405 = vpack.c.b16 %v2375, %v2373
        %v2406 = vpack.c.b16 %v2378, %v2376
        %v2407 = vpack.c.b16 %v2379, %v2377
        %v2408 = vpack.c.b16 %v2382, %v2380
        %v2409 = vpack.c.b16 %v2383, %v2381
        %v2410 = vpack.c.b16 %v2386, %v2384
        %v2411 = vpack.c.b16 %v2387, %v2385
        %v2412 = vpack.c.b16 %v2390, %v2388
        %v2413 = vpack.c.b16 %v2391, %v2389
        %v2414 = vpack.c.b16 %v2394, %v2392
        %v2415 = vpack.c.b16 %v2395, %v2393
        %v2416 = vpack.c.b16 %v2398, %v2396
        %v2417 = vpack.c.b16 %v2399, %v2397
        %v2418 = vpack.c.b16 %v2402, %v2400
        %v2419 = vpack.c.b16 %v2403, %v2401
        %2436 = vmatpush.bf16.msra.mxu0 %v2418
        %2437 = vmatpush.bf16.msra.mxu0 %v2416
        %2438 = vmatpush.bf16.msra.mxu0 %v2414
        %2439 = vmatpush.bf16.msra.mxu0 %v2412
        %2440 = vmatpush.bf16.msra.mxu0 %v2410
        %2441 = vmatpush.bf16.msra.mxu0 %v2408
        %2442 = vmatpush.bf16.msra.mxu0 %v2406
        %2443 = vmatpush.bf16.msra.mxu0 %v2404
        %2444 = vmatmul.bf16.gmra.mxu0 %v567
        %v2445 = vpop.f32.mrf.mxu0
        %v2446 = vadd.f32 0.0, %v2445
        %v2447 = vpop.f32.mrf.mxu0
        %v2448 = vadd.f32 0.0, %v2447
        %2449 = vmatmul.bf16.gmra.mxu0 %v568
        %v2450 = vpop.f32.mrf.mxu0
        %v2451 = vadd.f32 0.0, %v2450
        %v2452 = vpop.f32.mrf.mxu0
        %v2453 = vadd.f32 0.0, %v2452
        %2454 = vmatmul.bf16.gmra.mxu0 %v569
        %v2455 = vpop.f32.mrf.mxu0
        %v2456 = vadd.f32 0.0, %v2455
        %v2457 = vpop.f32.mrf.mxu0
        %v2458 = vadd.f32 0.0, %v2457
        %2459 = vmatmul.bf16.gmra.mxu0 %v570
        %v2460 = vpop.f32.mrf.mxu0
        %v2461 = vadd.f32 0.0, %v2460
        %v2462 = vpop.f32.mrf.mxu0
        %v2463 = vadd.f32 0.0, %v2462
        %2464 = vmatmul.bf16.gmra.mxu0 %v571
        %v2465 = vpop.f32.mrf.mxu0
        %v2466 = vadd.f32 0.0, %v2465
        %v2467 = vpop.f32.mrf.mxu0
        %v2468 = vadd.f32 0.0, %v2467
        %2469 = vmatmul.bf16.gmra.mxu0 %v572
        %v2470 = vpop.f32.mrf.mxu0
        %v2471 = vadd.f32 0.0, %v2470
        %v2472 = vpop.f32.mrf.mxu0
        %v2473 = vadd.f32 0.0, %v2472
        %2474 = vmatmul.bf16.gmra.mxu0 %v573
        %v2475 = vpop.f32.mrf.mxu0
        %v2476 = vadd.f32 0.0, %v2475
        %v2477 = vpop.f32.mrf.mxu0
        %v2478 = vadd.f32 0.0, %v2477
        %2479 = vmatmul.bf16.gmra.mxu0 %v574
        %v2480 = vpop.f32.mrf.mxu0
        %v2481 = vadd.f32 0.0, %v2480
        %v2482 = vpop.f32.mrf.mxu0
        %v2483 = vadd.f32 0.0, %v2482
        %2484 = vmatmul.bf16.gmra.mxu0 %v575
        %v2485 = vpop.f32.mrf.mxu0
        %v2486 = vadd.f32 0.0, %v2485
        %v2487 = vpop.f32.mrf.mxu0
        %v2488 = vadd.f32 0.0, %v2487
        %2489 = vmatmul.bf16.gmra.mxu0 %v576
        %v2490 = vpop.f32.mrf.mxu0
        %v2491 = vadd.f32 0.0, %v2490
        %v2492 = vpop.f32.mrf.mxu0
        %v2493 = vadd.f32 0.0, %v2492
        %2494 = vmatmul.bf16.gmra.mxu0 %v577
        %v2495 = vpop.f32.mrf.mxu0
        %v2496 = vadd.f32 0.0, %v2495
        %v2497 = vpop.f32.mrf.mxu0
        %v2498 = vadd.f32 0.0, %v2497
        %2499 = vmatmul.bf16.gmra.mxu0 %v578
        %v2500 = vpop.f32.mrf.mxu0
        %v2501 = vadd.f32 0.0, %v2500
        %v2502 = vpop.f32.mrf.mxu0
        %v2503 = vadd.f32 0.0, %v2502
        %2504 = vmatmul.bf16.gmra.mxu0 %v579
        %v2505 = vpop.f32.mrf.mxu0
        %v2506 = vadd.f32 0.0, %v2505
        %v2507 = vpop.f32.mrf.mxu0
        %v2508 = vadd.f32 0.0, %v2507
        %2509 = vmatmul.bf16.gmra.mxu0 %v580
        %v2510 = vpop.f32.mrf.mxu0
        %v2511 = vadd.f32 0.0, %v2510
        %v2512 = vpop.f32.mrf.mxu0
        %v2513 = vadd.f32 0.0, %v2512
        %2514 = vmatmul.bf16.gmra.mxu0 %v581
        %v2515 = vpop.f32.mrf.mxu0
        %v2516 = vadd.f32 0.0, %v2515
        %v2517 = vpop.f32.mrf.mxu0
        %v2518 = vadd.f32 0.0, %v2517
        %2519 = vmatmul.bf16.gmra.mxu0 %v582
        %v2520 = vpop.f32.mrf.mxu0
        %v2521 = vadd.f32 0.0, %v2520
        %v2522 = vpop.f32.mrf.mxu0
        %v2523 = vadd.f32 0.0, %v2522
        %2524 = vmatmul.bf16.gmra.mxu0 %v583
        %v2525 = vpop.f32.mrf.mxu0
        %v2526 = vadd.f32 0.0, %v2525
        %v2527 = vpop.f32.mrf.mxu0
        %v2528 = vadd.f32 0.0, %v2527
        %2529 = vmatmul.bf16.gmra.mxu0 %v584
        %v2530 = vpop.f32.mrf.mxu0
        %v2531 = vadd.f32 0.0, %v2530
        %v2532 = vpop.f32.mrf.mxu0
        %v2533 = vadd.f32 0.0, %v2532
        %2534 = vmatmul.bf16.gmra.mxu0 %v585
        %v2535 = vpop.f32.mrf.mxu0
        %v2536 = vadd.f32 0.0, %v2535
        %v2537 = vpop.f32.mrf.mxu0
        %v2538 = vadd.f32 0.0, %v2537
        %2539 = vmatmul.bf16.gmra.mxu0 %v586
        %v2540 = vpop.f32.mrf.mxu0
        %v2541 = vadd.f32 0.0, %v2540
        %v2542 = vpop.f32.mrf.mxu0
        %v2543 = vadd.f32 0.0, %v2542
        %2544 = vmatmul.bf16.gmra.mxu0 %v587
        %v2545 = vpop.f32.mrf.mxu0
        %v2546 = vadd.f32 0.0, %v2545
        %v2547 = vpop.f32.mrf.mxu0
        %v2548 = vadd.f32 0.0, %v2547
        %2549 = vmatmul.bf16.gmra.mxu0 %v588
        %v2550 = vpop.f32.mrf.mxu0
        %v2551 = vadd.f32 0.0, %v2550
        %v2552 = vpop.f32.mrf.mxu0
        %v2553 = vadd.f32 0.0, %v2552
        %2554 = vmatmul.bf16.gmra.mxu0 %v589
        %v2555 = vpop.f32.mrf.mxu0
        %v2556 = vadd.f32 0.0, %v2555
        %v2557 = vpop.f32.mrf.mxu0
        %v2558 = vadd.f32 0.0, %v2557
        %2559 = vmatmul.bf16.gmra.mxu0 %v590
        %v2560 = vpop.f32.mrf.mxu0
        %v2561 = vadd.f32 0.0, %v2560
        %v2562 = vpop.f32.mrf.mxu0
        %v2563 = vadd.f32 0.0, %v2562
        %2564 = vmatmul.bf16.gmra.mxu0 %v591
        %v2565 = vpop.f32.mrf.mxu0
        %v2566 = vadd.f32 0.0, %v2565
        %v2567 = vpop.f32.mrf.mxu0
        %v2568 = vadd.f32 0.0, %v2567
        %2569 = vmatmul.bf16.gmra.mxu0 %v592
        %v2570 = vpop.f32.mrf.mxu0
        %v2571 = vadd.f32 0.0, %v2570
        %v2572 = vpop.f32.mrf.mxu0
        %v2573 = vadd.f32 0.0, %v2572
        %2574 = vmatmul.bf16.gmra.mxu0 %v593
        %v2575 = vpop.f32.mrf.mxu0
        %v2576 = vadd.f32 0.0, %v2575
        %v2577 = vpop.f32.mrf.mxu0
        %v2578 = vadd.f32 0.0, %v2577
        %2579 = vmatmul.bf16.gmra.mxu0 %v594
        %v2580 = vpop.f32.mrf.mxu0
        %v2581 = vadd.f32 0.0, %v2580
        %v2582 = vpop.f32.mrf.mxu0
        %v2583 = vadd.f32 0.0, %v2582
        %2584 = vmatmul.bf16.gmra.mxu0 %v595
        %v2585 = vpop.f32.mrf.mxu0
        %v2586 = vadd.f32 0.0, %v2585
        %v2587 = vpop.f32.mrf.mxu0
        %v2588 = vadd.f32 0.0, %v2587
        %2589 = vmatmul.bf16.gmra.mxu0 %v596
        %v2590 = vpop.f32.mrf.mxu0
        %v2591 = vadd.f32 0.0, %v2590
        %v2592 = vpop.f32.mrf.mxu0
        %v2593 = vadd.f32 0.0, %v2592
        %2594 = vmatmul.bf16.gmra.mxu0 %v597
        %v2595 = vpop.f32.mrf.mxu0
        %v2596 = vadd.f32 0.0, %v2595
        %v2597 = vpop.f32.mrf.mxu0
        %v2598 = vadd.f32 0.0, %v2597
        %2599 = vmatmul.bf16.gmra.mxu0 %v598
        %v2600 = vpop.f32.mrf.mxu0
        %v2601 = vadd.f32 0.0, %v2600
        %v2602 = vpop.f32.mrf.mxu0
        %v2603 = vadd.f32 0.0, %v2602
        %2604 = vdwg.mxu0
        %2605 = vmatpush.bf16.msra.mxu0 %v2419
        %2606 = vmatpush.bf16.msra.mxu0 %v2417
        %2607 = vmatpush.bf16.msra.mxu0 %v2415
        %2608 = vmatpush.bf16.msra.mxu0 %v2413
        %2609 = vmatpush.bf16.msra.mxu0 %v2411
        %2610 = vmatpush.bf16.msra.mxu0 %v2409
        %2611 = vmatpush.bf16.msra.mxu0 %v2407
        %2612 = vmatpush.bf16.msra.mxu0 %v2405
        %2613 = vmatmul.bf16.gmra.mxu0 %v567
        %v2614 = vpop.f32.mrf.mxu0
        %v2615 = vadd.f32 0.0, %v2614
        %v2616 = vpop.f32.mrf.mxu0
        %v2617 = vadd.f32 0.0, %v2616
        %2618 = vmatmul.bf16.gmra.mxu0 %v568
        %v2619 = vpop.f32.mrf.mxu0
        %v2620 = vadd.f32 0.0, %v2619
        %v2621 = vpop.f32.mrf.mxu0
        %v2622 = vadd.f32 0.0, %v2621
        %2623 = vmatmul.bf16.gmra.mxu0 %v569
        %v2624 = vpop.f32.mrf.mxu0
        %v2625 = vadd.f32 0.0, %v2624
        %v2626 = vpop.f32.mrf.mxu0
        %v2627 = vadd.f32 0.0, %v2626
        %2628 = vmatmul.bf16.gmra.mxu0 %v570
        %v2629 = vpop.f32.mrf.mxu0
        %v2630 = vadd.f32 0.0, %v2629
        %v2631 = vpop.f32.mrf.mxu0
        %v2632 = vadd.f32 0.0, %v2631
        %2633 = vmatmul.bf16.gmra.mxu0 %v571
        %v2634 = vpop.f32.mrf.mxu0
        %v2635 = vadd.f32 0.0, %v2634
        %v2636 = vpop.f32.mrf.mxu0
        %v2637 = vadd.f32 0.0, %v2636
        %2638 = vmatmul.bf16.gmra.mxu0 %v572
        %v2639 = vpop.f32.mrf.mxu0
        %v2640 = vadd.f32 0.0, %v2639
        %v2641 = vpop.f32.mrf.mxu0
        %v2642 = vadd.f32 0.0, %v2641
        %2643 = vmatmul.bf16.gmra.mxu0 %v573
        %v2644 = vpop.f32.mrf.mxu0
        %v2645 = vadd.f32 0.0, %v2644
        %v2646 = vpop.f32.mrf.mxu0
        %v2647 = vadd.f32 0.0, %v2646
        %2648 = vmatmul.bf16.gmra.mxu0 %v574
        %v2649 = vpop.f32.mrf.mxu0
        %v2650 = vadd.f32 0.0, %v2649
        %v2651 = vpop.f32.mrf.mxu0
        %v2652 = vadd.f32 0.0, %v2651
        %2653 = vmatmul.bf16.gmra.mxu0 %v575
        %v2654 = vpop.f32.mrf.mxu0
        %v2655 = vadd.f32 0.0, %v2654
        %v2656 = vpop.f32.mrf.mxu0
        %v2657 = vadd.f32 0.0, %v2656
        %2658 = vmatmul.bf16.gmra.mxu0 %v576
        %v2659 = vpop.f32.mrf.mxu0
        %v2660 = vadd.f32 0.0, %v2659
        %v2661 = vpop.f32.mrf.mxu0
        %v2662 = vadd.f32 0.0, %v2661
        %2663 = vmatmul.bf16.gmra.mxu0 %v577
        %v2664 = vpop.f32.mrf.mxu0
        %v2665 = vadd.f32 0.0, %v2664
        %v2666 = vpop.f32.mrf.mxu0
        %v2667 = vadd.f32 0.0, %v2666
        %2668 = vmatmul.bf16.gmra.mxu0 %v578
        %v2669 = vpop.f32.mrf.mxu0
        %v2670 = vadd.f32 0.0, %v2669
        %v2671 = vpop.f32.mrf.mxu0
        %v2672 = vadd.f32 0.0, %v2671
        %2673 = vmatmul.bf16.gmra.mxu0 %v579
        %v2674 = vpop.f32.mrf.mxu0
        %v2675 = vadd.f32 0.0, %v2674
        %v2676 = vpop.f32.mrf.mxu0
        %v2677 = vadd.f32 0.0, %v2676
        %2678 = vmatmul.bf16.gmra.mxu0 %v580
        %v2679 = vpop.f32.mrf.mxu0
        %v2680 = vadd.f32 0.0, %v2679
        %v2681 = vpop.f32.mrf.mxu0
        %v2682 = vadd.f32 0.0, %v2681
        %2683 = vmatmul.bf16.gmra.mxu0 %v581
        %v2684 = vpop.f32.mrf.mxu0
        %v2685 = vadd.f32 0.0, %v2684
        %v2686 = vpop.f32.mrf.mxu0
        %v2687 = vadd.f32 0.0, %v2686
        %2688 = vmatmul.bf16.gmra.mxu0 %v582
        %v2689 = vpop.f32.mrf.mxu0
        %v2690 = vadd.f32 0.0, %v2689
        %v2691 = vpop.f32.mrf.mxu0
        %v2692 = vadd.f32 0.0, %v2691
        %2693 = vmatmul.bf16.gmra.mxu0 %v583
        %v2694 = vpop.f32.mrf.mxu0
        %v2695 = vadd.f32 0.0, %v2694
        %v2696 = vpop.f32.mrf.mxu0
        %v2697 = vadd.f32 0.0, %v2696
        %2698 = vmatmul.bf16.gmra.mxu0 %v584
        %v2699 = vpop.f32.mrf.mxu0
        %v2700 = vadd.f32 0.0, %v2699
        %v2701 = vpop.f32.mrf.mxu0
        %v2702 = vadd.f32 0.0, %v2701
        %2703 = vmatmul.bf16.gmra.mxu0 %v585
        %v2704 = vpop.f32.mrf.mxu0
        %v2705 = vadd.f32 0.0, %v2704
        %v2706 = vpop.f32.mrf.mxu0
        %v2707 = vadd.f32 0.0, %v2706
        %2708 = vmatmul.bf16.gmra.mxu0 %v586
        %v2709 = vpop.f32.mrf.mxu0
        %v2710 = vadd.f32 0.0, %v2709
        %v2711 = vpop.f32.mrf.mxu0
        %v2712 = vadd.f32 0.0, %v2711
        %2713 = vmatmul.bf16.gmra.mxu0 %v587
        %v2714 = vpop.f32.mrf.mxu0
        %v2715 = vadd.f32 0.0, %v2714
        %v2716 = vpop.f32.mrf.mxu0
        %v2717 = vadd.f32 0.0, %v2716
        %2718 = vmatmul.bf16.gmra.mxu0 %v588
        %v2719 = vpop.f32.mrf.mxu0
        %v2720 = vadd.f32 0.0, %v2719
        %v2721 = vpop.f32.mrf.mxu0
        %v2722 = vadd.f32 0.0, %v2721
        %2723 = vmatmul.bf16.gmra.mxu0 %v589
        %v2724 = vpop.f32.mrf.mxu0
        %v2725 = vadd.f32 0.0, %v2724
        %v2726 = vpop.f32.mrf.mxu0
        %v2727 = vadd.f32 0.0, %v2726
        %2728 = vmatmul.bf16.gmra.mxu0 %v590
        %v2729 = vpop.f32.mrf.mxu0
        %v2730 = vadd.f32 0.0, %v2729
        %v2731 = vpop.f32.mrf.mxu0
        %v2732 = vadd.f32 0.0, %v2731
        %2733 = vmatmul.bf16.gmra.mxu0 %v591
        %v2734 = vpop.f32.mrf.mxu0
        %v2735 = vadd.f32 0.0, %v2734
        %v2736 = vpop.f32.mrf.mxu0
        %v2737 = vadd.f32 0.0, %v2736
        %2738 = vmatmul.bf16.gmra.mxu0 %v592
        %v2739 = vpop.f32.mrf.mxu0
        %v2740 = vadd.f32 0.0, %v2739
        %v2741 = vpop.f32.mrf.mxu0
        %v2742 = vadd.f32 0.0, %v2741
        %2743 = vmatmul.bf16.gmra.mxu0 %v593
        %v2744 = vpop.f32.mrf.mxu0
        %v2745 = vadd.f32 0.0, %v2744
        %v2746 = vpop.f32.mrf.mxu0
        %v2747 = vadd.f32 0.0, %v2746
        %2748 = vmatmul.bf16.gmra.mxu0 %v594
        %v2749 = vpop.f32.mrf.mxu0
        %v2750 = vadd.f32 0.0, %v2749
        %v2751 = vpop.f32.mrf.mxu0
        %v2752 = vadd.f32 0.0, %v2751
        %2753 = vmatmul.bf16.gmra.mxu0 %v595
        %v2754 = vpop.f32.mrf.mxu0
        %v2755 = vadd.f32 0.0, %v2754
        %v2756 = vpop.f32.mrf.mxu0
        %v2757 = vadd.f32 0.0, %v2756
        %2758 = vmatmul.bf16.gmra.mxu0 %v596
        %v2759 = vpop.f32.mrf.mxu0
        %v2760 = vadd.f32 0.0, %v2759
        %v2761 = vpop.f32.mrf.mxu0
        %v2762 = vadd.f32 0.0, %v2761
        %2763 = vmatmul.bf16.gmra.mxu0 %v597
        %v2764 = vpop.f32.mrf.mxu0
        %v2765 = vadd.f32 0.0, %v2764
        %v2766 = vpop.f32.mrf.mxu0
        %v2767 = vadd.f32 0.0, %v2766
        %2768 = vmatmul.bf16.gmra.mxu0 %v598
        %v2769 = vpop.f32.mrf.mxu0
        %v2770 = vadd.f32 0.0, %v2769
        %v2771 = vpop.f32.mrf.mxu0
        %v2772 = vadd.f32 0.0, %v2771
        %2773 = vdwg.mxu0
        %v2806 = vunpack.c.l.b16 %v2308
        %v2807 = vunpack.c.h.b16 %v2308
        %v2808 = vunpack.c.l.b16 %v2309
        %v2809 = vunpack.c.h.b16 %v2309
        %v2810 = vunpack.c.l.b16 %v2310
        %v2811 = vunpack.c.h.b16 %v2310
        %v2812 = vunpack.c.l.b16 %v2311
        %v2813 = vunpack.c.h.b16 %v2311
        %v2814 = vunpack.c.l.b16 %v2312
        %v2815 = vunpack.c.h.b16 %v2312
        %v2816 = vunpack.c.l.b16 %v2313
        %v2817 = vunpack.c.h.b16 %v2313
        %v2818 = vunpack.c.l.b16 %v2314
        %v2819 = vunpack.c.h.b16 %v2314
        %v2820 = vunpack.c.l.b16 %v2315
        %v2821 = vunpack.c.h.b16 %v2315
        %v2822 = vunpack.c.l.b16 %v2316
        %v2823 = vunpack.c.h.b16 %v2316
        %v2824 = vunpack.c.l.b16 %v2317
        %v2825 = vunpack.c.h.b16 %v2317
        %v2826 = vunpack.c.l.b16 %v2318
        %v2827 = vunpack.c.h.b16 %v2318
        %v2828 = vunpack.c.l.b16 %v2319
        %v2829 = vunpack.c.h.b16 %v2319
        %v2830 = vunpack.c.l.b16 %v2320
        %v2831 = vunpack.c.h.b16 %v2320
        %v2832 = vunpack.c.l.b16 %v2321
        %v2833 = vunpack.c.h.b16 %v2321
        %v2834 = vunpack.c.l.b16 %v2322
        %v2835 = vunpack.c.h.b16 %v2322
        %v2836 = vunpack.c.l.b16 %v2323
        %v2837 = vunpack.c.h.b16 %v2323
        %v2838 = vunpack.c.l.b16 %v2324
        %v2839 = vunpack.c.h.b16 %v2324
        %v2840 = vunpack.c.l.b16 %v2325
        %v2841 = vunpack.c.h.b16 %v2325
        %v2842 = vunpack.c.l.b16 %v2326
        %v2843 = vunpack.c.h.b16 %v2326
        %v2844 = vunpack.c.l.b16 %v2327
        %v2845 = vunpack.c.h.b16 %v2327
        %v2846 = vunpack.c.l.b16 %v2328
        %v2847 = vunpack.c.h.b16 %v2328
        %v2848 = vunpack.c.l.b16 %v2329
        %v2849 = vunpack.c.h.b16 %v2329
        %v2850 = vunpack.c.l.b16 %v2330
        %v2851 = vunpack.c.h.b16 %v2330
        %v2852 = vunpack.c.l.b16 %v2331
        %v2853 = vunpack.c.h.b16 %v2331
        %v2854 = vunpack.c.l.b16 %v2332
        %v2855 = vunpack.c.h.b16 %v2332
        %v2856 = vunpack.c.l.b16 %v2333
        %v2857 = vunpack.c.h.b16 %v2333
        %v2858 = vunpack.c.l.b16 %v2334
        %v2859 = vunpack.c.h.b16 %v2334
        %v2860 = vunpack.c.l.b16 %v2335
        %v2861 = vunpack.c.h.b16 %v2335
        %v2862 = vunpack.c.l.b16 %v2336
        %v2863 = vunpack.c.h.b16 %v2336
        %v2864 = vunpack.c.l.b16 %v2337
        %v2865 = vunpack.c.h.b16 %v2337
        %v2866 = vunpack.c.l.b16 %v2338
        %v2867 = vunpack.c.h.b16 %v2338
        %v2868 = vunpack.c.l.b16 %v2339
        %v2869 = vunpack.c.h.b16 %v2339
        %v2870 = vpack.c.b16 %v2808, %v2806
        %v2871 = vpack.c.b16 %v2809, %v2807
        %v2872 = vpack.c.b16 %v2812, %v2810
        %v2873 = vpack.c.b16 %v2813, %v2811
        %v2874 = vpack.c.b16 %v2816, %v2814
        %v2875 = vpack.c.b16 %v2817, %v2815
        %v2876 = vpack.c.b16 %v2820, %v2818
        %v2877 = vpack.c.b16 %v2821, %v2819
        %v2878 = vpack.c.b16 %v2824, %v2822
        %v2879 = vpack.c.b16 %v2825, %v2823
        %v2880 = vpack.c.b16 %v2828, %v2826
        %v2881 = vpack.c.b16 %v2829, %v2827
        %v2882 = vpack.c.b16 %v2832, %v2830
        %v2883 = vpack.c.b16 %v2833, %v2831
        %v2884 = vpack.c.b16 %v2836, %v2834
        %v2885 = vpack.c.b16 %v2837, %v2835
        %v2886 = vpack.c.b16 %v2840, %v2838
        %v2887 = vpack.c.b16 %v2841, %v2839
        %v2888 = vpack.c.b16 %v2844, %v2842
        %v2889 = vpack.c.b16 %v2845, %v2843
        %v2890 = vpack.c.b16 %v2848, %v2846
        %v2891 = vpack.c.b16 %v2849, %v2847
        %v2892 = vpack.c.b16 %v2852, %v2850
        %v2893 = vpack.c.b16 %v2853, %v2851
        %v2894 = vpack.c.b16 %v2856, %v2854
        %v2895 = vpack.c.b16 %v2857, %v2855
        %v2896 = vpack.c.b16 %v2860, %v2858
        %v2897 = vpack.c.b16 %v2861, %v2859
        %v2898 = vpack.c.b16 %v2864, %v2862
        %v2899 = vpack.c.b16 %v2865, %v2863
        %v2900 = vpack.c.b16 %v2868, %v2866
        %v2901 = vpack.c.b16 %v2869, %v2867
        %2934 = vmatpush.bf16.msra.mxu0 %v2884
        %2935 = vmatpush.bf16.msra.mxu0 %v2882
        %2936 = vmatpush.bf16.msra.mxu0 %v2880
        %2937 = vmatpush.bf16.msra.mxu0 %v2878
        %2938 = vmatpush.bf16.msra.mxu0 %v2876
        %2939 = vmatpush.bf16.msra.mxu0 %v2874
        %2940 = vmatpush.bf16.msra.mxu0 %v2872
        %2941 = vmatpush.bf16.msra.mxu0 %v2870
        %2942 = vmatmul.bf16.gmra.mxu0 %v2244
        %v2943 = vpop.f32.mrf.mxu0
        %v2944 = vadd.f32 %v2446, %v2943
        %v2945 = vpop.f32.mrf.mxu0
        %v2946 = vadd.f32 %v2448, %v2945
        %2947 = vmatmul.bf16.gmra.mxu0 %v2246
        %v2948 = vpop.f32.mrf.mxu0
        %v2949 = vadd.f32 %v2451, %v2948
        %v2950 = vpop.f32.mrf.mxu0
        %v2951 = vadd.f32 %v2453, %v2950
        %2952 = vmatmul.bf16.gmra.mxu0 %v2248
        %v2953 = vpop.f32.mrf.mxu0
        %v2954 = vadd.f32 %v2456, %v2953
        %v2955 = vpop.f32.mrf.mxu0
        %v2956 = vadd.f32 %v2458, %v2955
        %2957 = vmatmul.bf16.gmra.mxu0 %v2250
        %v2958 = vpop.f32.mrf.mxu0
        %v2959 = vadd.f32 %v2461, %v2958
        %v2960 = vpop.f32.mrf.mxu0
        %v2961 = vadd.f32 %v2463, %v2960
        %2962 = vmatmul.bf16.gmra.mxu0 %v2252
        %v2963 = vpop.f32.mrf.mxu0
        %v2964 = vadd.f32 %v2466, %v2963
        %v2965 = vpop.f32.mrf.mxu0
        %v2966 = vadd.f32 %v2468, %v2965
        %2967 = vmatmul.bf16.gmra.mxu0 %v2254
        %v2968 = vpop.f32.mrf.mxu0
        %v2969 = vadd.f32 %v2471, %v2968
        %v2970 = vpop.f32.mrf.mxu0
        %v2971 = vadd.f32 %v2473, %v2970
        %2972 = vmatmul.bf16.gmra.mxu0 %v2256
        %v2973 = vpop.f32.mrf.mxu0
        %v2974 = vadd.f32 %v2476, %v2973
        %v2975 = vpop.f32.mrf.mxu0
        %v2976 = vadd.f32 %v2478, %v2975
        %2977 = vmatmul.bf16.gmra.mxu0 %v2258
        %v2978 = vpop.f32.mrf.mxu0
        %v2979 = vadd.f32 %v2481, %v2978
        %v2980 = vpop.f32.mrf.mxu0
        %v2981 = vadd.f32 %v2483, %v2980
        %2982 = vmatmul.bf16.gmra.mxu0 %v2260
        %v2983 = vpop.f32.mrf.mxu0
        %v2984 = vadd.f32 %v2486, %v2983
        %v2985 = vpop.f32.mrf.mxu0
        %v2986 = vadd.f32 %v2488, %v2985
        %2987 = vmatmul.bf16.gmra.mxu0 %v2262
        %v2988 = vpop.f32.mrf.mxu0
        %v2989 = vadd.f32 %v2491, %v2988
        %v2990 = vpop.f32.mrf.mxu0
        %v2991 = vadd.f32 %v2493, %v2990
        %2992 = vmatmul.bf16.gmra.mxu0 %v2264
        %v2993 = vpop.f32.mrf.mxu0
        %v2994 = vadd.f32 %v2496, %v2993
        %v2995 = vpop.f32.mrf.mxu0
        %v2996 = vadd.f32 %v2498, %v2995
        %2997 = vmatmul.bf16.gmra.mxu0 %v2266
        %v2998 = vpop.f32.mrf.mxu0
        %v2999 = vadd.f32 %v2501, %v2998
        %v3000 = vpop.f32.mrf.mxu0
        %v3001 = vadd.f32 %v2503, %v3000
        %3002 = vmatmul.bf16.gmra.mxu0 %v2268
        %v3003 = vpop.f32.mrf.mxu0
        %v3004 = vadd.f32 %v2506, %v3003
        %v3005 = vpop.f32.mrf.mxu0
        %v3006 = vadd.f32 %v2508, %v3005
        %3007 = vmatmul.bf16.gmra.mxu0 %v2270
        %v3008 = vpop.f32.mrf.mxu0
        %v3009 = vadd.f32 %v2511, %v3008
        %v3010 = vpop.f32.mrf.mxu0
        %v3011 = vadd.f32 %v2513, %v3010
        %3012 = vmatmul.bf16.gmra.mxu0 %v2272
        %v3013 = vpop.f32.mrf.mxu0
        %v3014 = vadd.f32 %v2516, %v3013
        %v3015 = vpop.f32.mrf.mxu0
        %v3016 = vadd.f32 %v2518, %v3015
        %3017 = vmatmul.bf16.gmra.mxu0 %v2274
        %v3018 = vpop.f32.mrf.mxu0
        %v3019 = vadd.f32 %v2521, %v3018
        %v3020 = vpop.f32.mrf.mxu0
        %v3021 = vadd.f32 %v2523, %v3020
        %3022 = vmatmul.bf16.gmra.mxu0 %v2276
        %v3023 = vpop.f32.mrf.mxu0
        %v3024 = vadd.f32 %v2526, %v3023
        %v3025 = vpop.f32.mrf.mxu0
        %v3026 = vadd.f32 %v2528, %v3025
        %3027 = vmatmul.bf16.gmra.mxu0 %v2278
        %v3028 = vpop.f32.mrf.mxu0
        %v3029 = vadd.f32 %v2531, %v3028
        %v3030 = vpop.f32.mrf.mxu0
        %v3031 = vadd.f32 %v2533, %v3030
        %3032 = vmatmul.bf16.gmra.mxu0 %v2280
        %v3033 = vpop.f32.mrf.mxu0
        %v3034 = vadd.f32 %v2536, %v3033
        %v3035 = vpop.f32.mrf.mxu0
        %v3036 = vadd.f32 %v2538, %v3035
        %3037 = vmatmul.bf16.gmra.mxu0 %v2282
        %v3038 = vpop.f32.mrf.mxu0
        %v3039 = vadd.f32 %v2541, %v3038
        %v3040 = vpop.f32.mrf.mxu0
        %v3041 = vadd.f32 %v2543, %v3040
        %3042 = vmatmul.bf16.gmra.mxu0 %v2284
        %v3043 = vpop.f32.mrf.mxu0
        %v3044 = vadd.f32 %v2546, %v3043
        %v3045 = vpop.f32.mrf.mxu0
        %v3046 = vadd.f32 %v2548, %v3045
        %3047 = vmatmul.bf16.gmra.mxu0 %v2286
        %v3048 = vpop.f32.mrf.mxu0
        %v3049 = vadd.f32 %v2551, %v3048
        %v3050 = vpop.f32.mrf.mxu0
        %v3051 = vadd.f32 %v2553, %v3050
        %3052 = vmatmul.bf16.gmra.mxu0 %v2288
        %v3053 = vpop.f32.mrf.mxu0
        %v3054 = vadd.f32 %v2556, %v3053
        %v3055 = vpop.f32.mrf.mxu0
        %v3056 = vadd.f32 %v2558, %v3055
        %3057 = vmatmul.bf16.gmra.mxu0 %v2290
        %v3058 = vpop.f32.mrf.mxu0
        %v3059 = vadd.f32 %v2561, %v3058
        %v3060 = vpop.f32.mrf.mxu0
        %v3061 = vadd.f32 %v2563, %v3060
        %3062 = vmatmul.bf16.gmra.mxu0 %v2292
        %v3063 = vpop.f32.mrf.mxu0
        %v3064 = vadd.f32 %v2566, %v3063
        %v3065 = vpop.f32.mrf.mxu0
        %v3066 = vadd.f32 %v2568, %v3065
        %3067 = vmatmul.bf16.gmra.mxu0 %v2294
        %v3068 = vpop.f32.mrf.mxu0
        %v3069 = vadd.f32 %v2571, %v3068
        %v3070 = vpop.f32.mrf.mxu0
        %v3071 = vadd.f32 %v2573, %v3070
        %3072 = vmatmul.bf16.gmra.mxu0 %v2296
        %v3073 = vpop.f32.mrf.mxu0
        %v3074 = vadd.f32 %v2576, %v3073
        %v3075 = vpop.f32.mrf.mxu0
        %v3076 = vadd.f32 %v2578, %v3075
        %3077 = vmatmul.bf16.gmra.mxu0 %v2298
        %v3078 = vpop.f32.mrf.mxu0
        %v3079 = vadd.f32 %v2581, %v3078
        %v3080 = vpop.f32.mrf.mxu0
        %v3081 = vadd.f32 %v2583, %v3080
        %3082 = vmatmul.bf16.gmra.mxu0 %v2300
        %v3083 = vpop.f32.mrf.mxu0
        %v3084 = vadd.f32 %v2586, %v3083
        %v3085 = vpop.f32.mrf.mxu0
        %v3086 = vadd.f32 %v2588, %v3085
        %3087 = vmatmul.bf16.gmra.mxu0 %v2302
        %v3088 = vpop.f32.mrf.mxu0
        %v3089 = vadd.f32 %v2591, %v3088
        %v3090 = vpop.f32.mrf.mxu0
        %v3091 = vadd.f32 %v2593, %v3090
        %3092 = vmatmul.bf16.gmra.mxu0 %v2304
        %v3093 = vpop.f32.mrf.mxu0
        %v3094 = vadd.f32 %v2596, %v3093
        %v3095 = vpop.f32.mrf.mxu0
        %v3096 = vadd.f32 %v2598, %v3095
        %3097 = vmatmul.bf16.gmra.mxu0 %v2306
        %v3098 = vpop.f32.mrf.mxu0
        %v3099 = vadd.f32 %v2601, %v3098
        %v3100 = vpop.f32.mrf.mxu0
        %v3101 = vadd.f32 %v2603, %v3100
        %3102 = vdwg.mxu0
        %3103 = vmatpush.bf16.msra.mxu0 %v2900
        %3104 = vmatpush.bf16.msra.mxu0 %v2898
        %3105 = vmatpush.bf16.msra.mxu0 %v2896
        %3106 = vmatpush.bf16.msra.mxu0 %v2894
        %3107 = vmatpush.bf16.msra.mxu0 %v2892
        %3108 = vmatpush.bf16.msra.mxu0 %v2890
        %3109 = vmatpush.bf16.msra.mxu0 %v2888
        %3110 = vmatpush.bf16.msra.mxu0 %v2886
        %3111 = vmatmul.bf16.gmra.mxu0 %v2245
        %v3112 = vpop.f32.mrf.mxu0
        %v3113 = vadd.f32 %v2944, %v3112
        %v3114 = vpop.f32.mrf.mxu0
        %v3115 = vadd.f32 %v2946, %v3114
        %3116 = vmatmul.bf16.gmra.mxu0 %v2247
        %v3117 = vpop.f32.mrf.mxu0
        %v3118 = vadd.f32 %v2949, %v3117
        %v3119 = vpop.f32.mrf.mxu0
        %v3120 = vadd.f32 %v2951, %v3119
        %3121 = vmatmul.bf16.gmra.mxu0 %v2249
        %v3122 = vpop.f32.mrf.mxu0
        %v3123 = vadd.f32 %v2954, %v3122
        %v3124 = vpop.f32.mrf.mxu0
        %v3125 = vadd.f32 %v2956, %v3124
        %3126 = vmatmul.bf16.gmra.mxu0 %v2251
        %v3127 = vpop.f32.mrf.mxu0
        %v3128 = vadd.f32 %v2959, %v3127
        %v3129 = vpop.f32.mrf.mxu0
        %v3130 = vadd.f32 %v2961, %v3129
        %3131 = vmatmul.bf16.gmra.mxu0 %v2253
        %v3132 = vpop.f32.mrf.mxu0
        %v3133 = vadd.f32 %v2964, %v3132
        %v3134 = vpop.f32.mrf.mxu0
        %v3135 = vadd.f32 %v2966, %v3134
        %3136 = vmatmul.bf16.gmra.mxu0 %v2255
        %v3137 = vpop.f32.mrf.mxu0
        %v3138 = vadd.f32 %v2969, %v3137
        %v3139 = vpop.f32.mrf.mxu0
        %v3140 = vadd.f32 %v2971, %v3139
        %3141 = vmatmul.bf16.gmra.mxu0 %v2257
        %v3142 = vpop.f32.mrf.mxu0
        %v3143 = vadd.f32 %v2974, %v3142
        %v3144 = vpop.f32.mrf.mxu0
        %v3145 = vadd.f32 %v2976, %v3144
        %3146 = vmatmul.bf16.gmra.mxu0 %v2259
        %v3147 = vpop.f32.mrf.mxu0
        %v3148 = vadd.f32 %v2979, %v3147
        %v3149 = vpop.f32.mrf.mxu0
        %v3150 = vadd.f32 %v2981, %v3149
        %3151 = vmatmul.bf16.gmra.mxu0 %v2261
        %v3152 = vpop.f32.mrf.mxu0
        %v3153 = vadd.f32 %v2984, %v3152
        %v3154 = vpop.f32.mrf.mxu0
        %v3155 = vadd.f32 %v2986, %v3154
        %3156 = vmatmul.bf16.gmra.mxu0 %v2263
        %v3157 = vpop.f32.mrf.mxu0
        %v3158 = vadd.f32 %v2989, %v3157
        %v3159 = vpop.f32.mrf.mxu0
        %v3160 = vadd.f32 %v2991, %v3159
        %3161 = vmatmul.bf16.gmra.mxu0 %v2265
        %v3162 = vpop.f32.mrf.mxu0
        %v3163 = vadd.f32 %v2994, %v3162
        %v3164 = vpop.f32.mrf.mxu0
        %v3165 = vadd.f32 %v2996, %v3164
        %3166 = vmatmul.bf16.gmra.mxu0 %v2267
        %v3167 = vpop.f32.mrf.mxu0
        %v3168 = vadd.f32 %v2999, %v3167
        %v3169 = vpop.f32.mrf.mxu0
        %v3170 = vadd.f32 %v3001, %v3169
        %3171 = vmatmul.bf16.gmra.mxu0 %v2269
        %v3172 = vpop.f32.mrf.mxu0
        %v3173 = vadd.f32 %v3004, %v3172
        %v3174 = vpop.f32.mrf.mxu0
        %v3175 = vadd.f32 %v3006, %v3174
        %3176 = vmatmul.bf16.gmra.mxu0 %v2271
        %v3177 = vpop.f32.mrf.mxu0
        %v3178 = vadd.f32 %v3009, %v3177
        %v3179 = vpop.f32.mrf.mxu0
        %v3180 = vadd.f32 %v3011, %v3179
        %3181 = vmatmul.bf16.gmra.mxu0 %v2273
        %v3182 = vpop.f32.mrf.mxu0
        %v3183 = vadd.f32 %v3014, %v3182
        %v3184 = vpop.f32.mrf.mxu0
        %v3185 = vadd.f32 %v3016, %v3184
        %3186 = vmatmul.bf16.gmra.mxu0 %v2275
        %v3187 = vpop.f32.mrf.mxu0
        %v3188 = vadd.f32 %v3019, %v3187
        %v3189 = vpop.f32.mrf.mxu0
        %v3190 = vadd.f32 %v3021, %v3189
        %3191 = vmatmul.bf16.gmra.mxu0 %v2277
        %v3192 = vpop.f32.mrf.mxu0
        %v3193 = vadd.f32 %v3024, %v3192
        %v3194 = vpop.f32.mrf.mxu0
        %v3195 = vadd.f32 %v3026, %v3194
        %3196 = vmatmul.bf16.gmra.mxu0 %v2279
        %v3197 = vpop.f32.mrf.mxu0
        %v3198 = vadd.f32 %v3029, %v3197
        %v3199 = vpop.f32.mrf.mxu0
        %v3200 = vadd.f32 %v3031, %v3199
        %3201 = vmatmul.bf16.gmra.mxu0 %v2281
        %v3202 = vpop.f32.mrf.mxu0
        %v3203 = vadd.f32 %v3034, %v3202
        %v3204 = vpop.f32.mrf.mxu0
        %v3205 = vadd.f32 %v3036, %v3204
        %3206 = vmatmul.bf16.gmra.mxu0 %v2283
        %v3207 = vpop.f32.mrf.mxu0
        %v3208 = vadd.f32 %v3039, %v3207
        %v3209 = vpop.f32.mrf.mxu0
        %v3210 = vadd.f32 %v3041, %v3209
        %3211 = vmatmul.bf16.gmra.mxu0 %v2285
        %v3212 = vpop.f32.mrf.mxu0
        %v3213 = vadd.f32 %v3044, %v3212
        %v3214 = vpop.f32.mrf.mxu0
        %v3215 = vadd.f32 %v3046, %v3214
        %3216 = vmatmul.bf16.gmra.mxu0 %v2287
        %v3217 = vpop.f32.mrf.mxu0
        %v3218 = vadd.f32 %v3049, %v3217
        %v3219 = vpop.f32.mrf.mxu0
        %v3220 = vadd.f32 %v3051, %v3219
        %3221 = vmatmul.bf16.gmra.mxu0 %v2289
        %v3222 = vpop.f32.mrf.mxu0
        %v3223 = vadd.f32 %v3054, %v3222
        %v3224 = vpop.f32.mrf.mxu0
        %v3225 = vadd.f32 %v3056, %v3224
        %3226 = vmatmul.bf16.gmra.mxu0 %v2291
        %v3227 = vpop.f32.mrf.mxu0
        %v3228 = vadd.f32 %v3059, %v3227
        %v3229 = vpop.f32.mrf.mxu0
        %v3230 = vadd.f32 %v3061, %v3229
        %3231 = vmatmul.bf16.gmra.mxu0 %v2293
        %v3232 = vpop.f32.mrf.mxu0
        %v3233 = vadd.f32 %v3064, %v3232
        %v3234 = vpop.f32.mrf.mxu0
        %v3235 = vadd.f32 %v3066, %v3234
        %3236 = vmatmul.bf16.gmra.mxu0 %v2295
        %v3237 = vpop.f32.mrf.mxu0
        %v3238 = vadd.f32 %v3069, %v3237
        %v3239 = vpop.f32.mrf.mxu0
        %v3240 = vadd.f32 %v3071, %v3239
        %3241 = vmatmul.bf16.gmra.mxu0 %v2297
        %v3242 = vpop.f32.mrf.mxu0
        %v3243 = vadd.f32 %v3074, %v3242
        %v3244 = vpop.f32.mrf.mxu0
        %v3245 = vadd.f32 %v3076, %v3244
        %3246 = vmatmul.bf16.gmra.mxu0 %v2299
        %v3247 = vpop.f32.mrf.mxu0
        %v3248 = vadd.f32 %v3079, %v3247
        %v3249 = vpop.f32.mrf.mxu0
        %v3250 = vadd.f32 %v3081, %v3249
        %3251 = vmatmul.bf16.gmra.mxu0 %v2301
        %v3252 = vpop.f32.mrf.mxu0
        %v3253 = vadd.f32 %v3084, %v3252
        %v3254 = vpop.f32.mrf.mxu0
        %v3255 = vadd.f32 %v3086, %v3254
        %3256 = vmatmul.bf16.gmra.mxu0 %v2303
        %v3257 = vpop.f32.mrf.mxu0
        %v3258 = vadd.f32 %v3089, %v3257
        %v3259 = vpop.f32.mrf.mxu0
        %v3260 = vadd.f32 %v3091, %v3259
        %3261 = vmatmul.bf16.gmra.mxu0 %v2305
        %v3262 = vpop.f32.mrf.mxu0
        %v3263 = vadd.f32 %v3094, %v3262
        %v3264 = vpop.f32.mrf.mxu0
        %v3265 = vadd.f32 %v3096, %v3264
        %3266 = vmatmul.bf16.gmra.mxu0 %v2307
        %v3267 = vpop.f32.mrf.mxu0
        %v3268 = vadd.f32 %v3099, %v3267
        %v3269 = vpop.f32.mrf.mxu0
        %v3270 = vadd.f32 %v3101, %v3269
        %3271 = vdwg.mxu0
        %3272 = vmatpush.bf16.msra.mxu0 %v2885
        %3273 = vmatpush.bf16.msra.mxu0 %v2883
        %3274 = vmatpush.bf16.msra.mxu0 %v2881
        %3275 = vmatpush.bf16.msra.mxu0 %v2879
        %3276 = vmatpush.bf16.msra.mxu0 %v2877
        %3277 = vmatpush.bf16.msra.mxu0 %v2875
        %3278 = vmatpush.bf16.msra.mxu0 %v2873
        %3279 = vmatpush.bf16.msra.mxu0 %v2871
        %3280 = vmatmul.bf16.gmra.mxu0 %v2244
        %v3281 = vpop.f32.mrf.mxu0
        %v3282 = vadd.f32 %v2615, %v3281
        %v3283 = vpop.f32.mrf.mxu0
        %v3284 = vadd.f32 %v2617, %v3283
        %3285 = vmatmul.bf16.gmra.mxu0 %v2246
        %v3286 = vpop.f32.mrf.mxu0
        %v3287 = vadd.f32 %v2620, %v3286
        %v3288 = vpop.f32.mrf.mxu0
        %v3289 = vadd.f32 %v2622, %v3288
        %3290 = vmatmul.bf16.gmra.mxu0 %v2248
        %v3291 = vpop.f32.mrf.mxu0
        %v3292 = vadd.f32 %v2625, %v3291
        %v3293 = vpop.f32.mrf.mxu0
        %v3294 = vadd.f32 %v2627, %v3293
        %3295 = vmatmul.bf16.gmra.mxu0 %v2250
        %v3296 = vpop.f32.mrf.mxu0
        %v3297 = vadd.f32 %v2630, %v3296
        %v3298 = vpop.f32.mrf.mxu0
        %v3299 = vadd.f32 %v2632, %v3298
        %3300 = vmatmul.bf16.gmra.mxu0 %v2252
        %v3301 = vpop.f32.mrf.mxu0
        %v3302 = vadd.f32 %v2635, %v3301
        %v3303 = vpop.f32.mrf.mxu0
        %v3304 = vadd.f32 %v2637, %v3303
        %3305 = vmatmul.bf16.gmra.mxu0 %v2254
        %v3306 = vpop.f32.mrf.mxu0
        %v3307 = vadd.f32 %v2640, %v3306
        %v3308 = vpop.f32.mrf.mxu0
        %v3309 = vadd.f32 %v2642, %v3308
        %3310 = vmatmul.bf16.gmra.mxu0 %v2256
        %v3311 = vpop.f32.mrf.mxu0
        %v3312 = vadd.f32 %v2645, %v3311
        %v3313 = vpop.f32.mrf.mxu0
        %v3314 = vadd.f32 %v2647, %v3313
        %3315 = vmatmul.bf16.gmra.mxu0 %v2258
        %v3316 = vpop.f32.mrf.mxu0
        %v3317 = vadd.f32 %v2650, %v3316
        %v3318 = vpop.f32.mrf.mxu0
        %v3319 = vadd.f32 %v2652, %v3318
        %3320 = vmatmul.bf16.gmra.mxu0 %v2260
        %v3321 = vpop.f32.mrf.mxu0
        %v3322 = vadd.f32 %v2655, %v3321
        %v3323 = vpop.f32.mrf.mxu0
        %v3324 = vadd.f32 %v2657, %v3323
        %3325 = vmatmul.bf16.gmra.mxu0 %v2262
        %v3326 = vpop.f32.mrf.mxu0
        %v3327 = vadd.f32 %v2660, %v3326
        %v3328 = vpop.f32.mrf.mxu0
        %v3329 = vadd.f32 %v2662, %v3328
        %3330 = vmatmul.bf16.gmra.mxu0 %v2264
        %v3331 = vpop.f32.mrf.mxu0
        %v3332 = vadd.f32 %v2665, %v3331
        %v3333 = vpop.f32.mrf.mxu0
        %v3334 = vadd.f32 %v2667, %v3333
        %3335 = vmatmul.bf16.gmra.mxu0 %v2266
        %v3336 = vpop.f32.mrf.mxu0
        %v3337 = vadd.f32 %v2670, %v3336
        %v3338 = vpop.f32.mrf.mxu0
        %v3339 = vadd.f32 %v2672, %v3338
        %3340 = vmatmul.bf16.gmra.mxu0 %v2268
        %v3341 = vpop.f32.mrf.mxu0
        %v3342 = vadd.f32 %v2675, %v3341
        %v3343 = vpop.f32.mrf.mxu0
        %v3344 = vadd.f32 %v2677, %v3343
        %3345 = vmatmul.bf16.gmra.mxu0 %v2270
        %v3346 = vpop.f32.mrf.mxu0
        %v3347 = vadd.f32 %v2680, %v3346
        %v3348 = vpop.f32.mrf.mxu0
        %v3349 = vadd.f32 %v2682, %v3348
        %3350 = vmatmul.bf16.gmra.mxu0 %v2272
        %v3351 = vpop.f32.mrf.mxu0
        %v3352 = vadd.f32 %v2685, %v3351
        %v3353 = vpop.f32.mrf.mxu0
        %v3354 = vadd.f32 %v2687, %v3353
        %3355 = vmatmul.bf16.gmra.mxu0 %v2274
        %v3356 = vpop.f32.mrf.mxu0
        %v3357 = vadd.f32 %v2690, %v3356
        %v3358 = vpop.f32.mrf.mxu0
        %v3359 = vadd.f32 %v2692, %v3358
        %3360 = vmatmul.bf16.gmra.mxu0 %v2276
        %v3361 = vpop.f32.mrf.mxu0
        %v3362 = vadd.f32 %v2695, %v3361
        %v3363 = vpop.f32.mrf.mxu0
        %v3364 = vadd.f32 %v2697, %v3363
        %3365 = vmatmul.bf16.gmra.mxu0 %v2278
        %v3366 = vpop.f32.mrf.mxu0
        %v3367 = vadd.f32 %v2700, %v3366
        %v3368 = vpop.f32.mrf.mxu0
        %v3369 = vadd.f32 %v2702, %v3368
        %3370 = vmatmul.bf16.gmra.mxu0 %v2280
        %v3371 = vpop.f32.mrf.mxu0
        %v3372 = vadd.f32 %v2705, %v3371
        %v3373 = vpop.f32.mrf.mxu0
        %v3374 = vadd.f32 %v2707, %v3373
        %3375 = vmatmul.bf16.gmra.mxu0 %v2282
        %v3376 = vpop.f32.mrf.mxu0
        %v3377 = vadd.f32 %v2710, %v3376
        %v3378 = vpop.f32.mrf.mxu0
        %v3379 = vadd.f32 %v2712, %v3378
        %3380 = vmatmul.bf16.gmra.mxu0 %v2284
        %v3381 = vpop.f32.mrf.mxu0
        %v3382 = vadd.f32 %v2715, %v3381
        %v3383 = vpop.f32.mrf.mxu0
        %v3384 = vadd.f32 %v2717, %v3383
        %3385 = vmatmul.bf16.gmra.mxu0 %v2286
        %v3386 = vpop.f32.mrf.mxu0
        %v3387 = vadd.f32 %v2720, %v3386
        %v3388 = vpop.f32.mrf.mxu0
        %v3389 = vadd.f32 %v2722, %v3388
        %3390 = vmatmul.bf16.gmra.mxu0 %v2288
        %v3391 = vpop.f32.mrf.mxu0
        %v3392 = vadd.f32 %v2725, %v3391
        %v3393 = vpop.f32.mrf.mxu0
        %v3394 = vadd.f32 %v2727, %v3393
        %3395 = vmatmul.bf16.gmra.mxu0 %v2290
        %v3396 = vpop.f32.mrf.mxu0
        %v3397 = vadd.f32 %v2730, %v3396
        %v3398 = vpop.f32.mrf.mxu0
        %v3399 = vadd.f32 %v2732, %v3398
        %3400 = vmatmul.bf16.gmra.mxu0 %v2292
        %v3401 = vpop.f32.mrf.mxu0
        %v3402 = vadd.f32 %v2735, %v3401
        %v3403 = vpop.f32.mrf.mxu0
        %v3404 = vadd.f32 %v2737, %v3403
        %3405 = vmatmul.bf16.gmra.mxu0 %v2294
        %v3406 = vpop.f32.mrf.mxu0
        %v3407 = vadd.f32 %v2740, %v3406
        %v3408 = vpop.f32.mrf.mxu0
        %v3409 = vadd.f32 %v2742, %v3408
        %3410 = vmatmul.bf16.gmra.mxu0 %v2296
        %v3411 = vpop.f32.mrf.mxu0
        %v3412 = vadd.f32 %v2745, %v3411
        %v3413 = vpop.f32.mrf.mxu0
        %v3414 = vadd.f32 %v2747, %v3413
        %3415 = vmatmul.bf16.gmra.mxu0 %v2298
        %v3416 = vpop.f32.mrf.mxu0
        %v3417 = vadd.f32 %v2750, %v3416
        %v3418 = vpop.f32.mrf.mxu0
        %v3419 = vadd.f32 %v2752, %v3418
        %3420 = vmatmul.bf16.gmra.mxu0 %v2300
        %v3421 = vpop.f32.mrf.mxu0
        %v3422 = vadd.f32 %v2755, %v3421
        %v3423 = vpop.f32.mrf.mxu0
        %v3424 = vadd.f32 %v2757, %v3423
        %3425 = vmatmul.bf16.gmra.mxu0 %v2302
        %v3426 = vpop.f32.mrf.mxu0
        %v3427 = vadd.f32 %v2760, %v3426
        %v3428 = vpop.f32.mrf.mxu0
        %v3429 = vadd.f32 %v2762, %v3428
        %3430 = vmatmul.bf16.gmra.mxu0 %v2304
        %v3431 = vpop.f32.mrf.mxu0
        %v3432 = vadd.f32 %v2765, %v3431
        %v3433 = vpop.f32.mrf.mxu0
        %v3434 = vadd.f32 %v2767, %v3433
        %3435 = vmatmul.bf16.gmra.mxu0 %v2306
        %v3436 = vpop.f32.mrf.mxu0
        %v3437 = vadd.f32 %v2770, %v3436
        %v3438 = vpop.f32.mrf.mxu0
        %v3439 = vadd.f32 %v2772, %v3438
        %3440 = vdwg.mxu0
        %3441 = vmatpush.bf16.msra.mxu0 %v2901
        %3442 = vmatpush.bf16.msra.mxu0 %v2899
        %3443 = vmatpush.bf16.msra.mxu0 %v2897
        %3444 = vmatpush.bf16.msra.mxu0 %v2895
        %3445 = vmatpush.bf16.msra.mxu0 %v2893
        %3446 = vmatpush.bf16.msra.mxu0 %v2891
        %3447 = vmatpush.bf16.msra.mxu0 %v2889
        %3448 = vmatpush.bf16.msra.mxu0 %v2887
        %3449 = vmatmul.bf16.gmra.mxu0 %v2245
        %v3450 = vpop.f32.mrf.mxu0
        %v3451 = vadd.f32 %v3282, %v3450
        %v3452 = vpop.f32.mrf.mxu0
        %v3453 = vadd.f32 %v3284, %v3452
        %3454 = vmatmul.bf16.gmra.mxu0 %v2247
        %v3455 = vpop.f32.mrf.mxu0
        %v3456 = vadd.f32 %v3287, %v3455
        %v3457 = vpop.f32.mrf.mxu0
        %v3458 = vadd.f32 %v3289, %v3457
        %3459 = vmatmul.bf16.gmra.mxu0 %v2249
        %v3460 = vpop.f32.mrf.mxu0
        %v3461 = vadd.f32 %v3292, %v3460
        %v3462 = vpop.f32.mrf.mxu0
        %v3463 = vadd.f32 %v3294, %v3462
        %3464 = vmatmul.bf16.gmra.mxu0 %v2251
        %v3465 = vpop.f32.mrf.mxu0
        %v3466 = vadd.f32 %v3297, %v3465
        %v3467 = vpop.f32.mrf.mxu0
        %v3468 = vadd.f32 %v3299, %v3467
        %3469 = vmatmul.bf16.gmra.mxu0 %v2253
        %v3470 = vpop.f32.mrf.mxu0
        %v3471 = vadd.f32 %v3302, %v3470
        %v3472 = vpop.f32.mrf.mxu0
        %v3473 = vadd.f32 %v3304, %v3472
        %3474 = vmatmul.bf16.gmra.mxu0 %v2255
        %v3475 = vpop.f32.mrf.mxu0
        %v3476 = vadd.f32 %v3307, %v3475
        %v3477 = vpop.f32.mrf.mxu0
        %v3478 = vadd.f32 %v3309, %v3477
        %3479 = vmatmul.bf16.gmra.mxu0 %v2257
        %v3480 = vpop.f32.mrf.mxu0
        %v3481 = vadd.f32 %v3312, %v3480
        %v3482 = vpop.f32.mrf.mxu0
        %v3483 = vadd.f32 %v3314, %v3482
        %3484 = vmatmul.bf16.gmra.mxu0 %v2259
        %v3485 = vpop.f32.mrf.mxu0
        %v3486 = vadd.f32 %v3317, %v3485
        %v3487 = vpop.f32.mrf.mxu0
        %v3488 = vadd.f32 %v3319, %v3487
        %3489 = vmatmul.bf16.gmra.mxu0 %v2261
        %v3490 = vpop.f32.mrf.mxu0
        %v3491 = vadd.f32 %v3322, %v3490
        %v3492 = vpop.f32.mrf.mxu0
        %v3493 = vadd.f32 %v3324, %v3492
        %3494 = vmatmul.bf16.gmra.mxu0 %v2263
        %v3495 = vpop.f32.mrf.mxu0
        %v3496 = vadd.f32 %v3327, %v3495
        %v3497 = vpop.f32.mrf.mxu0
        %v3498 = vadd.f32 %v3329, %v3497
        %3499 = vmatmul.bf16.gmra.mxu0 %v2265
        %v3500 = vpop.f32.mrf.mxu0
        %v3501 = vadd.f32 %v3332, %v3500
        %v3502 = vpop.f32.mrf.mxu0
        %v3503 = vadd.f32 %v3334, %v3502
        %3504 = vmatmul.bf16.gmra.mxu0 %v2267
        %v3505 = vpop.f32.mrf.mxu0
        %v3506 = vadd.f32 %v3337, %v3505
        %v3507 = vpop.f32.mrf.mxu0
        %v3508 = vadd.f32 %v3339, %v3507
        %3509 = vmatmul.bf16.gmra.mxu0 %v2269
        %v3510 = vpop.f32.mrf.mxu0
        %v3511 = vadd.f32 %v3342, %v3510
        %v3512 = vpop.f32.mrf.mxu0
        %v3513 = vadd.f32 %v3344, %v3512
        %3514 = vmatmul.bf16.gmra.mxu0 %v2271
        %v3515 = vpop.f32.mrf.mxu0
        %v3516 = vadd.f32 %v3347, %v3515
        %v3517 = vpop.f32.mrf.mxu0
        %v3518 = vadd.f32 %v3349, %v3517
        %3519 = vmatmul.bf16.gmra.mxu0 %v2273
        %v3520 = vpop.f32.mrf.mxu0
        %v3521 = vadd.f32 %v3352, %v3520
        %v3522 = vpop.f32.mrf.mxu0
        %v3523 = vadd.f32 %v3354, %v3522
        %3524 = vmatmul.bf16.gmra.mxu0 %v2275
        %v3525 = vpop.f32.mrf.mxu0
        %v3526 = vadd.f32 %v3357, %v3525
        %v3527 = vpop.f32.mrf.mxu0
        %v3528 = vadd.f32 %v3359, %v3527
        %3529 = vmatmul.bf16.gmra.mxu0 %v2277
        %v3530 = vpop.f32.mrf.mxu0
        %v3531 = vadd.f32 %v3362, %v3530
        %v3532 = vpop.f32.mrf.mxu0
        %v3533 = vadd.f32 %v3364, %v3532
        %3534 = vmatmul.bf16.gmra.mxu0 %v2279
        %v3535 = vpop.f32.mrf.mxu0
        %v3536 = vadd.f32 %v3367, %v3535
        %v3537 = vpop.f32.mrf.mxu0
        %v3538 = vadd.f32 %v3369, %v3537
        %3539 = vmatmul.bf16.gmra.mxu0 %v2281
        %v3540 = vpop.f32.mrf.mxu0
        %v3541 = vadd.f32 %v3372, %v3540
        %v3542 = vpop.f32.mrf.mxu0
        %v3543 = vadd.f32 %v3374, %v3542
        %3544 = vmatmul.bf16.gmra.mxu0 %v2283
        %v3545 = vpop.f32.mrf.mxu0
        %v3546 = vadd.f32 %v3377, %v3545
        %v3547 = vpop.f32.mrf.mxu0
        %v3548 = vadd.f32 %v3379, %v3547
        %3549 = vmatmul.bf16.gmra.mxu0 %v2285
        %v3550 = vpop.f32.mrf.mxu0
        %v3551 = vadd.f32 %v3382, %v3550
        %v3552 = vpop.f32.mrf.mxu0
        %v3553 = vadd.f32 %v3384, %v3552
        %3554 = vmatmul.bf16.gmra.mxu0 %v2287
        %v3555 = vpop.f32.mrf.mxu0
        %v3556 = vadd.f32 %v3387, %v3555
        %v3557 = vpop.f32.mrf.mxu0
        %v3558 = vadd.f32 %v3389, %v3557
        %3559 = vmatmul.bf16.gmra.mxu0 %v2289
        %v3560 = vpop.f32.mrf.mxu0
        %v3561 = vadd.f32 %v3392, %v3560
        %v3562 = vpop.f32.mrf.mxu0
        %v3563 = vadd.f32 %v3394, %v3562
        %3564 = vmatmul.bf16.gmra.mxu0 %v2291
        %v3565 = vpop.f32.mrf.mxu0
        %v3566 = vadd.f32 %v3397, %v3565
        %v3567 = vpop.f32.mrf.mxu0
        %v3568 = vadd.f32 %v3399, %v3567
        %3569 = vmatmul.bf16.gmra.mxu0 %v2293
        %v3570 = vpop.f32.mrf.mxu0
        %v3571 = vadd.f32 %v3402, %v3570
        %v3572 = vpop.f32.mrf.mxu0
        %v3573 = vadd.f32 %v3404, %v3572
        %3574 = vmatmul.bf16.gmra.mxu0 %v2295
        %v3575 = vpop.f32.mrf.mxu0
        %v3576 = vadd.f32 %v3407, %v3575
        %v3577 = vpop.f32.mrf.mxu0
        %v3578 = vadd.f32 %v3409, %v3577
        %3579 = vmatmul.bf16.gmra.mxu0 %v2297
        %v3580 = vpop.f32.mrf.mxu0
        %v3581 = vadd.f32 %v3412, %v3580
        %v3582 = vpop.f32.mrf.mxu0
        %v3583 = vadd.f32 %v3414, %v3582
        %3584 = vmatmul.bf16.gmra.mxu0 %v2299
        %v3585 = vpop.f32.mrf.mxu0
        %v3586 = vadd.f32 %v3417, %v3585
        %v3587 = vpop.f32.mrf.mxu0
        %v3588 = vadd.f32 %v3419, %v3587
        %3589 = vmatmul.bf16.gmra.mxu0 %v2301
        %v3590 = vpop.f32.mrf.mxu0
        %v3591 = vadd.f32 %v3422, %v3590
        %v3592 = vpop.f32.mrf.mxu0
        %v3593 = vadd.f32 %v3424, %v3592
        %3594 = vmatmul.bf16.gmra.mxu0 %v2303
        %v3595 = vpop.f32.mrf.mxu0
        %v3596 = vadd.f32 %v3427, %v3595
        %v3597 = vpop.f32.mrf.mxu0
        %v3598 = vadd.f32 %v3429, %v3597
        %3599 = vmatmul.bf16.gmra.mxu0 %v2305
        %v3600 = vpop.f32.mrf.mxu0
        %v3601 = vadd.f32 %v3432, %v3600
        %v3602 = vpop.f32.mrf.mxu0
        %v3603 = vadd.f32 %v3434, %v3602
        %3604 = vmatmul.bf16.gmra.mxu0 %v2307
        %v3605 = vpop.f32.mrf.mxu0
        %v3606 = vadd.f32 %v3437, %v3605
        %v3607 = vpop.f32.mrf.mxu0
        %v3608 = vadd.f32 %v3439, %v3607
        %3609 = vdwg.mxu0
        %s3610 = scalar_lea.vmem %s6, 2
        %v3611 = vld [vmem:[%s3610] ss:$8 sm:$0x3]
        %v3613 = vperm.slane %v3611, 0
        %v3614 = vperm.slane %v3611, 1
        %v3617 = vadd.f32 %v3113, %v3613
        %v3618 = vadd.f32 %v3451, %v3614
        %v3619 = vadd.f32 %v3115, %v3613
        %v3620 = vadd.f32 %v3453, %v3614
        %v3621 = vadd.f32 %v3118, %v3613
        %v3622 = vadd.f32 %v3456, %v3614
        %v3623 = vadd.f32 %v3120, %v3613
        %v3624 = vadd.f32 %v3458, %v3614
        %v3625 = vadd.f32 %v3123, %v3613
        %v3626 = vadd.f32 %v3461, %v3614
        %v3627 = vadd.f32 %v3125, %v3613
        %v3628 = vadd.f32 %v3463, %v3614
        %v3629 = vadd.f32 %v3128, %v3613
        %v3630 = vadd.f32 %v3466, %v3614
        %v3631 = vadd.f32 %v3130, %v3613
        %v3632 = vadd.f32 %v3468, %v3614
        %v3633 = vadd.f32 %v3133, %v3613
        %v3634 = vadd.f32 %v3471, %v3614
        %v3635 = vadd.f32 %v3135, %v3613
        %v3636 = vadd.f32 %v3473, %v3614
        %v3637 = vadd.f32 %v3138, %v3613
        %v3638 = vadd.f32 %v3476, %v3614
        %v3639 = vadd.f32 %v3140, %v3613
        %v3640 = vadd.f32 %v3478, %v3614
        %v3641 = vadd.f32 %v3143, %v3613
        %v3642 = vadd.f32 %v3481, %v3614
        %v3643 = vadd.f32 %v3145, %v3613
        %v3644 = vadd.f32 %v3483, %v3614
        %v3645 = vadd.f32 %v3148, %v3613
        %v3646 = vadd.f32 %v3486, %v3614
        %v3647 = vadd.f32 %v3150, %v3613
        %v3648 = vadd.f32 %v3488, %v3614
        %v3649 = vadd.f32 %v3153, %v3613
        %v3650 = vadd.f32 %v3491, %v3614
        %v3651 = vadd.f32 %v3155, %v3613
        %v3652 = vadd.f32 %v3493, %v3614
        %v3653 = vadd.f32 %v3158, %v3613
        %v3654 = vadd.f32 %v3496, %v3614
        %v3655 = vadd.f32 %v3160, %v3613
        %v3656 = vadd.f32 %v3498, %v3614
        %v3657 = vadd.f32 %v3163, %v3613
        %v3658 = vadd.f32 %v3501, %v3614
        %v3659 = vadd.f32 %v3165, %v3613
        %v3660 = vadd.f32 %v3503, %v3614
        %v3661 = vadd.f32 %v3168, %v3613
        %v3662 = vadd.f32 %v3506, %v3614
        %v3663 = vadd.f32 %v3170, %v3613
        %v3664 = vadd.f32 %v3508, %v3614
        %v3665 = vadd.f32 %v3173, %v3613
        %v3666 = vadd.f32 %v3511, %v3614
        %v3667 = vadd.f32 %v3175, %v3613
        %v3668 = vadd.f32 %v3513, %v3614
        %v3669 = vadd.f32 %v3178, %v3613
        %v3670 = vadd.f32 %v3516, %v3614
        %v3671 = vadd.f32 %v3180, %v3613
        %v3672 = vadd.f32 %v3518, %v3614
        %v3673 = vadd.f32 %v3183, %v3613
        %v3674 = vadd.f32 %v3521, %v3614
        %v3675 = vadd.f32 %v3185, %v3613
        %v3676 = vadd.f32 %v3523, %v3614
        %v3677 = vadd.f32 %v3188, %v3613
        %v3678 = vadd.f32 %v3526, %v3614
        %v3679 = vadd.f32 %v3190, %v3613
        %v3680 = vadd.f32 %v3528, %v3614
        %v3681 = vadd.f32 %v3193, %v3613
        %v3682 = vadd.f32 %v3531, %v3614
        %v3683 = vadd.f32 %v3195, %v3613
        %v3684 = vadd.f32 %v3533, %v3614
        %v3685 = vadd.f32 %v3198, %v3613
        %v3686 = vadd.f32 %v3536, %v3614
        %v3687 = vadd.f32 %v3200, %v3613
        %v3688 = vadd.f32 %v3538, %v3614
        %v3689 = vadd.f32 %v3203, %v3613
        %v3690 = vadd.f32 %v3541, %v3614
        %v3691 = vadd.f32 %v3205, %v3613
        %v3692 = vadd.f32 %v3543, %v3614
        %v3693 = vadd.f32 %v3208, %v3613
        %v3694 = vadd.f32 %v3546, %v3614
        %v3695 = vadd.f32 %v3210, %v3613
        %v3696 = vadd.f32 %v3548, %v3614
        %v3697 = vadd.f32 %v3213, %v3613
        %v3698 = vadd.f32 %v3551, %v3614
        %v3699 = vadd.f32 %v3215, %v3613
        %v3700 = vadd.f32 %v3553, %v3614
        %v3701 = vadd.f32 %v3218, %v3613
        %v3702 = vadd.f32 %v3556, %v3614
        %v3703 = vadd.f32 %v3220, %v3613
        %v3704 = vadd.f32 %v3558, %v3614
        %v3705 = vadd.f32 %v3223, %v3613
        %v3706 = vadd.f32 %v3561, %v3614
        %v3707 = vadd.f32 %v3225, %v3613
        %v3708 = vadd.f32 %v3563, %v3614
        %v3709 = vadd.f32 %v3228, %v3613
        %v3710 = vadd.f32 %v3566, %v3614
        %v3711 = vadd.f32 %v3230, %v3613
        %v3712 = vadd.f32 %v3568, %v3614
        %v3713 = vadd.f32 %v3233, %v3613
        %v3714 = vadd.f32 %v3571, %v3614
        %v3715 = vadd.f32 %v3235, %v3613
        %v3716 = vadd.f32 %v3573, %v3614
        %v3717 = vadd.f32 %v3238, %v3613
        %v3718 = vadd.f32 %v3576, %v3614
        %v3719 = vadd.f32 %v3240, %v3613
        %v3720 = vadd.f32 %v3578, %v3614
        %v3721 = vadd.f32 %v3243, %v3613
        %v3722 = vadd.f32 %v3581, %v3614
        %v3723 = vadd.f32 %v3245, %v3613
        %v3724 = vadd.f32 %v3583, %v3614
        %v3725 = vadd.f32 %v3248, %v3613
        %v3726 = vadd.f32 %v3586, %v3614
        %v3727 = vadd.f32 %v3250, %v3613
        %v3728 = vadd.f32 %v3588, %v3614
        %v3729 = vadd.f32 %v3253, %v3613
        %v3730 = vadd.f32 %v3591, %v3614
        %v3731 = vadd.f32 %v3255, %v3613
        %v3732 = vadd.f32 %v3593, %v3614
        %v3733 = vadd.f32 %v3258, %v3613
        %v3734 = vadd.f32 %v3596, %v3614
        %v3735 = vadd.f32 %v3260, %v3613
        %v3736 = vadd.f32 %v3598, %v3614
        %v3737 = vadd.f32 %v3263, %v3613
        %v3738 = vadd.f32 %v3601, %v3614
        %v3739 = vadd.f32 %v3265, %v3613
        %v3740 = vadd.f32 %v3603, %v3614
        %v3741 = vadd.f32 %v3268, %v3613
        %v3742 = vadd.f32 %v3606, %v3614
        %v3743 = vadd.f32 %v3270, %v3613
        %v3744 = vadd.f32 %v3608, %v3614
        %v3745 = vmax.f32 %v3617, 0.0
        %v3746 = vmax.f32 %v3618, 0.0
        %v3747 = vmax.f32 %v3619, 0.0
        %v3748 = vmax.f32 %v3620, 0.0
        %v3749 = vmax.f32 %v3621, 0.0
        %v3750 = vmax.f32 %v3622, 0.0
        %v3751 = vmax.f32 %v3623, 0.0
        %v3752 = vmax.f32 %v3624, 0.0
        %v3753 = vmax.f32 %v3625, 0.0
        %v3754 = vmax.f32 %v3626, 0.0
        %v3755 = vmax.f32 %v3627, 0.0
        %v3756 = vmax.f32 %v3628, 0.0
        %v3757 = vmax.f32 %v3629, 0.0
        %v3758 = vmax.f32 %v3630, 0.0
        %v3759 = vmax.f32 %v3631, 0.0
        %v3760 = vmax.f32 %v3632, 0.0
        %v3761 = vmax.f32 %v3633, 0.0
        %v3762 = vmax.f32 %v3634, 0.0
        %v3763 = vmax.f32 %v3635, 0.0
        %v3764 = vmax.f32 %v3636, 0.0
        %v3765 = vmax.f32 %v3637, 0.0
        %v3766 = vmax.f32 %v3638, 0.0
        %v3767 = vmax.f32 %v3639, 0.0
        %v3768 = vmax.f32 %v3640, 0.0
        %v3769 = vmax.f32 %v3641, 0.0
        %v3770 = vmax.f32 %v3642, 0.0
        %v3771 = vmax.f32 %v3643, 0.0
        %v3772 = vmax.f32 %v3644, 0.0
        %v3773 = vmax.f32 %v3645, 0.0
        %v3774 = vmax.f32 %v3646, 0.0
        %v3775 = vmax.f32 %v3647, 0.0
        %v3776 = vmax.f32 %v3648, 0.0
        %v3777 = vmax.f32 %v3649, 0.0
        %v3778 = vmax.f32 %v3650, 0.0
        %v3779 = vmax.f32 %v3651, 0.0
        %v3780 = vmax.f32 %v3652, 0.0
        %v3781 = vmax.f32 %v3653, 0.0
        %v3782 = vmax.f32 %v3654, 0.0
        %v3783 = vmax.f32 %v3655, 0.0
        %v3784 = vmax.f32 %v3656, 0.0
        %v3785 = vmax.f32 %v3657, 0.0
        %v3786 = vmax.f32 %v3658, 0.0
        %v3787 = vmax.f32 %v3659, 0.0
        %v3788 = vmax.f32 %v3660, 0.0
        %v3789 = vmax.f32 %v3661, 0.0
        %v3790 = vmax.f32 %v3662, 0.0
        %v3791 = vmax.f32 %v3663, 0.0
        %v3792 = vmax.f32 %v3664, 0.0
        %v3793 = vmax.f32 %v3665, 0.0
        %v3794 = vmax.f32 %v3666, 0.0
        %v3795 = vmax.f32 %v3667, 0.0
        %v3796 = vmax.f32 %v3668, 0.0
        %v3797 = vmax.f32 %v3669, 0.0
        %v3798 = vmax.f32 %v3670, 0.0
        %v3799 = vmax.f32 %v3671, 0.0
        %v3800 = vmax.f32 %v3672, 0.0
        %v3801 = vmax.f32 %v3673, 0.0
        %v3802 = vmax.f32 %v3674, 0.0
        %v3803 = vmax.f32 %v3675, 0.0
        %v3804 = vmax.f32 %v3676, 0.0
        %v3805 = vmax.f32 %v3677, 0.0
        %v3806 = vmax.f32 %v3678, 0.0
        %v3807 = vmax.f32 %v3679, 0.0
        %v3808 = vmax.f32 %v3680, 0.0
        %v3809 = vmax.f32 %v3681, 0.0
        %v3810 = vmax.f32 %v3682, 0.0
        %v3811 = vmax.f32 %v3683, 0.0
        %v3812 = vmax.f32 %v3684, 0.0
        %v3813 = vmax.f32 %v3685, 0.0
        %v3814 = vmax.f32 %v3686, 0.0
        %v3815 = vmax.f32 %v3687, 0.0
        %v3816 = vmax.f32 %v3688, 0.0
        %v3817 = vmax.f32 %v3689, 0.0
        %v3818 = vmax.f32 %v3690, 0.0
        %v3819 = vmax.f32 %v3691, 0.0
        %v3820 = vmax.f32 %v3692, 0.0
        %v3821 = vmax.f32 %v3693, 0.0
        %v3822 = vmax.f32 %v3694, 0.0
        %v3823 = vmax.f32 %v3695, 0.0
        %v3824 = vmax.f32 %v3696, 0.0
        %v3825 = vmax.f32 %v3697, 0.0
        %v3826 = vmax.f32 %v3698, 0.0
        %v3827 = vmax.f32 %v3699, 0.0
        %v3828 = vmax.f32 %v3700, 0.0
        %v3829 = vmax.f32 %v3701, 0.0
        %v3830 = vmax.f32 %v3702, 0.0
        %v3831 = vmax.f32 %v3703, 0.0
        %v3832 = vmax.f32 %v3704, 0.0
        %v3833 = vmax.f32 %v3705, 0.0
        %v3834 = vmax.f32 %v3706, 0.0
        %v3835 = vmax.f32 %v3707, 0.0
        %v3836 = vmax.f32 %v3708, 0.0
        %v3837 = vmax.f32 %v3709, 0.0
        %v3838 = vmax.f32 %v3710, 0.0
        %v3839 = vmax.f32 %v3711, 0.0
        %v3840 = vmax.f32 %v3712, 0.0
        %v3841 = vmax.f32 %v3713, 0.0
        %v3842 = vmax.f32 %v3714, 0.0
        %v3843 = vmax.f32 %v3715, 0.0
        %v3844 = vmax.f32 %v3716, 0.0
        %v3845 = vmax.f32 %v3717, 0.0
        %v3846 = vmax.f32 %v3718, 0.0
        %v3847 = vmax.f32 %v3719, 0.0
        %v3848 = vmax.f32 %v3720, 0.0
        %v3849 = vmax.f32 %v3721, 0.0
        %v3850 = vmax.f32 %v3722, 0.0
        %v3851 = vmax.f32 %v3723, 0.0
        %v3852 = vmax.f32 %v3724, 0.0
        %v3853 = vmax.f32 %v3725, 0.0
        %v3854 = vmax.f32 %v3726, 0.0
        %v3855 = vmax.f32 %v3727, 0.0
        %v3856 = vmax.f32 %v3728, 0.0
        %v3857 = vmax.f32 %v3729, 0.0
        %v3858 = vmax.f32 %v3730, 0.0
        %v3859 = vmax.f32 %v3731, 0.0
        %v3860 = vmax.f32 %v3732, 0.0
        %v3861 = vmax.f32 %v3733, 0.0
        %v3862 = vmax.f32 %v3734, 0.0
        %v3863 = vmax.f32 %v3735, 0.0
        %v3864 = vmax.f32 %v3736, 0.0
        %v3865 = vmax.f32 %v3737, 0.0
        %v3866 = vmax.f32 %v3738, 0.0
        %v3867 = vmax.f32 %v3739, 0.0
        %v3868 = vmax.f32 %v3740, 0.0
        %v3869 = vmax.f32 %v3741, 0.0
        %v3870 = vmax.f32 %v3742, 0.0
        %v3871 = vmax.f32 %v3743, 0.0
        %v3872 = vmax.f32 %v3744, 0.0
        %v3873 = vpack.c.bf16 %v3747, %v3745
        %v3874 = vpack.c.bf16 %v3748, %v3746
        %v3875 = vpack.c.bf16 %v3751, %v3749
        %v3876 = vpack.c.bf16 %v3752, %v3750
        %v3877 = vpack.c.bf16 %v3755, %v3753
        %v3878 = vpack.c.bf16 %v3756, %v3754
        %v3879 = vpack.c.bf16 %v3759, %v3757
        %v3880 = vpack.c.bf16 %v3760, %v3758
        %v3881 = vpack.c.bf16 %v3763, %v3761
        %v3882 = vpack.c.bf16 %v3764, %v3762
        %v3883 = vpack.c.bf16 %v3767, %v3765
        %v3884 = vpack.c.bf16 %v3768, %v3766
        %v3885 = vpack.c.bf16 %v3771, %v3769
        %v3886 = vpack.c.bf16 %v3772, %v3770
        %v3887 = vpack.c.bf16 %v3775, %v3773
        %v3888 = vpack.c.bf16 %v3776, %v3774
        %v3889 = vpack.c.bf16 %v3779, %v3777
        %v3890 = vpack.c.bf16 %v3780, %v3778
        %v3891 = vpack.c.bf16 %v3783, %v3781
        %v3892 = vpack.c.bf16 %v3784, %v3782
        %v3893 = vpack.c.bf16 %v3787, %v3785
        %v3894 = vpack.c.bf16 %v3788, %v3786
        %v3895 = vpack.c.bf16 %v3791, %v3789
        %v3896 = vpack.c.bf16 %v3792, %v3790
        %v3897 = vpack.c.bf16 %v3795, %v3793
        %v3898 = vpack.c.bf16 %v3796, %v3794
        %v3899 = vpack.c.bf16 %v3799, %v3797
        %v3900 = vpack.c.bf16 %v3800, %v3798
        %v3901 = vpack.c.bf16 %v3803, %v3801
        %v3902 = vpack.c.bf16 %v3804, %v3802
        %v3903 = vpack.c.bf16 %v3807, %v3805
        %v3904 = vpack.c.bf16 %v3808, %v3806
        %v3905 = vpack.c.bf16 %v3811, %v3809
        %v3906 = vpack.c.bf16 %v3812, %v3810
        %v3907 = vpack.c.bf16 %v3815, %v3813
        %v3908 = vpack.c.bf16 %v3816, %v3814
        %v3909 = vpack.c.bf16 %v3819, %v3817
        %v3910 = vpack.c.bf16 %v3820, %v3818
        %v3911 = vpack.c.bf16 %v3823, %v3821
        %v3912 = vpack.c.bf16 %v3824, %v3822
        %v3913 = vpack.c.bf16 %v3827, %v3825
        %v3914 = vpack.c.bf16 %v3828, %v3826
        %v3915 = vpack.c.bf16 %v3831, %v3829
        %v3916 = vpack.c.bf16 %v3832, %v3830
        %v3917 = vpack.c.bf16 %v3835, %v3833
        %v3918 = vpack.c.bf16 %v3836, %v3834
        %v3919 = vpack.c.bf16 %v3839, %v3837
        %v3920 = vpack.c.bf16 %v3840, %v3838
        %v3921 = vpack.c.bf16 %v3843, %v3841
        %v3922 = vpack.c.bf16 %v3844, %v3842
        %v3923 = vpack.c.bf16 %v3847, %v3845
        %v3924 = vpack.c.bf16 %v3848, %v3846
        %v3925 = vpack.c.bf16 %v3851, %v3849
        %v3926 = vpack.c.bf16 %v3852, %v3850
        %v3927 = vpack.c.bf16 %v3855, %v3853
        %v3928 = vpack.c.bf16 %v3856, %v3854
        %v3929 = vpack.c.bf16 %v3859, %v3857
        %v3930 = vpack.c.bf16 %v3860, %v3858
        %v3931 = vpack.c.bf16 %v3863, %v3861
        %v3932 = vpack.c.bf16 %v3864, %v3862
        %v3933 = vpack.c.bf16 %v3867, %v3865
        %v3934 = vpack.c.bf16 %v3868, %v3866
        %v3935 = vpack.c.bf16 %v3871, %v3869
        %v3936 = vpack.c.bf16 %v3872, %v3870
        %v3937 = vld [vmem:[#allocation7] sm:$0xf]
        %v3938 = vld [vmem:[#allocation7 + $0x4] sm:$0xf]
        %v3939 = vld [vmem:[#allocation7 + $0x8] sm:$0xf]
        %v3940 = vld [vmem:[#allocation7 + $0xc] sm:$0xf]
        %v3941 = vld [vmem:[#allocation7 + $0x10] sm:$0xf]
        %v3942 = vld [vmem:[#allocation7 + $0x14] sm:$0xf]
        %v3943 = vld [vmem:[#allocation7 + $0x18] sm:$0xf]
        %v3944 = vld [vmem:[#allocation7 + $0x1c] sm:$0xf]
        %v3945 = vld [vmem:[#allocation7 + $0x20] sm:$0xf]
        %v3946 = vld [vmem:[#allocation7 + $0x24] sm:$0xf]
        %v3947 = vld [vmem:[#allocation7 + $0x28] sm:$0xf]
        %v3948 = vld [vmem:[#allocation7 + $0x2c] sm:$0xf]
        %v3949 = vld [vmem:[#allocation7 + $0x30] sm:$0xf]
        %v3950 = vld [vmem:[#allocation7 + $0x34] sm:$0xf]
        %v3951 = vld [vmem:[#allocation7 + $0x38] sm:$0xf]
        %v3952 = vld [vmem:[#allocation7 + $0x3c] sm:$0xf]
        %v3953 = vld [vmem:[#allocation7 + $0x40] sm:$0xf]
        %v3954 = vld [vmem:[#allocation7 + $0x44] sm:$0xf]
        %v3955 = vld [vmem:[#allocation7 + $0x48] sm:$0xf]
        %v3956 = vld [vmem:[#allocation7 + $0x4c] sm:$0xf]
        %v3957 = vld [vmem:[#allocation7 + $0x50] sm:$0xf]
        %v3958 = vld [vmem:[#allocation7 + $0x54] sm:$0xf]
        %v3959 = vld [vmem:[#allocation7 + $0x58] sm:$0xf]
        %v3960 = vld [vmem:[#allocation7 + $0x5c] sm:$0xf]
        %v3961 = vld [vmem:[#allocation7 + $0x60] sm:$0xf]
        %v3962 = vld [vmem:[#allocation7 + $0x64] sm:$0xf]
        %v3963 = vld [vmem:[#allocation7 + $0x68] sm:$0xf]
        %v3964 = vld [vmem:[#allocation7 + $0x6c] sm:$0xf]
        %v3965 = vld [vmem:[#allocation7 + $0x70] sm:$0xf]
        %v3966 = vld [vmem:[#allocation7 + $0x74] sm:$0xf]
        %v3967 = vld [vmem:[#allocation7 + $0x78] sm:$0xf]
        %v3968 = vld [vmem:[#allocation7 + $0x7c] sm:$0xf]
        %v3969 = vld [vmem:[%s6 + $0x3] ss:$0 sm:$0xff]
        %v4002 = vunpack.c.l.b16 %v3937
        %v4003 = vunpack.c.l.b16 %v3938
        %v4004 = vunpack.c.l.b16 %v3939
        %v4005 = vunpack.c.l.b16 %v3940
        %v4006 = vunpack.c.l.b16 %v3941
        %v4007 = vunpack.c.l.b16 %v3942
        %v4008 = vunpack.c.l.b16 %v3943
        %v4009 = vunpack.c.l.b16 %v3944
        %v4010 = vunpack.c.l.b16 %v3945
        %v4011 = vunpack.c.l.b16 %v3946
        %v4012 = vunpack.c.l.b16 %v3947
        %v4013 = vunpack.c.l.b16 %v3948
        %v4014 = vunpack.c.l.b16 %v3949
        %v4015 = vunpack.c.l.b16 %v3950
        %v4016 = vunpack.c.l.b16 %v3951
        %v4017 = vunpack.c.l.b16 %v3952
        %v4018 = vunpack.c.l.b16 %v3953
        %v4019 = vunpack.c.l.b16 %v3954
        %v4020 = vunpack.c.l.b16 %v3955
        %v4021 = vunpack.c.l.b16 %v3956
        %v4022 = vunpack.c.l.b16 %v3957
        %v4023 = vunpack.c.l.b16 %v3958
        %v4024 = vunpack.c.l.b16 %v3959
        %v4025 = vunpack.c.l.b16 %v3960
        %v4026 = vunpack.c.l.b16 %v3961
        %v4027 = vunpack.c.l.b16 %v3962
        %v4028 = vunpack.c.l.b16 %v3963
        %v4029 = vunpack.c.l.b16 %v3964
        %v4030 = vunpack.c.l.b16 %v3965
        %v4031 = vunpack.c.l.b16 %v3966
        %v4032 = vunpack.c.l.b16 %v3967
        %v4033 = vunpack.c.l.b16 %v3968
        %v4034 = vpack.c.b16 %v4003, %v4002
        %v4035 = vpack.c.b16 %v4005, %v4004
        %v4036 = vpack.c.b16 %v4007, %v4006
        %v4037 = vpack.c.b16 %v4009, %v4008
        %v4038 = vpack.c.b16 %v4011, %v4010
        %v4039 = vpack.c.b16 %v4013, %v4012
        %v4040 = vpack.c.b16 %v4015, %v4014
        %v4041 = vpack.c.b16 %v4017, %v4016
        %v4042 = vpack.c.b16 %v4019, %v4018
        %v4043 = vpack.c.b16 %v4021, %v4020
        %v4044 = vpack.c.b16 %v4023, %v4022
        %v4045 = vpack.c.b16 %v4025, %v4024
        %v4046 = vpack.c.b16 %v4027, %v4026
        %v4047 = vpack.c.b16 %v4029, %v4028
        %v4048 = vpack.c.b16 %v4031, %v4030
        %v4049 = vpack.c.b16 %v4033, %v4032
        %4066 = vmatpush.bf16.msra.mxu0 %v4041
        %4067 = vmatpush.bf16.msra.mxu0 %v4040
        %4068 = vmatpush.bf16.msra.mxu0 %v4039
        %4069 = vmatpush.bf16.msra.mxu0 %v4038
        %4070 = vmatpush.bf16.msra.mxu0 %v4037
        %4071 = vmatpush.bf16.msra.mxu0 %v4036
        %4072 = vmatpush.bf16.msra.mxu0 %v4035
        %4073 = vmatpush.bf16.msra.mxu0 %v4034
        %4074 = vmatmul.bf16.gmra.mxu0 %v3873
        %v4075 = vpop.f32.mrf.mxu0
        %v4076 = vadd.f32 %v3969, %v4075
        %v4077 = vpop.f32.mrf.mxu0
        %v4078 = vadd.f32 %v3969, %v4077
        %4079 = vmatmul.bf16.gmra.mxu0 %v3875
        %v4080 = vpop.f32.mrf.mxu0
        %v4081 = vadd.f32 %v3969, %v4080
        %v4082 = vpop.f32.mrf.mxu0
        %v4083 = vadd.f32 %v3969, %v4082
        %4084 = vmatmul.bf16.gmra.mxu0 %v3877
        %v4085 = vpop.f32.mrf.mxu0
        %v4086 = vadd.f32 %v3969, %v4085
        %v4087 = vpop.f32.mrf.mxu0
        %v4088 = vadd.f32 %v3969, %v4087
        %4089 = vmatmul.bf16.gmra.mxu0 %v3879
        %v4090 = vpop.f32.mrf.mxu0
        %v4091 = vadd.f32 %v3969, %v4090
        %v4092 = vpop.f32.mrf.mxu0
        %v4093 = vadd.f32 %v3969, %v4092
        %4094 = vmatmul.bf16.gmra.mxu0 %v3881
        %v4095 = vpop.f32.mrf.mxu0
        %v4096 = vadd.f32 %v3969, %v4095
        %v4097 = vpop.f32.mrf.mxu0
        %v4098 = vadd.f32 %v3969, %v4097
        %4099 = vmatmul.bf16.gmra.mxu0 %v3883
        %v4100 = vpop.f32.mrf.mxu0
        %v4101 = vadd.f32 %v3969, %v4100
        %v4102 = vpop.f32.mrf.mxu0
        %v4103 = vadd.f32 %v3969, %v4102
        %4104 = vmatmul.bf16.gmra.mxu0 %v3885
        %v4105 = vpop.f32.mrf.mxu0
        %v4106 = vadd.f32 %v3969, %v4105
        %v4107 = vpop.f32.mrf.mxu0
        %v4108 = vadd.f32 %v3969, %v4107
        %4109 = vmatmul.bf16.gmra.mxu0 %v3887
        %v4110 = vpop.f32.mrf.mxu0
        %v4111 = vadd.f32 %v3969, %v4110
        %v4112 = vpop.f32.mrf.mxu0
        %v4113 = vadd.f32 %v3969, %v4112
        %4114 = vmatmul.bf16.gmra.mxu0 %v3889
        %v4115 = vpop.f32.mrf.mxu0
        %v4116 = vadd.f32 %v3969, %v4115
        %v4117 = vpop.f32.mrf.mxu0
        %v4118 = vadd.f32 %v3969, %v4117
        %4119 = vmatmul.bf16.gmra.mxu0 %v3891
        %v4120 = vpop.f32.mrf.mxu0
        %v4121 = vadd.f32 %v3969, %v4120
        %v4122 = vpop.f32.mrf.mxu0
        %v4123 = vadd.f32 %v3969, %v4122
        %4124 = vmatmul.bf16.gmra.mxu0 %v3893
        %v4125 = vpop.f32.mrf.mxu0
        %v4126 = vadd.f32 %v3969, %v4125
        %v4127 = vpop.f32.mrf.mxu0
        %v4128 = vadd.f32 %v3969, %v4127
        %4129 = vmatmul.bf16.gmra.mxu0 %v3895
        %v4130 = vpop.f32.mrf.mxu0
        %v4131 = vadd.f32 %v3969, %v4130
        %v4132 = vpop.f32.mrf.mxu0
        %v4133 = vadd.f32 %v3969, %v4132
        %4134 = vmatmul.bf16.gmra.mxu0 %v3897
        %v4135 = vpop.f32.mrf.mxu0
        %v4136 = vadd.f32 %v3969, %v4135
        %v4137 = vpop.f32.mrf.mxu0
        %v4138 = vadd.f32 %v3969, %v4137
        %4139 = vmatmul.bf16.gmra.mxu0 %v3899
        %v4140 = vpop.f32.mrf.mxu0
        %v4141 = vadd.f32 %v3969, %v4140
        %v4142 = vpop.f32.mrf.mxu0
        %v4143 = vadd.f32 %v3969, %v4142
        %4144 = vmatmul.bf16.gmra.mxu0 %v3901
        %v4145 = vpop.f32.mrf.mxu0
        %v4146 = vadd.f32 %v3969, %v4145
        %v4147 = vpop.f32.mrf.mxu0
        %v4148 = vadd.f32 %v3969, %v4147
        %4149 = vmatmul.bf16.gmra.mxu0 %v3903
        %v4150 = vpop.f32.mrf.mxu0
        %v4151 = vadd.f32 %v3969, %v4150
        %v4152 = vpop.f32.mrf.mxu0
        %v4153 = vadd.f32 %v3969, %v4152
        %4154 = vmatmul.bf16.gmra.mxu0 %v3905
        %v4155 = vpop.f32.mrf.mxu0
        %v4156 = vadd.f32 %v3969, %v4155
        %v4157 = vpop.f32.mrf.mxu0
        %v4158 = vadd.f32 %v3969, %v4157
        %4159 = vmatmul.bf16.gmra.mxu0 %v3907
        %v4160 = vpop.f32.mrf.mxu0
        %v4161 = vadd.f32 %v3969, %v4160
        %v4162 = vpop.f32.mrf.mxu0
        %v4163 = vadd.f32 %v3969, %v4162
        %4164 = vmatmul.bf16.gmra.mxu0 %v3909
        %v4165 = vpop.f32.mrf.mxu0
        %v4166 = vadd.f32 %v3969, %v4165
        %v4167 = vpop.f32.mrf.mxu0
        %v4168 = vadd.f32 %v3969, %v4167
        %4169 = vmatmul.bf16.gmra.mxu0 %v3911
        %v4170 = vpop.f32.mrf.mxu0
        %v4171 = vadd.f32 %v3969, %v4170
        %v4172 = vpop.f32.mrf.mxu0
        %v4173 = vadd.f32 %v3969, %v4172
        %4174 = vmatmul.bf16.gmra.mxu0 %v3913
        %v4175 = vpop.f32.mrf.mxu0
        %v4176 = vadd.f32 %v3969, %v4175
        %v4177 = vpop.f32.mrf.mxu0
        %v4178 = vadd.f32 %v3969, %v4177
        %4179 = vmatmul.bf16.gmra.mxu0 %v3915
        %v4180 = vpop.f32.mrf.mxu0
        %v4181 = vadd.f32 %v3969, %v4180
        %v4182 = vpop.f32.mrf.mxu0
        %v4183 = vadd.f32 %v3969, %v4182
        %4184 = vmatmul.bf16.gmra.mxu0 %v3917
        %v4185 = vpop.f32.mrf.mxu0
        %v4186 = vadd.f32 %v3969, %v4185
        %v4187 = vpop.f32.mrf.mxu0
        %v4188 = vadd.f32 %v3969, %v4187
        %4189 = vmatmul.bf16.gmra.mxu0 %v3919
        %v4190 = vpop.f32.mrf.mxu0
        %v4191 = vadd.f32 %v3969, %v4190
        %v4192 = vpop.f32.mrf.mxu0
        %v4193 = vadd.f32 %v3969, %v4192
        %4194 = vmatmul.bf16.gmra.mxu0 %v3921
        %v4195 = vpop.f32.mrf.mxu0
        %v4196 = vadd.f32 %v3969, %v4195
        %v4197 = vpop.f32.mrf.mxu0
        %v4198 = vadd.f32 %v3969, %v4197
        %4199 = vmatmul.bf16.gmra.mxu0 %v3923
        %v4200 = vpop.f32.mrf.mxu0
        %v4201 = vadd.f32 %v3969, %v4200
        %v4202 = vpop.f32.mrf.mxu0
        %v4203 = vadd.f32 %v3969, %v4202
        %4204 = vmatmul.bf16.gmra.mxu0 %v3925
        %v4205 = vpop.f32.mrf.mxu0
        %v4206 = vadd.f32 %v3969, %v4205
        %v4207 = vpop.f32.mrf.mxu0
        %v4208 = vadd.f32 %v3969, %v4207
        %4209 = vmatmul.bf16.gmra.mxu0 %v3927
        %v4210 = vpop.f32.mrf.mxu0
        %v4211 = vadd.f32 %v3969, %v4210
        %v4212 = vpop.f32.mrf.mxu0
        %v4213 = vadd.f32 %v3969, %v4212
        %4214 = vmatmul.bf16.gmra.mxu0 %v3929
        %v4215 = vpop.f32.mrf.mxu0
        %v4216 = vadd.f32 %v3969, %v4215
        %v4217 = vpop.f32.mrf.mxu0
        %v4218 = vadd.f32 %v3969, %v4217
        %4219 = vmatmul.bf16.gmra.mxu0 %v3931
        %v4220 = vpop.f32.mrf.mxu0
        %v4221 = vadd.f32 %v3969, %v4220
        %v4222 = vpop.f32.mrf.mxu0
        %v4223 = vadd.f32 %v3969, %v4222
        %4224 = vmatmul.bf16.gmra.mxu0 %v3933
        %v4225 = vpop.f32.mrf.mxu0
        %v4226 = vadd.f32 %v3969, %v4225
        %v4227 = vpop.f32.mrf.mxu0
        %v4228 = vadd.f32 %v3969, %v4227
        %4229 = vmatmul.bf16.gmra.mxu0 %v3935
        %v4230 = vpop.f32.mrf.mxu0
        %v4231 = vadd.f32 %v3969, %v4230
        %v4232 = vpop.f32.mrf.mxu0
        %v4233 = vadd.f32 %v3969, %v4232
        %4234 = vdwg.mxu0
        %4235 = vmatpush.bf16.msra.mxu0 %v4049
        %4236 = vmatpush.bf16.msra.mxu0 %v4048
        %4237 = vmatpush.bf16.msra.mxu0 %v4047
        %4238 = vmatpush.bf16.msra.mxu0 %v4046
        %4239 = vmatpush.bf16.msra.mxu0 %v4045
        %4240 = vmatpush.bf16.msra.mxu0 %v4044
        %4241 = vmatpush.bf16.msra.mxu0 %v4043
        %4242 = vmatpush.bf16.msra.mxu0 %v4042
        %4243 = vmatmul.bf16.gmra.mxu0 %v3874
        %v4244 = vpop.f32.mrf.mxu0
        %v4245 = vadd.f32 %v4076, %v4244
        %v4246 = vpop.f32.mrf.mxu0
        %v4247 = vadd.f32 %v4078, %v4246
        %4248 = vmatmul.bf16.gmra.mxu0 %v3876
        %v4249 = vpop.f32.mrf.mxu0
        %v4250 = vadd.f32 %v4081, %v4249
        %v4251 = vpop.f32.mrf.mxu0
        %v4252 = vadd.f32 %v4083, %v4251
        %4253 = vmatmul.bf16.gmra.mxu0 %v3878
        %v4254 = vpop.f32.mrf.mxu0
        %v4255 = vadd.f32 %v4086, %v4254
        %v4256 = vpop.f32.mrf.mxu0
        %v4257 = vadd.f32 %v4088, %v4256
        %4258 = vmatmul.bf16.gmra.mxu0 %v3880
        %v4259 = vpop.f32.mrf.mxu0
        %v4260 = vadd.f32 %v4091, %v4259
        %v4261 = vpop.f32.mrf.mxu0
        %v4262 = vadd.f32 %v4093, %v4261
        %4263 = vmatmul.bf16.gmra.mxu0 %v3882
        %v4264 = vpop.f32.mrf.mxu0
        %v4265 = vadd.f32 %v4096, %v4264
        %v4266 = vpop.f32.mrf.mxu0
        %v4267 = vadd.f32 %v4098, %v4266
        %4268 = vmatmul.bf16.gmra.mxu0 %v3884
        %v4269 = vpop.f32.mrf.mxu0
        %v4270 = vadd.f32 %v4101, %v4269
        %v4271 = vpop.f32.mrf.mxu0
        %v4272 = vadd.f32 %v4103, %v4271
        %4273 = vmatmul.bf16.gmra.mxu0 %v3886
        %v4274 = vpop.f32.mrf.mxu0
        %v4275 = vadd.f32 %v4106, %v4274
        %v4276 = vpop.f32.mrf.mxu0
        %v4277 = vadd.f32 %v4108, %v4276
        %4278 = vmatmul.bf16.gmra.mxu0 %v3888
        %v4279 = vpop.f32.mrf.mxu0
        %v4280 = vadd.f32 %v4111, %v4279
        %v4281 = vpop.f32.mrf.mxu0
        %v4282 = vadd.f32 %v4113, %v4281
        %4283 = vmatmul.bf16.gmra.mxu0 %v3890
        %v4284 = vpop.f32.mrf.mxu0
        %v4285 = vadd.f32 %v4116, %v4284
        %v4286 = vpop.f32.mrf.mxu0
        %v4287 = vadd.f32 %v4118, %v4286
        %4288 = vmatmul.bf16.gmra.mxu0 %v3892
        %v4289 = vpop.f32.mrf.mxu0
        %v4290 = vadd.f32 %v4121, %v4289
        %v4291 = vpop.f32.mrf.mxu0
        %v4292 = vadd.f32 %v4123, %v4291
        %4293 = vmatmul.bf16.gmra.mxu0 %v3894
        %v4294 = vpop.f32.mrf.mxu0
        %v4295 = vadd.f32 %v4126, %v4294
        %v4296 = vpop.f32.mrf.mxu0
        %v4297 = vadd.f32 %v4128, %v4296
        %4298 = vmatmul.bf16.gmra.mxu0 %v3896
        %v4299 = vpop.f32.mrf.mxu0
        %v4300 = vadd.f32 %v4131, %v4299
        %v4301 = vpop.f32.mrf.mxu0
        %v4302 = vadd.f32 %v4133, %v4301
        %4303 = vmatmul.bf16.gmra.mxu0 %v3898
        %v4304 = vpop.f32.mrf.mxu0
        %v4305 = vadd.f32 %v4136, %v4304
        %v4306 = vpop.f32.mrf.mxu0
        %v4307 = vadd.f32 %v4138, %v4306
        %4308 = vmatmul.bf16.gmra.mxu0 %v3900
        %v4309 = vpop.f32.mrf.mxu0
        %v4310 = vadd.f32 %v4141, %v4309
        %v4311 = vpop.f32.mrf.mxu0
        %v4312 = vadd.f32 %v4143, %v4311
        %4313 = vmatmul.bf16.gmra.mxu0 %v3902
        %v4314 = vpop.f32.mrf.mxu0
        %v4315 = vadd.f32 %v4146, %v4314
        %v4316 = vpop.f32.mrf.mxu0
        %v4317 = vadd.f32 %v4148, %v4316
        %4318 = vmatmul.bf16.gmra.mxu0 %v3904
        %v4319 = vpop.f32.mrf.mxu0
        %v4320 = vadd.f32 %v4151, %v4319
        %v4321 = vpop.f32.mrf.mxu0
        %v4322 = vadd.f32 %v4153, %v4321
        %4323 = vmatmul.bf16.gmra.mxu0 %v3906
        %v4324 = vpop.f32.mrf.mxu0
        %v4325 = vadd.f32 %v4156, %v4324
        %v4326 = vpop.f32.mrf.mxu0
        %v4327 = vadd.f32 %v4158, %v4326
        %4328 = vmatmul.bf16.gmra.mxu0 %v3908
        %v4329 = vpop.f32.mrf.mxu0
        %v4330 = vadd.f32 %v4161, %v4329
        %v4331 = vpop.f32.mrf.mxu0
        %v4332 = vadd.f32 %v4163, %v4331
        %4333 = vmatmul.bf16.gmra.mxu0 %v3910
        %v4334 = vpop.f32.mrf.mxu0
        %v4335 = vadd.f32 %v4166, %v4334
        %v4336 = vpop.f32.mrf.mxu0
        %v4337 = vadd.f32 %v4168, %v4336
        %4338 = vmatmul.bf16.gmra.mxu0 %v3912
        %v4339 = vpop.f32.mrf.mxu0
        %v4340 = vadd.f32 %v4171, %v4339
        %v4341 = vpop.f32.mrf.mxu0
        %v4342 = vadd.f32 %v4173, %v4341
        %4343 = vmatmul.bf16.gmra.mxu0 %v3914
        %v4344 = vpop.f32.mrf.mxu0
        %v4345 = vadd.f32 %v4176, %v4344
        %v4346 = vpop.f32.mrf.mxu0
        %v4347 = vadd.f32 %v4178, %v4346
        %4348 = vmatmul.bf16.gmra.mxu0 %v3916
        %v4349 = vpop.f32.mrf.mxu0
        %v4350 = vadd.f32 %v4181, %v4349
        %v4351 = vpop.f32.mrf.mxu0
        %v4352 = vadd.f32 %v4183, %v4351
        %4353 = vmatmul.bf16.gmra.mxu0 %v3918
        %v4354 = vpop.f32.mrf.mxu0
        %v4355 = vadd.f32 %v4186, %v4354
        %v4356 = vpop.f32.mrf.mxu0
        %v4357 = vadd.f32 %v4188, %v4356
        %4358 = vmatmul.bf16.gmra.mxu0 %v3920
        %v4359 = vpop.f32.mrf.mxu0
        %v4360 = vadd.f32 %v4191, %v4359
        %v4361 = vpop.f32.mrf.mxu0
        %v4362 = vadd.f32 %v4193, %v4361
        %4363 = vmatmul.bf16.gmra.mxu0 %v3922
        %v4364 = vpop.f32.mrf.mxu0
        %v4365 = vadd.f32 %v4196, %v4364
        %v4366 = vpop.f32.mrf.mxu0
        %v4367 = vadd.f32 %v4198, %v4366
        %4368 = vmatmul.bf16.gmra.mxu0 %v3924
        %v4369 = vpop.f32.mrf.mxu0
        %v4370 = vadd.f32 %v4201, %v4369
        %v4371 = vpop.f32.mrf.mxu0
        %v4372 = vadd.f32 %v4203, %v4371
        %4373 = vmatmul.bf16.gmra.mxu0 %v3926
        %v4374 = vpop.f32.mrf.mxu0
        %v4375 = vadd.f32 %v4206, %v4374
        %v4376 = vpop.f32.mrf.mxu0
        %v4377 = vadd.f32 %v4208, %v4376
        %4378 = vmatmul.bf16.gmra.mxu0 %v3928
        %v4379 = vpop.f32.mrf.mxu0
        %v4380 = vadd.f32 %v4211, %v4379
        %v4381 = vpop.f32.mrf.mxu0
        %v4382 = vadd.f32 %v4213, %v4381
        %4383 = vmatmul.bf16.gmra.mxu0 %v3930
        %v4384 = vpop.f32.mrf.mxu0
        %v4385 = vadd.f32 %v4216, %v4384
        %v4386 = vpop.f32.mrf.mxu0
        %v4387 = vadd.f32 %v4218, %v4386
        %4388 = vmatmul.bf16.gmra.mxu0 %v3932
        %v4389 = vpop.f32.mrf.mxu0
        %v4390 = vadd.f32 %v4221, %v4389
        %v4391 = vpop.f32.mrf.mxu0
        %v4392 = vadd.f32 %v4223, %v4391
        %4393 = vmatmul.bf16.gmra.mxu0 %v3934
        %v4394 = vpop.f32.mrf.mxu0
        %v4395 = vadd.f32 %v4226, %v4394
        %v4396 = vpop.f32.mrf.mxu0
        %v4397 = vadd.f32 %v4228, %v4396
        %4398 = vmatmul.bf16.gmra.mxu0 %v3936
        %v4399 = vpop.f32.mrf.mxu0
        %v4400 = vadd.f32 %v4231, %v4399
        %v4401 = vpop.f32.mrf.mxu0
        %v4402 = vadd.f32 %v4233, %v4401
        %4403 = vdwg.mxu0
        %v4404 = vmax.f32 %v4245, 0.0
        %v4405 = vmax.f32 %v4247, 0.0
        %v4406 = vmax.f32 %v4250, 0.0
        %v4407 = vmax.f32 %v4252, 0.0
        %v4408 = vmax.f32 %v4255, 0.0
        %v4409 = vmax.f32 %v4257, 0.0
        %v4410 = vmax.f32 %v4260, 0.0
        %v4411 = vmax.f32 %v4262, 0.0
        %v4412 = vmax.f32 %v4265, 0.0
        %v4413 = vmax.f32 %v4267, 0.0
        %v4414 = vmax.f32 %v4270, 0.0
        %v4415 = vmax.f32 %v4272, 0.0
        %v4416 = vmax.f32 %v4275, 0.0
        %v4417 = vmax.f32 %v4277, 0.0
        %v4418 = vmax.f32 %v4280, 0.0
        %v4419 = vmax.f32 %v4282, 0.0
        %v4420 = vmax.f32 %v4285, 0.0
        %v4421 = vmax.f32 %v4287, 0.0
        %v4422 = vmax.f32 %v4290, 0.0
        %v4423 = vmax.f32 %v4292, 0.0
        %v4424 = vmax.f32 %v4295, 0.0
        %v4425 = vmax.f32 %v4297, 0.0
        %v4426 = vmax.f32 %v4300, 0.0
        %v4427 = vmax.f32 %v4302, 0.0
        %v4428 = vmax.f32 %v4305, 0.0
        %v4429 = vmax.f32 %v4307, 0.0
        %v4430 = vmax.f32 %v4310, 0.0
        %v4431 = vmax.f32 %v4312, 0.0
        %v4432 = vmax.f32 %v4315, 0.0
        %v4433 = vmax.f32 %v4317, 0.0
        %v4434 = vmax.f32 %v4320, 0.0
        %v4435 = vmax.f32 %v4322, 0.0
        %v4436 = vmax.f32 %v4325, 0.0
        %v4437 = vmax.f32 %v4327, 0.0
        %v4438 = vmax.f32 %v4330, 0.0
        %v4439 = vmax.f32 %v4332, 0.0
        %v4440 = vmax.f32 %v4335, 0.0
        %v4441 = vmax.f32 %v4337, 0.0
        %v4442 = vmax.f32 %v4340, 0.0
        %v4443 = vmax.f32 %v4342, 0.0
        %v4444 = vmax.f32 %v4345, 0.0
        %v4445 = vmax.f32 %v4347, 0.0
        %v4446 = vmax.f32 %v4350, 0.0
        %v4447 = vmax.f32 %v4352, 0.0
        %v4448 = vmax.f32 %v4355, 0.0
        %v4449 = vmax.f32 %v4357, 0.0
        %v4450 = vmax.f32 %v4360, 0.0
        %v4451 = vmax.f32 %v4362, 0.0
        %v4452 = vmax.f32 %v4365, 0.0
        %v4453 = vmax.f32 %v4367, 0.0
        %v4454 = vmax.f32 %v4370, 0.0
        %v4455 = vmax.f32 %v4372, 0.0
        %v4456 = vmax.f32 %v4375, 0.0
        %v4457 = vmax.f32 %v4377, 0.0
        %v4458 = vmax.f32 %v4380, 0.0
        %v4459 = vmax.f32 %v4382, 0.0
        %v4460 = vmax.f32 %v4385, 0.0
        %v4461 = vmax.f32 %v4387, 0.0
        %v4462 = vmax.f32 %v4390, 0.0
        %v4463 = vmax.f32 %v4392, 0.0
        %v4464 = vmax.f32 %v4395, 0.0
        %v4465 = vmax.f32 %v4397, 0.0
        %v4466 = vmax.f32 %v4400, 0.0
        %v4467 = vmax.f32 %v4402, 0.0
        %v4468 = vpack.c.bf16 %v4405, %v4404
        %v4469 = vpack.c.bf16 %v4407, %v4406
        %v4470 = vpack.c.bf16 %v4409, %v4408
        %v4471 = vpack.c.bf16 %v4411, %v4410
        %v4472 = vpack.c.bf16 %v4413, %v4412
        %v4473 = vpack.c.bf16 %v4415, %v4414
        %v4474 = vpack.c.bf16 %v4417, %v4416
        %v4475 = vpack.c.bf16 %v4419, %v4418
        %v4476 = vpack.c.bf16 %v4421, %v4420
        %v4477 = vpack.c.bf16 %v4423, %v4422
        %v4478 = vpack.c.bf16 %v4425, %v4424
        %v4479 = vpack.c.bf16 %v4427, %v4426
        %v4480 = vpack.c.bf16 %v4429, %v4428
        %v4481 = vpack.c.bf16 %v4431, %v4430
        %v4482 = vpack.c.bf16 %v4433, %v4432
        %v4483 = vpack.c.bf16 %v4435, %v4434
        %v4484 = vpack.c.bf16 %v4437, %v4436
        %v4485 = vpack.c.bf16 %v4439, %v4438
        %v4486 = vpack.c.bf16 %v4441, %v4440
        %v4487 = vpack.c.bf16 %v4443, %v4442
        %v4488 = vpack.c.bf16 %v4445, %v4444
        %v4489 = vpack.c.bf16 %v4447, %v4446
        %v4490 = vpack.c.bf16 %v4449, %v4448
        %v4491 = vpack.c.bf16 %v4451, %v4450
        %v4492 = vpack.c.bf16 %v4453, %v4452
        %v4493 = vpack.c.bf16 %v4455, %v4454
        %v4494 = vpack.c.bf16 %v4457, %v4456
        %v4495 = vpack.c.bf16 %v4459, %v4458
        %v4496 = vpack.c.bf16 %v4461, %v4460
        %v4497 = vpack.c.bf16 %v4463, %v4462
        %v4498 = vpack.c.bf16 %v4465, %v4464
        %v4499 = vpack.c.bf16 %v4467, %v4466
        %v4500 = vld [vmem:[%s5] sm:$0xf]
        %v4501 = vld [vmem:[%s5 + $0x4] sm:$0xf]
        %v4502 = vld [vmem:[%s5 + $0x8] sm:$0xf]
        %v4503 = vld [vmem:[%s5 + $0xc] sm:$0xf]
        %v4504 = vld [vmem:[%s5 + $0x10] sm:$0xf]
        %v4505 = vld [vmem:[%s5 + $0x14] sm:$0xf]
        %v4506 = vld [vmem:[%s5 + $0x18] sm:$0xf]
        %v4507 = vld [vmem:[%s5 + $0x1c] sm:$0xf]
        %v4508 = vld [vmem:[%s5 + $0x20] sm:$0xf]
        %v4509 = vld [vmem:[%s5 + $0x24] sm:$0xf]
        %v4510 = vld [vmem:[%s5 + $0x28] sm:$0xf]
        %v4511 = vld [vmem:[%s5 + $0x2c] sm:$0xf]
        %v4512 = vld [vmem:[%s5 + $0x30] sm:$0xf]
        %v4513 = vld [vmem:[%s5 + $0x34] sm:$0xf]
        %v4514 = vld [vmem:[%s5 + $0x38] sm:$0xf]
        %v4515 = vld [vmem:[%s5 + $0x3c] sm:$0xf]
        %v4516 = vld [vmem:[%s5 + $0x40] sm:$0xf]
        %v4517 = vld [vmem:[%s5 + $0x44] sm:$0xf]
        %v4518 = vld [vmem:[%s5 + $0x48] sm:$0xf]
        %v4519 = vld [vmem:[%s5 + $0x4c] sm:$0xf]
        %v4520 = vld [vmem:[%s5 + $0x50] sm:$0xf]
        %v4521 = vld [vmem:[%s5 + $0x54] sm:$0xf]
        %v4522 = vld [vmem:[%s5 + $0x58] sm:$0xf]
        %v4523 = vld [vmem:[%s5 + $0x5c] sm:$0xf]
        %v4524 = vld [vmem:[%s5 + $0x60] sm:$0xf]
        %v4525 = vld [vmem:[%s5 + $0x64] sm:$0xf]
        %v4526 = vld [vmem:[%s5 + $0x68] sm:$0xf]
        %v4527 = vld [vmem:[%s5 + $0x6c] sm:$0xf]
        %v4528 = vld [vmem:[%s5 + $0x70] sm:$0xf]
        %v4529 = vld [vmem:[%s5 + $0x74] sm:$0xf]
        %v4530 = vld [vmem:[%s5 + $0x78] sm:$0xf]
        %v4531 = vld [vmem:[%s5 + $0x7c] sm:$0xf]
        %v4532 = vld [vmem:[%s5 + $0x80] sm:$0xf]
        %v4533 = vld [vmem:[%s5 + $0x84] sm:$0xf]
        %v4534 = vld [vmem:[%s5 + $0x88] sm:$0xf]
        %v4535 = vld [vmem:[%s5 + $0x8c] sm:$0xf]
        %v4536 = vld [vmem:[%s5 + $0x90] sm:$0xf]
        %v4537 = vld [vmem:[%s5 + $0x94] sm:$0xf]
        %v4538 = vld [vmem:[%s5 + $0x98] sm:$0xf]
        %v4539 = vld [vmem:[%s5 + $0x9c] sm:$0xf]
        %v4540 = vld [vmem:[%s5 + $0xa0] sm:$0xf]
        %v4541 = vld [vmem:[%s5 + $0xa4] sm:$0xf]
        %v4542 = vld [vmem:[%s5 + $0xa8] sm:$0xf]
        %v4543 = vld [vmem:[%s5 + $0xac] sm:$0xf]
        %v4544 = vld [vmem:[%s5 + $0xb0] sm:$0xf]
        %v4545 = vld [vmem:[%s5 + $0xb4] sm:$0xf]
        %v4546 = vld [vmem:[%s5 + $0xb8] sm:$0xf]
        %v4547 = vld [vmem:[%s5 + $0xbc] sm:$0xf]
        %v4564 = vunpack.c.l.b16 %v4532
        %v4565 = vunpack.c.l.b16 %v4533
        %v4566 = vunpack.c.l.b16 %v4534
        %v4567 = vunpack.c.l.b16 %v4535
        %v4568 = vunpack.c.l.b16 %v4536
        %v4569 = vunpack.c.l.b16 %v4537
        %v4570 = vunpack.c.l.b16 %v4538
        %v4571 = vunpack.c.l.b16 %v4539
        %v4572 = vunpack.c.l.b16 %v4540
        %v4573 = vunpack.c.l.b16 %v4541
        %v4574 = vunpack.c.l.b16 %v4542
        %v4575 = vunpack.c.l.b16 %v4543
        %v4576 = vunpack.c.l.b16 %v4544
        %v4577 = vunpack.c.l.b16 %v4545
        %v4578 = vunpack.c.l.b16 %v4546
        %v4579 = vunpack.c.l.b16 %v4547
        %v4580 = vpack.c.b16 %v4565, %v4564
        %v4581 = vpack.c.b16 %v4567, %v4566
        %v4582 = vpack.c.b16 %v4569, %v4568
        %v4583 = vpack.c.b16 %v4571, %v4570
        %v4584 = vpack.c.b16 %v4573, %v4572
        %v4585 = vpack.c.b16 %v4575, %v4574
        %v4586 = vpack.c.b16 %v4577, %v4576
        %v4587 = vpack.c.b16 %v4579, %v4578
        %4596 = vmatpush.bf16.msra.mxu0 %v4587
        %4597 = vmatpush.bf16.msra.mxu0 %v4586
        %4598 = vmatpush.bf16.msra.mxu0 %v4585
        %4599 = vmatpush.bf16.msra.mxu0 %v4584
        %4600 = vmatpush.bf16.msra.mxu0 %v4583
        %4601 = vmatpush.bf16.msra.mxu0 %v4582
        %4602 = vmatpush.bf16.msra.mxu0 %v4581
        %4603 = vmatpush.bf16.msra.mxu0 %v4580
        %4604 = vmatmul.bf16.gmra.mxu0 %v4468
        %v4605 = vpop.f32.mrf.mxu0
        %v4606 = vadd.f32 0.0, %v4605
        %v4607 = vpop.f32.mrf.mxu0
        %v4608 = vadd.f32 0.0, %v4607
        %4609 = vmatmul.bf16.gmra.mxu0 %v4469
        %v4610 = vpop.f32.mrf.mxu0
        %v4611 = vadd.f32 0.0, %v4610
        %v4612 = vpop.f32.mrf.mxu0
        %v4613 = vadd.f32 0.0, %v4612
        %4614 = vmatmul.bf16.gmra.mxu0 %v4470
        %v4615 = vpop.f32.mrf.mxu0
        %v4616 = vadd.f32 0.0, %v4615
        %v4617 = vpop.f32.mrf.mxu0
        %v4618 = vadd.f32 0.0, %v4617
        %4619 = vmatmul.bf16.gmra.mxu0 %v4471
        %v4620 = vpop.f32.mrf.mxu0
        %v4621 = vadd.f32 0.0, %v4620
        %v4622 = vpop.f32.mrf.mxu0
        %v4623 = vadd.f32 0.0, %v4622
        %4624 = vmatmul.bf16.gmra.mxu0 %v4472
        %v4625 = vpop.f32.mrf.mxu0
        %v4626 = vadd.f32 0.0, %v4625
        %v4627 = vpop.f32.mrf.mxu0
        %v4628 = vadd.f32 0.0, %v4627
        %4629 = vmatmul.bf16.gmra.mxu0 %v4473
        %v4630 = vpop.f32.mrf.mxu0
        %v4631 = vadd.f32 0.0, %v4630
        %v4632 = vpop.f32.mrf.mxu0
        %v4633 = vadd.f32 0.0, %v4632
        %4634 = vmatmul.bf16.gmra.mxu0 %v4474
        %v4635 = vpop.f32.mrf.mxu0
        %v4636 = vadd.f32 0.0, %v4635
        %v4637 = vpop.f32.mrf.mxu0
        %v4638 = vadd.f32 0.0, %v4637
        %4639 = vmatmul.bf16.gmra.mxu0 %v4475
        %v4640 = vpop.f32.mrf.mxu0
        %v4641 = vadd.f32 0.0, %v4640
        %v4642 = vpop.f32.mrf.mxu0
        %v4643 = vadd.f32 0.0, %v4642
        %4644 = vmatmul.bf16.gmra.mxu0 %v4476
        %v4645 = vpop.f32.mrf.mxu0
        %v4646 = vadd.f32 0.0, %v4645
        %v4647 = vpop.f32.mrf.mxu0
        %v4648 = vadd.f32 0.0, %v4647
        %4649 = vmatmul.bf16.gmra.mxu0 %v4477
        %v4650 = vpop.f32.mrf.mxu0
        %v4651 = vadd.f32 0.0, %v4650
        %v4652 = vpop.f32.mrf.mxu0
        %v4653 = vadd.f32 0.0, %v4652
        %4654 = vmatmul.bf16.gmra.mxu0 %v4478
        %v4655 = vpop.f32.mrf.mxu0
        %v4656 = vadd.f32 0.0, %v4655
        %v4657 = vpop.f32.mrf.mxu0
        %v4658 = vadd.f32 0.0, %v4657
        %4659 = vmatmul.bf16.gmra.mxu0 %v4479
        %v4660 = vpop.f32.mrf.mxu0
        %v4661 = vadd.f32 0.0, %v4660
        %v4662 = vpop.f32.mrf.mxu0
        %v4663 = vadd.f32 0.0, %v4662
        %4664 = vmatmul.bf16.gmra.mxu0 %v4480
        %v4665 = vpop.f32.mrf.mxu0
        %v4666 = vadd.f32 0.0, %v4665
        %v4667 = vpop.f32.mrf.mxu0
        %v4668 = vadd.f32 0.0, %v4667
        %4669 = vmatmul.bf16.gmra.mxu0 %v4481
        %v4670 = vpop.f32.mrf.mxu0
        %v4671 = vadd.f32 0.0, %v4670
        %v4672 = vpop.f32.mrf.mxu0
        %v4673 = vadd.f32 0.0, %v4672
        %4674 = vmatmul.bf16.gmra.mxu0 %v4482
        %v4675 = vpop.f32.mrf.mxu0
        %v4676 = vadd.f32 0.0, %v4675
        %v4677 = vpop.f32.mrf.mxu0
        %v4678 = vadd.f32 0.0, %v4677
        %4679 = vmatmul.bf16.gmra.mxu0 %v4483
        %v4680 = vpop.f32.mrf.mxu0
        %v4681 = vadd.f32 0.0, %v4680
        %v4682 = vpop.f32.mrf.mxu0
        %v4683 = vadd.f32 0.0, %v4682
        %4684 = vmatmul.bf16.gmra.mxu0 %v4484
        %v4685 = vpop.f32.mrf.mxu0
        %v4686 = vadd.f32 0.0, %v4685
        %v4687 = vpop.f32.mrf.mxu0
        %v4688 = vadd.f32 0.0, %v4687
        %4689 = vmatmul.bf16.gmra.mxu0 %v4485
        %v4690 = vpop.f32.mrf.mxu0
        %v4691 = vadd.f32 0.0, %v4690
        %v4692 = vpop.f32.mrf.mxu0
        %v4693 = vadd.f32 0.0, %v4692
        %4694 = vmatmul.bf16.gmra.mxu0 %v4486
        %v4695 = vpop.f32.mrf.mxu0
        %v4696 = vadd.f32 0.0, %v4695
        %v4697 = vpop.f32.mrf.mxu0
        %v4698 = vadd.f32 0.0, %v4697
        %4699 = vmatmul.bf16.gmra.mxu0 %v4487
        %v4700 = vpop.f32.mrf.mxu0
        %v4701 = vadd.f32 0.0, %v4700
        %v4702 = vpop.f32.mrf.mxu0
        %v4703 = vadd.f32 0.0, %v4702
        %4704 = vmatmul.bf16.gmra.mxu0 %v4488
        %v4705 = vpop.f32.mrf.mxu0
        %v4706 = vadd.f32 0.0, %v4705
        %v4707 = vpop.f32.mrf.mxu0
        %v4708 = vadd.f32 0.0, %v4707
        %4709 = vmatmul.bf16.gmra.mxu0 %v4489
        %v4710 = vpop.f32.mrf.mxu0
        %v4711 = vadd.f32 0.0, %v4710
        %v4712 = vpop.f32.mrf.mxu0
        %v4713 = vadd.f32 0.0, %v4712
        %4714 = vmatmul.bf16.gmra.mxu0 %v4490
        %v4715 = vpop.f32.mrf.mxu0
        %v4716 = vadd.f32 0.0, %v4715
        %v4717 = vpop.f32.mrf.mxu0
        %v4718 = vadd.f32 0.0, %v4717
        %4719 = vmatmul.bf16.gmra.mxu0 %v4491
        %v4720 = vpop.f32.mrf.mxu0
        %v4721 = vadd.f32 0.0, %v4720
        %v4722 = vpop.f32.mrf.mxu0
        %v4723 = vadd.f32 0.0, %v4722
        %4724 = vmatmul.bf16.gmra.mxu0 %v4492
        %v4725 = vpop.f32.mrf.mxu0
        %v4726 = vadd.f32 0.0, %v4725
        %v4727 = vpop.f32.mrf.mxu0
        %v4728 = vadd.f32 0.0, %v4727
        %4729 = vmatmul.bf16.gmra.mxu0 %v4493
        %v4730 = vpop.f32.mrf.mxu0
        %v4731 = vadd.f32 0.0, %v4730
        %v4732 = vpop.f32.mrf.mxu0
        %v4733 = vadd.f32 0.0, %v4732
        %4734 = vmatmul.bf16.gmra.mxu0 %v4494
        %v4735 = vpop.f32.mrf.mxu0
        %v4736 = vadd.f32 0.0, %v4735
        %v4737 = vpop.f32.mrf.mxu0
        %v4738 = vadd.f32 0.0, %v4737
        %4739 = vmatmul.bf16.gmra.mxu0 %v4495
        %v4740 = vpop.f32.mrf.mxu0
        %v4741 = vadd.f32 0.0, %v4740
        %v4742 = vpop.f32.mrf.mxu0
        %v4743 = vadd.f32 0.0, %v4742
        %4744 = vmatmul.bf16.gmra.mxu0 %v4496
        %v4745 = vpop.f32.mrf.mxu0
        %v4746 = vadd.f32 0.0, %v4745
        %v4747 = vpop.f32.mrf.mxu0
        %v4748 = vadd.f32 0.0, %v4747
        %4749 = vmatmul.bf16.gmra.mxu0 %v4497
        %v4750 = vpop.f32.mrf.mxu0
        %v4751 = vadd.f32 0.0, %v4750
        %v4752 = vpop.f32.mrf.mxu0
        %v4753 = vadd.f32 0.0, %v4752
        %4754 = vmatmul.bf16.gmra.mxu0 %v4498
        %v4755 = vpop.f32.mrf.mxu0
        %v4756 = vadd.f32 0.0, %v4755
        %v4757 = vpop.f32.mrf.mxu0
        %v4758 = vadd.f32 0.0, %v4757
        %4759 = vmatmul.bf16.gmra.mxu0 %v4499
        %v4760 = vpop.f32.mrf.mxu0
        %v4761 = vadd.f32 0.0, %v4760
        %v4762 = vpop.f32.mrf.mxu0
        %v4763 = vadd.f32 0.0, %v4762
        %4764 = vdwg.mxu0
        %v4797 = vunpack.c.l.b16 %v4500
        %v4798 = vunpack.c.l.b16 %v4501
        %v4799 = vunpack.c.l.b16 %v4502
        %v4800 = vunpack.c.l.b16 %v4503
        %v4801 = vunpack.c.l.b16 %v4504
        %v4802 = vunpack.c.l.b16 %v4505
        %v4803 = vunpack.c.l.b16 %v4506
        %v4804 = vunpack.c.l.b16 %v4507
        %v4805 = vunpack.c.l.b16 %v4508
        %v4806 = vunpack.c.l.b16 %v4509
        %v4807 = vunpack.c.l.b16 %v4510
        %v4808 = vunpack.c.l.b16 %v4511
        %v4809 = vunpack.c.l.b16 %v4512
        %v4810 = vunpack.c.l.b16 %v4513
        %v4811 = vunpack.c.l.b16 %v4514
        %v4812 = vunpack.c.l.b16 %v4515
        %v4813 = vunpack.c.l.b16 %v4516
        %v4814 = vunpack.c.l.b16 %v4517
        %v4815 = vunpack.c.l.b16 %v4518
        %v4816 = vunpack.c.l.b16 %v4519
        %v4817 = vunpack.c.l.b16 %v4520
        %v4818 = vunpack.c.l.b16 %v4521
        %v4819 = vunpack.c.l.b16 %v4522
        %v4820 = vunpack.c.l.b16 %v4523
        %v4821 = vunpack.c.l.b16 %v4524
        %v4822 = vunpack.c.l.b16 %v4525
        %v4823 = vunpack.c.l.b16 %v4526
        %v4824 = vunpack.c.l.b16 %v4527
        %v4825 = vunpack.c.l.b16 %v4528
        %v4826 = vunpack.c.l.b16 %v4529
        %v4827 = vunpack.c.l.b16 %v4530
        %v4828 = vunpack.c.l.b16 %v4531
        %v4829 = vpack.c.b16 %v4798, %v4797
        %v4830 = vpack.c.b16 %v4800, %v4799
        %v4831 = vpack.c.b16 %v4802, %v4801
        %v4832 = vpack.c.b16 %v4804, %v4803
        %v4833 = vpack.c.b16 %v4806, %v4805
        %v4834 = vpack.c.b16 %v4808, %v4807
        %v4835 = vpack.c.b16 %v4810, %v4809
        %v4836 = vpack.c.b16 %v4812, %v4811
        %v4837 = vpack.c.b16 %v4814, %v4813
        %v4838 = vpack.c.b16 %v4816, %v4815
        %v4839 = vpack.c.b16 %v4818, %v4817
        %v4840 = vpack.c.b16 %v4820, %v4819
        %v4841 = vpack.c.b16 %v4822, %v4821
        %v4842 = vpack.c.b16 %v4824, %v4823
        %v4843 = vpack.c.b16 %v4826, %v4825
        %v4844 = vpack.c.b16 %v4828, %v4827
        %4861 = vmatpush.bf16.msra.mxu0 %v4836
        %4862 = vmatpush.bf16.msra.mxu0 %v4835
        %4863 = vmatpush.bf16.msra.mxu0 %v4834
        %4864 = vmatpush.bf16.msra.mxu0 %v4833
        %4865 = vmatpush.bf16.msra.mxu0 %v4832
        %4866 = vmatpush.bf16.msra.mxu0 %v4831
        %4867 = vmatpush.bf16.msra.mxu0 %v4830
        %4868 = vmatpush.bf16.msra.mxu0 %v4829
        %4869 = vmatmul.bf16.gmra.mxu0 %v2244
        %v4870 = vpop.f32.mrf.mxu0
        %v4871 = vadd.f32 %v4606, %v4870
        %v4872 = vpop.f32.mrf.mxu0
        %v4873 = vadd.f32 %v4608, %v4872
        %4874 = vmatmul.bf16.gmra.mxu0 %v2246
        %v4875 = vpop.f32.mrf.mxu0
        %v4876 = vadd.f32 %v4611, %v4875
        %v4877 = vpop.f32.mrf.mxu0
        %v4878 = vadd.f32 %v4613, %v4877
        %4879 = vmatmul.bf16.gmra.mxu0 %v2248
        %v4880 = vpop.f32.mrf.mxu0
        %v4881 = vadd.f32 %v4616, %v4880
        %v4882 = vpop.f32.mrf.mxu0
        %v4883 = vadd.f32 %v4618, %v4882
        %4884 = vmatmul.bf16.gmra.mxu0 %v2250
        %v4885 = vpop.f32.mrf.mxu0
        %v4886 = vadd.f32 %v4621, %v4885
        %v4887 = vpop.f32.mrf.mxu0
        %v4888 = vadd.f32 %v4623, %v4887
        %4889 = vmatmul.bf16.gmra.mxu0 %v2252
        %v4890 = vpop.f32.mrf.mxu0
        %v4891 = vadd.f32 %v4626, %v4890
        %v4892 = vpop.f32.mrf.mxu0
        %v4893 = vadd.f32 %v4628, %v4892
        %4894 = vmatmul.bf16.gmra.mxu0 %v2254
        %v4895 = vpop.f32.mrf.mxu0
        %v4896 = vadd.f32 %v4631, %v4895
        %v4897 = vpop.f32.mrf.mxu0
        %v4898 = vadd.f32 %v4633, %v4897
        %4899 = vmatmul.bf16.gmra.mxu0 %v2256
        %v4900 = vpop.f32.mrf.mxu0
        %v4901 = vadd.f32 %v4636, %v4900
        %v4902 = vpop.f32.mrf.mxu0
        %v4903 = vadd.f32 %v4638, %v4902
        %4904 = vmatmul.bf16.gmra.mxu0 %v2258
        %v4905 = vpop.f32.mrf.mxu0
        %v4906 = vadd.f32 %v4641, %v4905
        %v4907 = vpop.f32.mrf.mxu0
        %v4908 = vadd.f32 %v4643, %v4907
        %4909 = vmatmul.bf16.gmra.mxu0 %v2260
        %v4910 = vpop.f32.mrf.mxu0
        %v4911 = vadd.f32 %v4646, %v4910
        %v4912 = vpop.f32.mrf.mxu0
        %v4913 = vadd.f32 %v4648, %v4912
        %4914 = vmatmul.bf16.gmra.mxu0 %v2262
        %v4915 = vpop.f32.mrf.mxu0
        %v4916 = vadd.f32 %v4651, %v4915
        %v4917 = vpop.f32.mrf.mxu0
        %v4918 = vadd.f32 %v4653, %v4917
        %4919 = vmatmul.bf16.gmra.mxu0 %v2264
        %v4920 = vpop.f32.mrf.mxu0
        %v4921 = vadd.f32 %v4656, %v4920
        %v4922 = vpop.f32.mrf.mxu0
        %v4923 = vadd.f32 %v4658, %v4922
        %4924 = vmatmul.bf16.gmra.mxu0 %v2266
        %v4925 = vpop.f32.mrf.mxu0
        %v4926 = vadd.f32 %v4661, %v4925
        %v4927 = vpop.f32.mrf.mxu0
        %v4928 = vadd.f32 %v4663, %v4927
        %4929 = vmatmul.bf16.gmra.mxu0 %v2268
        %v4930 = vpop.f32.mrf.mxu0
        %v4931 = vadd.f32 %v4666, %v4930
        %v4932 = vpop.f32.mrf.mxu0
        %v4933 = vadd.f32 %v4668, %v4932
        %4934 = vmatmul.bf16.gmra.mxu0 %v2270
        %v4935 = vpop.f32.mrf.mxu0
        %v4936 = vadd.f32 %v4671, %v4935
        %v4937 = vpop.f32.mrf.mxu0
        %v4938 = vadd.f32 %v4673, %v4937
        %4939 = vmatmul.bf16.gmra.mxu0 %v2272
        %v4940 = vpop.f32.mrf.mxu0
        %v4941 = vadd.f32 %v4676, %v4940
        %v4942 = vpop.f32.mrf.mxu0
        %v4943 = vadd.f32 %v4678, %v4942
        %4944 = vmatmul.bf16.gmra.mxu0 %v2274
        %v4945 = vpop.f32.mrf.mxu0
        %v4946 = vadd.f32 %v4681, %v4945
        %v4947 = vpop.f32.mrf.mxu0
        %v4948 = vadd.f32 %v4683, %v4947
        %4949 = vmatmul.bf16.gmra.mxu0 %v2276
        %v4950 = vpop.f32.mrf.mxu0
        %v4951 = vadd.f32 %v4686, %v4950
        %v4952 = vpop.f32.mrf.mxu0
        %v4953 = vadd.f32 %v4688, %v4952
        %4954 = vmatmul.bf16.gmra.mxu0 %v2278
        %v4955 = vpop.f32.mrf.mxu0
        %v4956 = vadd.f32 %v4691, %v4955
        %v4957 = vpop.f32.mrf.mxu0
        %v4958 = vadd.f32 %v4693, %v4957
        %4959 = vmatmul.bf16.gmra.mxu0 %v2280
        %v4960 = vpop.f32.mrf.mxu0
        %v4961 = vadd.f32 %v4696, %v4960
        %v4962 = vpop.f32.mrf.mxu0
        %v4963 = vadd.f32 %v4698, %v4962
        %4964 = vmatmul.bf16.gmra.mxu0 %v2282
        %v4965 = vpop.f32.mrf.mxu0
        %v4966 = vadd.f32 %v4701, %v4965
        %v4967 = vpop.f32.mrf.mxu0
        %v4968 = vadd.f32 %v4703, %v4967
        %4969 = vmatmul.bf16.gmra.mxu0 %v2284
        %v4970 = vpop.f32.mrf.mxu0
        %v4971 = vadd.f32 %v4706, %v4970
        %v4972 = vpop.f32.mrf.mxu0
        %v4973 = vadd.f32 %v4708, %v4972
        %4974 = vmatmul.bf16.gmra.mxu0 %v2286
        %v4975 = vpop.f32.mrf.mxu0
        %v4976 = vadd.f32 %v4711, %v4975
        %v4977 = vpop.f32.mrf.mxu0
        %v4978 = vadd.f32 %v4713, %v4977
        %4979 = vmatmul.bf16.gmra.mxu0 %v2288
        %v4980 = vpop.f32.mrf.mxu0
        %v4981 = vadd.f32 %v4716, %v4980
        %v4982 = vpop.f32.mrf.mxu0
        %v4983 = vadd.f32 %v4718, %v4982
        %4984 = vmatmul.bf16.gmra.mxu0 %v2290
        %v4985 = vpop.f32.mrf.mxu0
        %v4986 = vadd.f32 %v4721, %v4985
        %v4987 = vpop.f32.mrf.mxu0
        %v4988 = vadd.f32 %v4723, %v4987
        %4989 = vmatmul.bf16.gmra.mxu0 %v2292
        %v4990 = vpop.f32.mrf.mxu0
        %v4991 = vadd.f32 %v4726, %v4990
        %v4992 = vpop.f32.mrf.mxu0
        %v4993 = vadd.f32 %v4728, %v4992
        %4994 = vmatmul.bf16.gmra.mxu0 %v2294
        %v4995 = vpop.f32.mrf.mxu0
        %v4996 = vadd.f32 %v4731, %v4995
        %v4997 = vpop.f32.mrf.mxu0
        %v4998 = vadd.f32 %v4733, %v4997
        %4999 = vmatmul.bf16.gmra.mxu0 %v2296
        %v5000 = vpop.f32.mrf.mxu0
        %v5001 = vadd.f32 %v4736, %v5000
        %v5002 = vpop.f32.mrf.mxu0
        %v5003 = vadd.f32 %v4738, %v5002
        %5004 = vmatmul.bf16.gmra.mxu0 %v2298
        %v5005 = vpop.f32.mrf.mxu0
        %v5006 = vadd.f32 %v4741, %v5005
        %v5007 = vpop.f32.mrf.mxu0
        %v5008 = vadd.f32 %v4743, %v5007
        %5009 = vmatmul.bf16.gmra.mxu0 %v2300
        %v5010 = vpop.f32.mrf.mxu0
        %v5011 = vadd.f32 %v4746, %v5010
        %v5012 = vpop.f32.mrf.mxu0
        %v5013 = vadd.f32 %v4748, %v5012
        %5014 = vmatmul.bf16.gmra.mxu0 %v2302
        %v5015 = vpop.f32.mrf.mxu0
        %v5016 = vadd.f32 %v4751, %v5015
        %v5017 = vpop.f32.mrf.mxu0
        %v5018 = vadd.f32 %v4753, %v5017
        %5019 = vmatmul.bf16.gmra.mxu0 %v2304
        %v5020 = vpop.f32.mrf.mxu0
        %v5021 = vadd.f32 %v4756, %v5020
        %v5022 = vpop.f32.mrf.mxu0
        %v5023 = vadd.f32 %v4758, %v5022
        %5024 = vmatmul.bf16.gmra.mxu0 %v2306
        %v5025 = vpop.f32.mrf.mxu0
        %v5026 = vadd.f32 %v4761, %v5025
        %v5027 = vpop.f32.mrf.mxu0
        %v5028 = vadd.f32 %v4763, %v5027
        %5029 = vdwg.mxu0
        %5030 = vmatpush.bf16.msra.mxu0 %v4844
        %5031 = vmatpush.bf16.msra.mxu0 %v4843
        %5032 = vmatpush.bf16.msra.mxu0 %v4842
        %5033 = vmatpush.bf16.msra.mxu0 %v4841
        %5034 = vmatpush.bf16.msra.mxu0 %v4840
        %5035 = vmatpush.bf16.msra.mxu0 %v4839
        %5036 = vmatpush.bf16.msra.mxu0 %v4838
        %5037 = vmatpush.bf16.msra.mxu0 %v4837
        %5038 = vmatmul.bf16.gmra.mxu0 %v2245
        %v5039 = vpop.f32.mrf.mxu0
        %v5040 = vadd.f32 %v4871, %v5039
        %v5041 = vpop.f32.mrf.mxu0
        %v5042 = vadd.f32 %v4873, %v5041
        %5043 = vmatmul.bf16.gmra.mxu0 %v2247
        %v5044 = vpop.f32.mrf.mxu0
        %v5045 = vadd.f32 %v4876, %v5044
        %v5046 = vpop.f32.mrf.mxu0
        %v5047 = vadd.f32 %v4878, %v5046
        %5048 = vmatmul.bf16.gmra.mxu0 %v2249
        %v5049 = vpop.f32.mrf.mxu0
        %v5050 = vadd.f32 %v4881, %v5049
        %v5051 = vpop.f32.mrf.mxu0
        %v5052 = vadd.f32 %v4883, %v5051
        %5053 = vmatmul.bf16.gmra.mxu0 %v2251
        %v5054 = vpop.f32.mrf.mxu0
        %v5055 = vadd.f32 %v4886, %v5054
        %v5056 = vpop.f32.mrf.mxu0
        %v5057 = vadd.f32 %v4888, %v5056
        %5058 = vmatmul.bf16.gmra.mxu0 %v2253
        %v5059 = vpop.f32.mrf.mxu0
        %v5060 = vadd.f32 %v4891, %v5059
        %v5061 = vpop.f32.mrf.mxu0
        %v5062 = vadd.f32 %v4893, %v5061
        %5063 = vmatmul.bf16.gmra.mxu0 %v2255
        %v5064 = vpop.f32.mrf.mxu0
        %v5065 = vadd.f32 %v4896, %v5064
        %v5066 = vpop.f32.mrf.mxu0
        %v5067 = vadd.f32 %v4898, %v5066
        %5068 = vmatmul.bf16.gmra.mxu0 %v2257
        %v5069 = vpop.f32.mrf.mxu0
        %v5070 = vadd.f32 %v4901, %v5069
        %v5071 = vpop.f32.mrf.mxu0
        %v5072 = vadd.f32 %v4903, %v5071
        %5073 = vmatmul.bf16.gmra.mxu0 %v2259
        %v5074 = vpop.f32.mrf.mxu0
        %v5075 = vadd.f32 %v4906, %v5074
        %v5076 = vpop.f32.mrf.mxu0
        %v5077 = vadd.f32 %v4908, %v5076
        %5078 = vmatmul.bf16.gmra.mxu0 %v2261
        %v5079 = vpop.f32.mrf.mxu0
        %v5080 = vadd.f32 %v4911, %v5079
        %v5081 = vpop.f32.mrf.mxu0
        %v5082 = vadd.f32 %v4913, %v5081
        %5083 = vmatmul.bf16.gmra.mxu0 %v2263
        %v5084 = vpop.f32.mrf.mxu0
        %v5085 = vadd.f32 %v4916, %v5084
        %v5086 = vpop.f32.mrf.mxu0
        %v5087 = vadd.f32 %v4918, %v5086
        %5088 = vmatmul.bf16.gmra.mxu0 %v2265
        %v5089 = vpop.f32.mrf.mxu0
        %v5090 = vadd.f32 %v4921, %v5089
        %v5091 = vpop.f32.mrf.mxu0
        %v5092 = vadd.f32 %v4923, %v5091
        %5093 = vmatmul.bf16.gmra.mxu0 %v2267
        %v5094 = vpop.f32.mrf.mxu0
        %v5095 = vadd.f32 %v4926, %v5094
        %v5096 = vpop.f32.mrf.mxu0
        %v5097 = vadd.f32 %v4928, %v5096
        %5098 = vmatmul.bf16.gmra.mxu0 %v2269
        %v5099 = vpop.f32.mrf.mxu0
        %v5100 = vadd.f32 %v4931, %v5099
        %v5101 = vpop.f32.mrf.mxu0
        %v5102 = vadd.f32 %v4933, %v5101
        %5103 = vmatmul.bf16.gmra.mxu0 %v2271
        %v5104 = vpop.f32.mrf.mxu0
        %v5105 = vadd.f32 %v4936, %v5104
        %v5106 = vpop.f32.mrf.mxu0
        %v5107 = vadd.f32 %v4938, %v5106
        %5108 = vmatmul.bf16.gmra.mxu0 %v2273
        %v5109 = vpop.f32.mrf.mxu0
        %v5110 = vadd.f32 %v4941, %v5109
        %v5111 = vpop.f32.mrf.mxu0
        %v5112 = vadd.f32 %v4943, %v5111
        %5113 = vmatmul.bf16.gmra.mxu0 %v2275
        %v5114 = vpop.f32.mrf.mxu0
        %v5115 = vadd.f32 %v4946, %v5114
        %v5116 = vpop.f32.mrf.mxu0
        %v5117 = vadd.f32 %v4948, %v5116
        %5118 = vmatmul.bf16.gmra.mxu0 %v2277
        %v5119 = vpop.f32.mrf.mxu0
        %v5120 = vadd.f32 %v4951, %v5119
        %v5121 = vpop.f32.mrf.mxu0
        %v5122 = vadd.f32 %v4953, %v5121
        %5123 = vmatmul.bf16.gmra.mxu0 %v2279
        %v5124 = vpop.f32.mrf.mxu0
        %v5125 = vadd.f32 %v4956, %v5124
        %v5126 = vpop.f32.mrf.mxu0
        %v5127 = vadd.f32 %v4958, %v5126
        %5128 = vmatmul.bf16.gmra.mxu0 %v2281
        %v5129 = vpop.f32.mrf.mxu0
        %v5130 = vadd.f32 %v4961, %v5129
        %v5131 = vpop.f32.mrf.mxu0
        %v5132 = vadd.f32 %v4963, %v5131
        %5133 = vmatmul.bf16.gmra.mxu0 %v2283
        %v5134 = vpop.f32.mrf.mxu0
        %v5135 = vadd.f32 %v4966, %v5134
        %v5136 = vpop.f32.mrf.mxu0
        %v5137 = vadd.f32 %v4968, %v5136
        %5138 = vmatmul.bf16.gmra.mxu0 %v2285
        %v5139 = vpop.f32.mrf.mxu0
        %v5140 = vadd.f32 %v4971, %v5139
        %v5141 = vpop.f32.mrf.mxu0
        %v5142 = vadd.f32 %v4973, %v5141
        %5143 = vmatmul.bf16.gmra.mxu0 %v2287
        %v5144 = vpop.f32.mrf.mxu0
        %v5145 = vadd.f32 %v4976, %v5144
        %v5146 = vpop.f32.mrf.mxu0
        %v5147 = vadd.f32 %v4978, %v5146
        %5148 = vmatmul.bf16.gmra.mxu0 %v2289
        %v5149 = vpop.f32.mrf.mxu0
        %v5150 = vadd.f32 %v4981, %v5149
        %v5151 = vpop.f32.mrf.mxu0
        %v5152 = vadd.f32 %v4983, %v5151
        %5153 = vmatmul.bf16.gmra.mxu0 %v2291
        %v5154 = vpop.f32.mrf.mxu0
        %v5155 = vadd.f32 %v4986, %v5154
        %v5156 = vpop.f32.mrf.mxu0
        %v5157 = vadd.f32 %v4988, %v5156
        %5158 = vmatmul.bf16.gmra.mxu0 %v2293
        %v5159 = vpop.f32.mrf.mxu0
        %v5160 = vadd.f32 %v4991, %v5159
        %v5161 = vpop.f32.mrf.mxu0
        %v5162 = vadd.f32 %v4993, %v5161
        %5163 = vmatmul.bf16.gmra.mxu0 %v2295
        %v5164 = vpop.f32.mrf.mxu0
        %v5165 = vadd.f32 %v4996, %v5164
        %v5166 = vpop.f32.mrf.mxu0
        %v5167 = vadd.f32 %v4998, %v5166
        %5168 = vmatmul.bf16.gmra.mxu0 %v2297
        %v5169 = vpop.f32.mrf.mxu0
        %v5170 = vadd.f32 %v5001, %v5169
        %v5171 = vpop.f32.mrf.mxu0
        %v5172 = vadd.f32 %v5003, %v5171
        %5173 = vmatmul.bf16.gmra.mxu0 %v2299
        %v5174 = vpop.f32.mrf.mxu0
        %v5175 = vadd.f32 %v5006, %v5174
        %v5176 = vpop.f32.mrf.mxu0
        %v5177 = vadd.f32 %v5008, %v5176
        %5178 = vmatmul.bf16.gmra.mxu0 %v2301
        %v5179 = vpop.f32.mrf.mxu0
        %v5180 = vadd.f32 %v5011, %v5179
        %v5181 = vpop.f32.mrf.mxu0
        %v5182 = vadd.f32 %v5013, %v5181
        %5183 = vmatmul.bf16.gmra.mxu0 %v2303
        %v5184 = vpop.f32.mrf.mxu0
        %v5185 = vadd.f32 %v5016, %v5184
        %v5186 = vpop.f32.mrf.mxu0
        %v5187 = vadd.f32 %v5018, %v5186
        %5188 = vmatmul.bf16.gmra.mxu0 %v2305
        %v5189 = vpop.f32.mrf.mxu0
        %v5190 = vadd.f32 %v5021, %v5189
        %v5191 = vpop.f32.mrf.mxu0
        %v5192 = vadd.f32 %v5023, %v5191
        %5193 = vmatmul.bf16.gmra.mxu0 %v2307
        %v5194 = vpop.f32.mrf.mxu0
        %v5195 = vadd.f32 %v5026, %v5194
        %v5196 = vpop.f32.mrf.mxu0
        %v5197 = vadd.f32 %v5028, %v5196
        %5198 = vdwg.mxu0
        %v5199 = vld [vmem:[%s6 + $0x4] ss:$0 sm:$0xff]
        %v5200 = vadd.f32 %v5040, %v5199
        %v5201 = vadd.f32 %v5042, %v5199
        %v5202 = vadd.f32 %v5045, %v5199
        %v5203 = vadd.f32 %v5047, %v5199
        %v5204 = vadd.f32 %v5050, %v5199
        %v5205 = vadd.f32 %v5052, %v5199
        %v5206 = vadd.f32 %v5055, %v5199
        %v5207 = vadd.f32 %v5057, %v5199
        %v5208 = vadd.f32 %v5060, %v5199
        %v5209 = vadd.f32 %v5062, %v5199
        %v5210 = vadd.f32 %v5065, %v5199
        %v5211 = vadd.f32 %v5067, %v5199
        %v5212 = vadd.f32 %v5070, %v5199
        %v5213 = vadd.f32 %v5072, %v5199
        %v5214 = vadd.f32 %v5075, %v5199
        %v5215 = vadd.f32 %v5077, %v5199
        %v5216 = vadd.f32 %v5080, %v5199
        %v5217 = vadd.f32 %v5082, %v5199
        %v5218 = vadd.f32 %v5085, %v5199
        %v5219 = vadd.f32 %v5087, %v5199
        %v5220 = vadd.f32 %v5090, %v5199
        %v5221 = vadd.f32 %v5092, %v5199
        %v5222 = vadd.f32 %v5095, %v5199
        %v5223 = vadd.f32 %v5097, %v5199
        %v5224 = vadd.f32 %v5100, %v5199
        %v5225 = vadd.f32 %v5102, %v5199
        %v5226 = vadd.f32 %v5105, %v5199
        %v5227 = vadd.f32 %v5107, %v5199
        %v5228 = vadd.f32 %v5110, %v5199
        %v5229 = vadd.f32 %v5112, %v5199
        %v5230 = vadd.f32 %v5115, %v5199
        %v5231 = vadd.f32 %v5117, %v5199
        %v5232 = vadd.f32 %v5120, %v5199
        %v5233 = vadd.f32 %v5122, %v5199
        %v5234 = vadd.f32 %v5125, %v5199
        %v5235 = vadd.f32 %v5127, %v5199
        %v5236 = vadd.f32 %v5130, %v5199
        %v5237 = vadd.f32 %v5132, %v5199
        %v5238 = vadd.f32 %v5135, %v5199
        %v5239 = vadd.f32 %v5137, %v5199
        %v5240 = vadd.f32 %v5140, %v5199
        %v5241 = vadd.f32 %v5142, %v5199
        %v5242 = vadd.f32 %v5145, %v5199
        %v5243 = vadd.f32 %v5147, %v5199
        %v5244 = vadd.f32 %v5150, %v5199
        %v5245 = vadd.f32 %v5152, %v5199
        %v5246 = vadd.f32 %v5155, %v5199
        %v5247 = vadd.f32 %v5157, %v5199
        %v5248 = vadd.f32 %v5160, %v5199
        %v5249 = vadd.f32 %v5162, %v5199
        %v5250 = vadd.f32 %v5165, %v5199
        %v5251 = vadd.f32 %v5167, %v5199
        %v5252 = vadd.f32 %v5170, %v5199
        %v5253 = vadd.f32 %v5172, %v5199
        %v5254 = vadd.f32 %v5175, %v5199
        %v5255 = vadd.f32 %v5177, %v5199
        %v5256 = vadd.f32 %v5180, %v5199
        %v5257 = vadd.f32 %v5182, %v5199
        %v5258 = vadd.f32 %v5185, %v5199
        %v5259 = vadd.f32 %v5187, %v5199
        %v5260 = vadd.f32 %v5190, %v5199
        %v5261 = vadd.f32 %v5192, %v5199
        %v5262 = vadd.f32 %v5195, %v5199
        %v5263 = vadd.f32 %v5197, %v5199
        %vm5264 = vcmask 31744
        %5265 = vst.msk [vmem:[%s351] sm:$0xff] %vm5264, %v5200
        %5266 = vst.msk [vmem:[%s351 + $0x8] sm:$0xff] %vm5264, %v5201
        %5267 = vst.msk [vmem:[%s351 + $0x10] sm:$0xff] %vm5264, %v5202
        %5268 = vst.msk [vmem:[%s351 + $0x18] sm:$0xff] %vm5264, %v5203
        %5269 = vst.msk [vmem:[%s351 + $0x20] sm:$0xff] %vm5264, %v5204
        %5270 = vst.msk [vmem:[%s351 + $0x28] sm:$0xff] %vm5264, %v5205
        %5271 = vst.msk [vmem:[%s351 + $0x30] sm:$0xff] %vm5264, %v5206
        %5272 = vst.msk [vmem:[%s351 + $0x38] sm:$0xff] %vm5264, %v5207
        %5273 = vst.msk [vmem:[%s351 + $0x40] sm:$0xff] %vm5264, %v5208
        %5274 = vst.msk [vmem:[%s351 + $0x48] sm:$0xff] %vm5264, %v5209
        %5275 = vst.msk [vmem:[%s351 + $0x50] sm:$0xff] %vm5264, %v5210
        %5276 = vst.msk [vmem:[%s351 + $0x58] sm:$0xff] %vm5264, %v5211
        %5277 = vst.msk [vmem:[%s351 + $0x60] sm:$0xff] %vm5264, %v5212
        %5278 = vst.msk [vmem:[%s351 + $0x68] sm:$0xff] %vm5264, %v5213
        %5279 = vst.msk [vmem:[%s351 + $0x70] sm:$0xff] %vm5264, %v5214
        %5280 = vst.msk [vmem:[%s351 + $0x78] sm:$0xff] %vm5264, %v5215
        %5281 = vst.msk [vmem:[%s351 + $0x80] sm:$0xff] %vm5264, %v5216
        %5282 = vst.msk [vmem:[%s351 + $0x88] sm:$0xff] %vm5264, %v5217
        %5283 = vst.msk [vmem:[%s351 + $0x90] sm:$0xff] %vm5264, %v5218
        %5284 = vst.msk [vmem:[%s351 + $0x98] sm:$0xff] %vm5264, %v5219
        %5285 = vst.msk [vmem:[%s351 + $0xa0] sm:$0xff] %vm5264, %v5220
        %5286 = vst.msk [vmem:[%s351 + $0xa8] sm:$0xff] %vm5264, %v5221
        %5287 = vst.msk [vmem:[%s351 + $0xb0] sm:$0xff] %vm5264, %v5222
        %5288 = vst.msk [vmem:[%s351 + $0xb8] sm:$0xff] %vm5264, %v5223
        %5289 = vst.msk [vmem:[%s351 + $0xc0] sm:$0xff] %vm5264, %v5224
        %5290 = vst.msk [vmem:[%s351 + $0xc8] sm:$0xff] %vm5264, %v5225
        %5291 = vst.msk [vmem:[%s351 + $0xd0] sm:$0xff] %vm5264, %v5226
        %5292 = vst.msk [vmem:[%s351 + $0xd8] sm:$0xff] %vm5264, %v5227
        %5293 = vst.msk [vmem:[%s351 + $0xe0] sm:$0xff] %vm5264, %v5228
        %5294 = vst.msk [vmem:[%s351 + $0xe8] sm:$0xff] %vm5264, %v5229
        %5295 = vst.msk [vmem:[%s351 + $0xf0] sm:$0xff] %vm5264, %v5230
        %5296 = vst.msk [vmem:[%s351 + $0xf8] sm:$0xff] %vm5264, %v5231
        %5297 = vst.msk [vmem:[%s351 + $0x100] sm:$0xff] %vm5264, %v5232
        %5298 = vst.msk [vmem:[%s351 + $0x108] sm:$0xff] %vm5264, %v5233
        %5299 = vst.msk [vmem:[%s351 + $0x110] sm:$0xff] %vm5264, %v5234
        %5300 = vst.msk [vmem:[%s351 + $0x118] sm:$0xff] %vm5264, %v5235
        %5301 = vst.msk [vmem:[%s351 + $0x120] sm:$0xff] %vm5264, %v5236
        %5302 = vst.msk [vmem:[%s351 + $0x128] sm:$0xff] %vm5264, %v5237
        %5303 = vst.msk [vmem:[%s351 + $0x130] sm:$0xff] %vm5264, %v5238
        %5304 = vst.msk [vmem:[%s351 + $0x138] sm:$0xff] %vm5264, %v5239
        %5305 = vst.msk [vmem:[%s351 + $0x140] sm:$0xff] %vm5264, %v5240
        %5306 = vst.msk [vmem:[%s351 + $0x148] sm:$0xff] %vm5264, %v5241
        %5307 = vst.msk [vmem:[%s351 + $0x150] sm:$0xff] %vm5264, %v5242
        %5308 = vst.msk [vmem:[%s351 + $0x158] sm:$0xff] %vm5264, %v5243
        %5309 = vst.msk [vmem:[%s351 + $0x160] sm:$0xff] %vm5264, %v5244
        %5310 = vst.msk [vmem:[%s351 + $0x168] sm:$0xff] %vm5264, %v5245
        %5311 = vst.msk [vmem:[%s351 + $0x170] sm:$0xff] %vm5264, %v5246
        %5312 = vst.msk [vmem:[%s351 + $0x178] sm:$0xff] %vm5264, %v5247
        %5313 = vst.msk [vmem:[%s351 + $0x180] sm:$0xff] %vm5264, %v5248
        %5314 = vst.msk [vmem:[%s351 + $0x188] sm:$0xff] %vm5264, %v5249
        %5315 = vst.msk [vmem:[%s351 + $0x190] sm:$0xff] %vm5264, %v5250
        %5316 = vst.msk [vmem:[%s351 + $0x198] sm:$0xff] %vm5264, %v5251
        %5317 = vst.msk [vmem:[%s351 + $0x1a0] sm:$0xff] %vm5264, %v5252
        %5318 = vst.msk [vmem:[%s351 + $0x1a8] sm:$0xff] %vm5264, %v5253
        %5319 = vst.msk [vmem:[%s351 + $0x1b0] sm:$0xff] %vm5264, %v5254
        %5320 = vst.msk [vmem:[%s351 + $0x1b8] sm:$0xff] %vm5264, %v5255
        %5321 = vst.msk [vmem:[%s351 + $0x1c0] sm:$0xff] %vm5264, %v5256
        %5322 = vst.msk [vmem:[%s351 + $0x1c8] sm:$0xff] %vm5264, %v5257
        %5323 = vst.msk [vmem:[%s351 + $0x1d0] sm:$0xff] %vm5264, %v5258
        %5324 = vst.msk [vmem:[%s351 + $0x1d8] sm:$0xff] %vm5264, %v5259
        %5325 = vst.msk [vmem:[%s351 + $0x1e0] sm:$0xff] %vm5264, %v5260
        %5326 = vst.msk [vmem:[%s351 + $0x1e8] sm:$0xff] %vm5264, %v5261
        %5327 = vst.msk [vmem:[%s351 + $0x1f0] sm:$0xff] %vm5264, %v5262
        %5328 = vst.msk [vmem:[%s351 + $0x1f8] sm:$0xff] %vm5264, %v5263
        %s5329 = smul.u32 64, %s23
        %p5330 = scmp.lt.s32.totalorder %s5329, 127
        %s5331 = scalar_select %p5330, %s5329, 127
        %s5332 = smul.addr %s5331, 8
        %s5333 = scalar_lea.vmem %s7, %s5332
        // Predicated region
        $region65: #{tpu_custom_call.1} parent=47 // pred_check
          %p5334 = pneg %p193
        $region66: #{tpu_custom_call.1} parent=47 // pred_check_branch
          %5336 = sbr.rel (%p5334) target = $region68
        $region67: #{tpu_custom_call.1} parent=47 // pred_region
          %s5337 = smul.u32 64, %s23
        $region68: #{tpu_custom_call.1} parent=47 // pred_fallthru
          _
      $region48: #{tpu_custom_call.1} parent=5 // pred_fallthru
        _
      %p5338 = scmp.le.s32.totalorder 2, %s18
      // Predicated region
      $region69: #{tpu_custom_call.1} parent=5 // pred_check
        %p5339 = pneg %p5338
      $region70: #{tpu_custom_call.1} parent=5 // pred_check_branch
        %5341 = sbr.rel (%p5339) target = $region72
      $region71: #{tpu_custom_call.1} parent=5 // pred_region
        %s5342 = ssub.s32 %s18, 2
        // Predicated region
        $region73: #{tpu_custom_call.1} parent=71 // pred_check
          %p5343 = pneg %p199
        $region74: #{tpu_custom_call.1} parent=71 // pred_check_branch
          %5345 = sbr.rel (%p5343) target = $region76
        $region75: #{tpu_custom_call.1} parent=71 // pred_region
          %s5346 = smul.u32 64, %s24
          %p5347 = scmp.lt.s32.totalorder %s5346, 127
          %s5348 = scalar_select %p5347, %s5346, 127
          %s5349 = smul.addr %s5348, 8
          %s5350 = scalar_lea.vmem %s7, %s5349
        $region76: #{tpu_custom_call.1} parent=71 // pred_fallthru
          _
      $region72: #{tpu_custom_call.1} parent=5 // pred_fallthru
        _
    $region6: #{tpu_custom_call.1} parent=1 // loop_footer
      %s22 = sadd.s32 1, %s18
    $region7: #{tpu_custom_call.1} parent=1 // loop_footer_branch
      %17 = sbr.rel target = $region3
    $region8: #{tpu_custom_call.1} parent=1 // loop_exit
      _
    %5351 = vsyncpa [#allocation3], 1
    %s5352 = scalar_lea.sflag [#allocation3], 1
    %5353 = vsyncpa %s5352, 1
    %5354 = vsyncpa [#allocation5], 1
    %5355 = vsyncpa [#allocation8], 1

</llo_original>
